<compile_context>
chip_gen: v7x
topology: tpu7x:2x2x1
jax: 0.10.0
libtpu: 0.0.40
codegen_flags: <defaults>
</compile_context>

<pallas_src>
import jax
import jax.numpy as jnp
from jax.experimental import pallas as pl
from jax.experimental.pallas import tpu as pltpu

# ----------------------------- config -------------------------------------
HIDDEN = 128
HEADS = 4
HEAD_DIM = HIDDEN // HEADS
INTER = 256
LAYERS = 2
IMAGE = 32
PATCH = 16
CHANNELS = 3
GRID = IMAGE // PATCH
NUM_PATCHES = GRID * GRID
SEQ = NUM_PATCHES + 1
EPS = 1e-5
SCALE = HEAD_DIM ** -0.5
BATCH = 2
PATCH_K = CHANNELS * PATCH * PATCH


# ----------------------------- fused kernel --------------------------------
def _ln(x, g, b):
    """LayerNorm over the last axis, f32 math (matches nn.LayerNorm, eps=1e-5)."""
    mu = jnp.mean(x, axis=-1, keepdims=True)
    var = jnp.mean(jnp.square(x - mu), axis=-1, keepdims=True)
    return (x - mu) * jax.lax.rsqrt(var + EPS) * g + b


def _clip_fused_kernel(
        patches_ref, patch_w_ref, emb_bias_ref, pre_g_ref, pre_b_ref,
        post_g_ref, post_b_ref,
        ln1g_ref, ln1b_ref, wqkv_ref, bqkv_ref, wo_ref, bo_ref,
        ln2g_ref, ln2b_ref, w1_ref, b1_ref, w2_ref, b2_ref,
        out_ref, pooled_ref, h_ref):
    l = pl.program_id(1)

    # ---- embeddings + pre_layrnorm: once per batch element (layer step 0) ----
    @pl.when(l == 0)
    def _():
        # patches row 0 is zero (CLS slot); class_emb + pos_emb live in emb_bias.
        pe = jnp.dot(patches_ref[...], patch_w_ref[...],
                     preferred_element_type=jnp.float32)          # (S, D)
        h_ref[...] = _ln(pe + emb_bias_ref[...], pre_g_ref[...], pre_b_ref[...])

    x = h_ref[...]                                                # (S, D) f32

    # ------------------------- CLIPEncoderLayer -------------------------------
    # LayerNorm1 + fused q/k/v projection (SCALE already folded into the q part).
    h = _ln(x, ln1g_ref[...], ln1b_ref[...])
    qkv = jnp.dot(h.astype(jnp.bfloat16), wqkv_ref[...],
                  preferred_element_type=jnp.float32) + bqkv_ref[...]   # (S, 3D)

    attn = bo_ref[...]                     # (1, D) f32; broadcasts on first add
    for hh in range(HEADS):                # static unroll over heads
        q_h = qkv[:, hh * HEAD_DIM:(hh + 1) * HEAD_DIM]
        k_h = qkv[:, HIDDEN + hh * HEAD_DIM:HIDDEN + (hh + 1) * HEAD_DIM]
        v_h = qkv[:, 2 * HIDDEN + hh * HEAD_DIM:2 * HIDDEN + (hh + 1) * HEAD_DIM]
        # q @ k^T without materializing a transpose: contract the last dims.
        s = jax.lax.dot_general(
            q_h.astype(jnp.bfloat16), k_h.astype(jnp.bfloat16),
            (((1,), (1,)), ((), ())),
            preferred_element_type=jnp.float32)                   # (S, S)
        s = s - jnp.max(s, axis=-1, keepdims=True)
        p = jnp.exp(s)
        p = p * pl.reciprocal(jnp.sum(p, axis=-1, keepdims=True), approx=True)
        o_h = jnp.dot(p.astype(jnp.bfloat16), v_h.astype(jnp.bfloat16),
                      preferred_element_type=jnp.float32)         # (S, Hd)
        # out_proj folded per head: concat_h(o_h) @ wo == sum_h o_h @ wo[h rows]
        attn = attn + jnp.dot(o_h.astype(jnp.bfloat16),
                              wo_ref[hh * HEAD_DIM:(hh + 1) * HEAD_DIM, :],
                              preferred_element_type=jnp.float32)
    x = x + attn                                                  # residual 1

    # LayerNorm2 + MLP (QuickGELU in f32).
    h = _ln(x, ln2g_ref[...], ln2b_ref[...])
    h1 = jnp.dot(h.astype(jnp.bfloat16), w1_ref[...],
                 preferred_element_type=jnp.float32) + b1_ref[...]
    h1 = h1 * jax.nn.sigmoid(1.702 * h1)
    h2 = jnp.dot(h1.astype(jnp.bfloat16), w2_ref[...],
                 preferred_element_type=jnp.float32) + b2_ref[...]
    x = x + h2                                                    # residual 2
    h_ref[...] = x

    # ---- write outputs after the last layer ----
    @pl.when(l == pl.num_programs(1) - 1)
    def _():
        out_ref[...] = x
        pooled_ref[...] = _ln(x[0:1, :], post_g_ref[...], post_b_ref[...])


def _cost_estimate(batch):
    layer_mm = 2 * SEQ * (HIDDEN * 3 * HIDDEN + HIDDEN * HIDDEN + 2 * HIDDEN * INTER)
    layer_attn = 4 * HEADS * SEQ * SEQ * HEAD_DIM
    embed = 2 * SEQ * PATCH_K * HIDDEN
    flops = batch * (embed + LAYERS * (layer_mm + layer_attn))
    trans = batch * LAYERS * (HEADS * SEQ * SEQ + SEQ * INTER)
    w_bytes = 2 * (HIDDEN * 3 * HIDDEN + HIDDEN * HIDDEN + 2 * HIDDEN * INTER)
    bytes_acc = batch * LAYERS * w_bytes + 4 * batch * (SEQ * PATCH_K + 2 * SEQ * HIDDEN)
    return pl.CostEstimate(flops=int(flops), transcendentals=int(trans),
                           bytes_accessed=int(bytes_acc))


# -------------------------- full forward pass -------------------------------
def clip_vision_forward(pixel_values, staged):
    """pixel_values: (B, C, H, W) NCHW. staged: dict from stage_params().
    Returns (last_hidden_state (B, S, D), pooler_output (B, D))."""
    B = pixel_values.shape[0]
    x = pixel_values.astype(jnp.float32)
    # Patch extraction == Conv2d(kernel=stride=PATCH, no bias): pure layout op.
    x = x.reshape(B, CHANNELS, GRID, PATCH, GRID, PATCH)
    x = x.transpose(0, 2, 4, 1, 3, 5).reshape(B, NUM_PATCHES, PATCH_K)
    # Row 0 is a zero placeholder for the CLS token (its embedding is in emb_bias).
    patches = jnp.concatenate(
        [jnp.zeros((B, 1, PATCH_K), jnp.float32), x], axis=1)        # (B, S, K)

    def c2(r, c):    # constant 2-D operand (same block for every grid step)
        return pl.BlockSpec((r, c), lambda b, l: (0, 0))

    def l2(r, c):    # per-layer operand: leading LAYERS axis indexed by grid l
        return pl.BlockSpec((None, r, c), lambda b, l: (l, 0, 0))

    in_specs = [
        pl.BlockSpec((None, SEQ, PATCH_K), lambda b, l: (b, 0, 0)),   # patches
        c2(PATCH_K, HIDDEN),                                          # patch_w
        c2(SEQ, HIDDEN),                                              # emb_bias
        c2(1, HIDDEN), c2(1, HIDDEN),                                 # pre ln
        c2(1, HIDDEN), c2(1, HIDDEN),                                 # post ln
        l2(1, HIDDEN), l2(1, HIDDEN),                                 # ln1 g/b
        l2(HIDDEN, 3 * HIDDEN), l2(1, 3 * HIDDEN),                    # wqkv/bqkv
        l2(HIDDEN, HIDDEN), l2(1, HIDDEN),                            # wo/bo
        l2(1, HIDDEN), l2(1, HIDDEN),                                 # ln2 g/b
        l2(HIDDEN, INTER), l2(1, INTER),                              # w1/b1
        l2(INTER, HIDDEN), l2(1, HIDDEN),                             # w2/b2
    ]
    out_specs = (pl.BlockSpec((None, SEQ, HIDDEN), lambda b, l: (b, 0, 0)),
                 pl.BlockSpec((None, 1, HIDDEN), lambda b, l: (b, 0, 0)))
    out_shape = (jax.ShapeDtypeStruct((B, SEQ, HIDDEN), jnp.float32),
                 jax.ShapeDtypeStruct((B, 1, HIDDEN), jnp.float32))

    last_hidden, pooled = pl.pallas_call(
        _clip_fused_kernel,
        out_shape=out_shape,
        grid=(B, LAYERS),
        in_specs=in_specs,
        out_specs=out_specs,
        scratch_shapes=[pltpu.VMEM((SEQ, HIDDEN), jnp.float32)],
        compiler_params=pltpu.CompilerParams(
            dimension_semantics=("parallel", "arbitrary")),
        cost_estimate=_cost_estimate(B),
    )(patches, staged["patch_w"], staged["emb_bias"],
      staged["pre_g"], staged["pre_b"], staged["post_g"], staged["post_b"],
      staged["ln1_g"], staged["ln1_b"], staged["wqkv"], staged["bqkv"],
      staged["wo"], staged["bo"], staged["ln2_g"], staged["ln2_b"],
      staged["w1"], staged["b1"], staged["w2"], staged["b2"])
    return last_hidden, pooled[:, 0, :]


# -------------------------- parameter staging --------------------------------
def stage_params(params):
    """Natural (PyTorch-like) params -> kernel layout:
    stack per-layer weights on a leading LAYERS axis, fuse q/k/v, fold the
    attention SCALE into wq/bq, cast matmul weights to bf16, and fold the
    class embedding into row 0 of the positional embedding."""
    def stack(name):
        return jnp.stack([lp[name] for lp in params["layers"]])

    wqkv = jnp.concatenate([stack("wq") * SCALE, stack("wk"), stack("wv")],
                           axis=-1).astype(jnp.bfloat16)              # (L, D, 3D)
    bqkv = jnp.concatenate([stack("bq") * SCALE, stack("bk"), stack("bv")],
                           axis=-1)                                   # (L, 1, 3D)
    return {
        "patch_w": params["patch_w"],                                 # f32 (K, D)
        "emb_bias": params["pos_emb"].at[0].add(params["class_emb"]),  # (S, D)
        "pre_g": params["pre_g"], "pre_b": params["pre_b"],
        "post_g": params["post_g"], "post_b": params["post_b"],
        "ln1_g": stack("ln1_g"), "ln1_b": stack("ln1_b"),
        "wqkv": wqkv, "bqkv": bqkv,
        "wo": stack("wo").astype(jnp.bfloat16), "bo": stack("bo"),
        "ln2_g": stack("ln2_g"), "ln2_b": stack("ln2_b"),
        "w1": stack("w1").astype(jnp.bfloat16), "b1": stack("b1"),
        "w2": stack("w2").astype(jnp.bfloat16), "b2": stack("b2"),
    }


# --------------------------- pure-JAX reference ------------------------------
def _ref_layernorm(x, g, b):
    mu = jnp.mean(x, -1, keepdims=True)
    var = jnp.mean(jnp.square(x - mu), -1, keepdims=True)
    return (x - mu) * jax.lax.rsqrt(var + EPS) * g + b


def ref_forward(pixel_values, params):
    B = pixel_values.shape[0]
    x = pixel_values.astype(jnp.float32)
    x = x.reshape(B, CHANNELS, GRID, PATCH, GRID, PATCH)
    x = x.transpose(0, 2, 4, 1, 3, 5).reshape(B, NUM_PATCHES, PATCH_K)
    patch_embeds = x @ params["patch_w"]
    cls = jnp.broadcast_to(params["class_emb"][None, None, :], (B, 1, HIDDEN))
    emb = jnp.concatenate([cls, patch_embeds], axis=1) + params["pos_emb"][None]
    h = _ref_layernorm(emb, params["pre_g"], params["pre_b"])
    for lp in params["layers"]:
        r = h
        n = _ref_layernorm(h, lp["ln1_g"], lp["ln1_b"])
        q = (n @ lp["wq"] + lp["bq"]) * SCALE
        k = n @ lp["wk"] + lp["bk"]
        v = n @ lp["wv"] + lp["bv"]
        q = q.reshape(B, SEQ, HEADS, HEAD_DIM).transpose(0, 2, 1, 3)
        k = k.reshape(B, SEQ, HEADS, HEAD_DIM).transpose(0, 2, 1, 3)
        v = v.reshape(B, SEQ, HEADS, HEAD_DIM).transpose(0, 2, 1, 3)
        s = jnp.einsum("bhqd,bhkd->bhqk", q, k)
        p = jax.nn.softmax(s, axis=-1)
        o = jnp.einsum("bhqk,bhkd->bhqd", p, v)
        o = o.transpose(0, 2, 1, 3).reshape(B, SEQ, HIDDEN)
        h = r + (o @ lp["wo"] + lp["bo"])
        r = h
        n = _ref_layernorm(h, lp["ln2_g"], lp["ln2_b"])
        h1 = n @ lp["w1"] + lp["b1"]
        h1 = h1 * jax.nn.sigmoid(1.702 * h1)
        h = r + (h1 @ lp["w2"] + lp["b2"])
    pooled = _ref_layernorm(h[:, 0, :], params["post_g"][0], params["post_b"][0])
    return h, pooled


# ------------------------------- params -------------------------------------
def make_params(key):
    ks = iter(jax.random.split(key, 64 + LAYERS * 32))

    def nrm(shape, scale=0.02):
        return jax.random.normal(next(ks), shape, jnp.float32) * scale

    params = {
        "patch_w": nrm((PATCH_K, HIDDEN)),           # flattened conv weight (K, D)
        "class_emb": nrm((HIDDEN,), 1.0),            # torch.randn(embed_dim)
        "pos_emb": nrm((SEQ, HIDDEN)),               # nn.Embedding(SEQ, D)
        "pre_g": jnp.ones((1, HIDDEN), jnp.float32),
        "pre_b": jnp.zeros((1, HIDDEN), jnp.float32),
        "post_g": jnp.ones((1, HIDDEN), jnp.float32),
        "post_b": jnp.zeros((1, HIDDEN), jnp.float32),
        "layers": [],
    }
    for _ in range(LAYERS):
        layer = {
            "ln1_g": jnp.ones((1, HIDDEN), jnp.float32),
            "ln1_b": jnp.zeros((1, HIDDEN), jnp.float32),
            "wq": nrm((HIDDEN, HIDDEN)), "bq": nrm((1, HIDDEN)),
            "wk": nrm((HIDDEN, HIDDEN)), "bk": nrm((1, HIDDEN)),
            "wv": nrm((HIDDEN, HIDDEN)), "bv": nrm((1, HIDDEN)),
            "wo": nrm((HIDDEN, HIDDEN)), "bo": nrm((1, HIDDEN)),
            "ln2_g": jnp.ones((1, HIDDEN), jnp.float32),
            "ln2_b": jnp.zeros((1, HIDDEN), jnp.float32),
            "w1": nrm((HIDDEN, INTER)), "b1": nrm((1, INTER)),
            "w2": nrm((INTER, HIDDEN)), "b2": nrm((1, HIDDEN)),
        }
        params["layers"].append(layer)
    return params


# --------------------------------- main --------------------------------------
if __name__ == "__main__":
    key = jax.random.PRNGKey(0)
    k_param, k_pix = jax.random.split(key)
    params = make_params(k_param)
    pixel_values = jax.random.normal(
        k_pix, (BATCH, CHANNELS, IMAGE, IMAGE), jnp.float32)

    staged = stage_params(params)                 # one-time staging (scale fold, bf16)
    fwd = jax.jit(clip_vision_forward)
    last_hidden, pooled = fwd(pixel_values, staged)
    jax.block_until_ready(last_hidden)
    jax.block_until_ready(pooled)

    ref_last, ref_pooled = ref_forward(pixel_values, params)
    # bf16 MXU operands + approx reciprocal -> slightly looser tolerance than f32.
    assert jnp.allclose(last_hidden, ref_last, atol=2e-2, rtol=2e-2)
    assert jnp.allclose(pooled, ref_pooled, atol=2e-2, rtol=2e-2)

    print("KERNEL_OK")
</pallas_src>

<mosaic_0001>
module attributes {stable_mosaic.version = 11 : i64} {
  func.func @_clip_fused_kernel(%arg0: i32, %arg1: i32, %arg2: memref<1x5x768xf32, #tpu.memory_space<vmem>>, %arg3: memref<768x128xf32, #tpu.memory_space<vmem>>, %arg4: memref<5x128xf32, #tpu.memory_space<vmem>>, %arg5: memref<1x128xf32, #tpu.memory_space<vmem>>, %arg6: memref<1x128xf32, #tpu.memory_space<vmem>>, %arg7: memref<1x128xf32, #tpu.memory_space<vmem>>, %arg8: memref<1x128xf32, #tpu.memory_space<vmem>>, %arg9: memref<1x1x128xf32, #tpu.memory_space<vmem>>, %arg10: memref<1x1x128xf32, #tpu.memory_space<vmem>>, %arg11: memref<1x128x384xbf16, #tpu.memory_space<vmem>>, %arg12: memref<1x1x384xf32, #tpu.memory_space<vmem>>, %arg13: memref<1x128x128xbf16, #tpu.memory_space<vmem>>, %arg14: memref<1x1x128xf32, #tpu.memory_space<vmem>>, %arg15: memref<1x1x128xf32, #tpu.memory_space<vmem>>, %arg16: memref<1x1x128xf32, #tpu.memory_space<vmem>>, %arg17: memref<1x128x256xbf16, #tpu.memory_space<vmem>>, %arg18: memref<1x1x256xf32, #tpu.memory_space<vmem>>, %arg19: memref<1x256x128xbf16, #tpu.memory_space<vmem>>, %arg20: memref<1x1x128xf32, #tpu.memory_space<vmem>>, %arg21: memref<1x5x128xf32, #tpu.memory_space<vmem>>, %arg22: memref<1x1x128xf32, #tpu.memory_space<vmem>>, %arg23: memref<5x128xf32, #tpu.memory_space<vmem>>) attributes {dimension_semantics = [#tpu.dimension_semantics<parallel>, #tpu.dimension_semantics<arbitrary>], iteration_bounds = array<i64: 2, 2>, scalar_prefetch = 0 : i64, scratch_operands = 1 : i64, tpu.core_type = #tpu.core_type<tc>, window_params = [{transform_indices = @transform_0, window_bounds = array<i64: 1, 5, 768>}, {pipeline_mode = #tpu.pipeline_mode<synchronous>, transform_indices = @transform_1, window_bounds = array<i64: 768, 128>}, {pipeline_mode = #tpu.pipeline_mode<synchronous>, transform_indices = @transform_2, window_bounds = array<i64: 5, 128>}, {pipeline_mode = #tpu.pipeline_mode<synchronous>, transform_indices = @transform_3, window_bounds = array<i64: 1, 128>}, {pipeline_mode = #tpu.pipeline_mode<synchronous>, transform_indices = @transform_4, window_bounds = array<i64: 1, 128>}, {pipeline_mode = #tpu.pipeline_mode<synchronous>, transform_indices = @transform_5, window_bounds = array<i64: 1, 128>}, {pipeline_mode = #tpu.pipeline_mode<synchronous>, transform_indices = @transform_6, window_bounds = array<i64: 1, 128>}, {transform_indices = @transform_7, window_bounds = array<i64: 1, 1, 128>}, {transform_indices = @transform_8, window_bounds = array<i64: 1, 1, 128>}, {transform_indices = @transform_9, window_bounds = array<i64: 1, 128, 384>}, {transform_indices = @transform_10, window_bounds = array<i64: 1, 1, 384>}, {transform_indices = @transform_11, window_bounds = array<i64: 1, 128, 128>}, {transform_indices = @transform_12, window_bounds = array<i64: 1, 1, 128>}, {transform_indices = @transform_13, window_bounds = array<i64: 1, 1, 128>}, {transform_indices = @transform_14, window_bounds = array<i64: 1, 1, 128>}, {transform_indices = @transform_15, window_bounds = array<i64: 1, 128, 256>}, {transform_indices = @transform_16, window_bounds = array<i64: 1, 1, 256>}, {transform_indices = @transform_17, window_bounds = array<i64: 1, 256, 128>}, {transform_indices = @transform_18, window_bounds = array<i64: 1, 1, 128>}, {transform_indices = @transform_19, window_bounds = array<i64: 1, 5, 128>}, {transform_indices = @transform_20, window_bounds = array<i64: 1, 1, 128>}]} {
    %c0_i32 = arith.constant 0 : i32
    %0 = arith.cmpi eq, %arg1, %c0_i32 : i32
    %1 = arith.extui %0 : i1 to i32
    %c0_i32_0 = arith.constant 0 : i32
    %2 = arith.cmpi ne, %1, %c0_i32_0 : i32
    scf.if %2 {
      %c0_81 = arith.constant 0 : index
      %c0_82 = arith.constant 0 : index
      %c0_83 = arith.constant 0 : index
      %193 = vector.load %arg2[%c0_81, %c0_82, %c0_83] : memref<1x5x768xf32, #tpu.memory_space<vmem>>, vector<1x5x768xf32>
      %194 = vector.shape_cast %193 : vector<1x5x768xf32> to vector<5x768xf32>
      %c0_84 = arith.constant 0 : index
      %c0_85 = arith.constant 0 : index
      %195 = vector.load %arg3[%c0_84, %c0_85] : memref<768x128xf32, #tpu.memory_space<vmem>>, vector<768x128xf32>
      %cst_86 = arith.constant dense<0.000000e+00> : vector<5x128xf32>
      %196 = tpu.matmul %194, %195, %cst_86 {dimension_numbers = #tpu.dot_dimension_numbers<[1], [0], [0], [1], [0, 0, 1, 1], [], []>} : vector<5x768xf32>, vector<768x128xf32>, vector<5x128xf32> -> vector<5x128xf32>
      %c0_87 = arith.constant 0 : index
      %c0_88 = arith.constant 0 : index
      %197 = vector.load %arg4[%c0_87, %c0_88] : memref<5x128xf32, #tpu.memory_space<vmem>>, vector<5x128xf32>
      %198 = arith.addf %196, %197 : vector<5x128xf32>
      %c0_89 = arith.constant 0 : index
      %c0_90 = arith.constant 0 : index
      %199 = vector.load %arg5[%c0_89, %c0_90] : memref<1x128xf32, #tpu.memory_space<vmem>>, vector<1x128xf32>
      %c0_91 = arith.constant 0 : index
      %c0_92 = arith.constant 0 : index
      %200 = vector.load %arg6[%c0_91, %c0_92] : memref<1x128xf32, #tpu.memory_space<vmem>>, vector<1x128xf32>
      %cst_93 = arith.constant dense<0.000000e+00> : vector<5xf32>
      %201 = vector.multi_reduction <add>, %198, %cst_93 [1] : vector<5x128xf32> to vector<5xf32>
      %202 = vector.shape_cast %201 : vector<5xf32> to vector<5x1xf32>
      %cst_94 = arith.constant 1.280000e+02 : f32
      %203 = vector.broadcast %cst_94 : f32 to vector<5x1xf32>
      %204 = arith.divf %202, %203 : vector<5x1xf32>
      %205 = vector.broadcast %204 : vector<5x1xf32> to vector<5x128xf32>
      %206 = arith.subf %198, %205 : vector<5x128xf32>
      %207 = arith.mulf %206, %206 : vector<5x128xf32>
      %cst_95 = arith.constant dense<0.000000e+00> : vector<5xf32>
      %208 = vector.multi_reduction <add>, %207, %cst_95 [1] : vector<5x128xf32> to vector<5xf32>
      %209 = vector.shape_cast %208 : vector<5xf32> to vector<5x1xf32>
      %cst_96 = arith.constant 1.280000e+02 : f32
      %210 = vector.broadcast %cst_96 : f32 to vector<5x1xf32>
      %211 = arith.divf %209, %210 : vector<5x1xf32>
      %212 = vector.broadcast %204 : vector<5x1xf32> to vector<5x128xf32>
      %213 = arith.subf %198, %212 : vector<5x128xf32>
      %cst_97 = arith.constant 9.99999974E-6 : f32
      %214 = vector.broadcast %cst_97 : f32 to vector<5x1xf32>
      %215 = arith.addf %211, %214 : vector<5x1xf32>
      %216 = math.rsqrt %215 : vector<5x1xf32>
      %217 = vector.broadcast %216 : vector<5x1xf32> to vector<5x128xf32>
      %218 = arith.mulf %213, %217 : vector<5x128xf32>
      %219 = vector.broadcast %199 : vector<1x128xf32> to vector<5x128xf32>
      %220 = arith.mulf %218, %219 : vector<5x128xf32>
      %221 = vector.broadcast %200 : vector<1x128xf32> to vector<5x128xf32>
      %222 = arith.addf %220, %221 : vector<5x128xf32>
      %c0_98 = arith.constant 0 : index
      %c0_99 = arith.constant 0 : index
      %223 = vector.load %arg23[%c0_98, %c0_99] : memref<5x128xf32, #tpu.memory_space<vmem>>, vector<5x128xf32>
      tpu.vector_store %arg23[%c0_98, %c0_99], %222 {strides = array<i32>} : memref<5x128xf32, #tpu.memory_space<vmem>>, vector<5x128xf32>,
    } else {
    }
    %c0 = arith.constant 0 : index
    %c0_1 = arith.constant 0 : index
    %3 = vector.load %arg23[%c0, %c0_1] : memref<5x128xf32, #tpu.memory_space<vmem>>, vector<5x128xf32>
    %c0_2 = arith.constant 0 : index
    %c0_3 = arith.constant 0 : index
    %c0_4 = arith.constant 0 : index
    %4 = vector.load %arg9[%c0_2, %c0_3, %c0_4] : memref<1x1x128xf32, #tpu.memory_space<vmem>>, vector<1x1x128xf32>
    %5 = vector.shape_cast %4 : vector<1x1x128xf32> to vector<1x128xf32>
    %c0_5 = arith.constant 0 : index
    %c0_6 = arith.constant 0 : index
    %c0_7 = arith.constant 0 : index
    %6 = vector.load %arg10[%c0_5, %c0_6, %c0_7] : memref<1x1x128xf32, #tpu.memory_space<vmem>>, vector<1x1x128xf32>
    %7 = vector.shape_cast %6 : vector<1x1x128xf32> to vector<1x128xf32>
    %cst = arith.constant dense<0.000000e+00> : vector<5xf32>
    %8 = vector.multi_reduction <add>, %3, %cst [1] : vector<5x128xf32> to vector<5xf32>
    %9 = vector.shape_cast %8 : vector<5xf32> to vector<5x1xf32>
    %cst_8 = arith.constant 1.280000e+02 : f32
    %10 = vector.broadcast %cst_8 : f32 to vector<5x1xf32>
    %11 = arith.divf %9, %10 : vector<5x1xf32>
    %12 = vector.broadcast %11 : vector<5x1xf32> to vector<5x128xf32>
    %13 = arith.subf %3, %12 : vector<5x128xf32>
    %14 = arith.mulf %13, %13 : vector<5x128xf32>
    %cst_9 = arith.constant dense<0.000000e+00> : vector<5xf32>
    %15 = vector.multi_reduction <add>, %14, %cst_9 [1] : vector<5x128xf32> to vector<5xf32>
    %16 = vector.shape_cast %15 : vector<5xf32> to vector<5x1xf32>
    %cst_10 = arith.constant 1.280000e+02 : f32
    %17 = vector.broadcast %cst_10 : f32 to vector<5x1xf32>
    %18 = arith.divf %16, %17 : vector<5x1xf32>
    %19 = vector.broadcast %11 : vector<5x1xf32> to vector<5x128xf32>
    %20 = arith.subf %3, %19 : vector<5x128xf32>
    %cst_11 = arith.constant 9.99999974E-6 : f32
    %21 = vector.broadcast %cst_11 : f32 to vector<5x1xf32>
    %22 = arith.addf %18, %21 : vector<5x1xf32>
    %23 = math.rsqrt %22 : vector<5x1xf32>
    %24 = vector.broadcast %23 : vector<5x1xf32> to vector<5x128xf32>
    %25 = arith.mulf %20, %24 : vector<5x128xf32>
    %26 = vector.broadcast %5 : vector<1x128xf32> to vector<5x128xf32>
    %27 = arith.mulf %25, %26 : vector<5x128xf32>
    %28 = vector.broadcast %7 : vector<1x128xf32> to vector<5x128xf32>
    %29 = arith.addf %27, %28 : vector<5x128xf32>
    %30 = arith.truncf %29 : vector<5x128xf32> to vector<5x128xbf16>
    %c0_12 = arith.constant 0 : index
    %c0_13 = arith.constant 0 : index
    %c0_14 = arith.constant 0 : index
    %31 = vector.load %arg11[%c0_12, %c0_13, %c0_14] : memref<1x128x384xbf16, #tpu.memory_space<vmem>>, vector<1x128x384xbf16>
    %32 = vector.shape_cast %31 : vector<1x128x384xbf16> to vector<128x384xbf16>
    %cst_15 = arith.constant dense<0.000000e+00> : vector<5x384xf32>
    %33 = tpu.matmul %30, %32, %cst_15 {dimension_numbers = #tpu.dot_dimension_numbers<[1], [0], [0], [1], [0, 0, 1, 1], [], []>} : vector<5x128xbf16>, vector<128x384xbf16>, vector<5x384xf32> -> vector<5x384xf32>
    %c0_16 = arith.constant 0 : index
    %c0_17 = arith.constant 0 : index
    %c0_18 = arith.constant 0 : index
    %34 = vector.load %arg12[%c0_16, %c0_17, %c0_18] : memref<1x1x384xf32, #tpu.memory_space<vmem>>, vector<1x1x384xf32>
    %35 = vector.shape_cast %34 : vector<1x1x384xf32> to vector<1x384xf32>
    %36 = vector.broadcast %35 : vector<1x384xf32> to vector<5x384xf32>
    %37 = arith.addf %33, %36 : vector<5x384xf32>
    %c0_19 = arith.constant 0 : index
    %c0_20 = arith.constant 0 : index
    %c0_21 = arith.constant 0 : index
    %38 = vector.load %arg14[%c0_19, %c0_20, %c0_21] : memref<1x1x128xf32, #tpu.memory_space<vmem>>, vector<1x1x128xf32>
    %39 = vector.shape_cast %38 : vector<1x1x128xf32> to vector<1x128xf32>
    %40 = vector.extract_strided_slice %37 {offsets = [0, 0], sizes = [5, 32], strides = [1, 1]} : vector<5x384xf32> to vector<5x32xf32>
    %41 = vector.extract_strided_slice %37 {offsets = [0, 128], sizes = [5, 32], strides = [1, 1]} : vector<5x384xf32> to vector<5x32xf32>
    %42 = vector.extract_strided_slice %37 {offsets = [0, 256], sizes = [5, 32], strides = [1, 1]} : vector<5x384xf32> to vector<5x32xf32>
    %43 = arith.truncf %40 : vector<5x32xf32> to vector<5x32xbf16>
    %44 = arith.truncf %41 : vector<5x32xf32> to vector<5x32xbf16>
    %cst_22 = arith.constant dense<0.000000e+00> : vector<5x5xf32>
    %45 = tpu.matmul %43, %44, %cst_22 {dimension_numbers = #tpu.dot_dimension_numbers<[1], [1], [0], [0], [0, 0, 1, 0], [], []>} : vector<5x32xbf16>, vector<5x32xbf16>, vector<5x5xf32> -> vector<5x5xf32>
    %cst_23 = arith.constant dense<0xFF800000> : vector<5xf32>
    %46 = vector.multi_reduction <maximumf>, %45, %cst_23 [1] : vector<5x5xf32> to vector<5xf32>
    %47 = vector.shape_cast %46 : vector<5xf32> to vector<5x1xf32>
    %48 = vector.broadcast %47 : vector<5x1xf32> to vector<5x5xf32>
    %49 = arith.subf %45, %48 : vector<5x5xf32>
    %50 = math.exp %49 : vector<5x5xf32>
    %cst_24 = arith.constant dense<0.000000e+00> : vector<5xf32>
    %51 = vector.multi_reduction <add>, %50, %cst_24 [1] : vector<5x5xf32> to vector<5xf32>
    %52 = vector.shape_cast %51 : vector<5xf32> to vector<5x1xf32>
    %53 = tpu.reciprocal %52 {approx = true} : vector<5x1xf32> -> vector<5x1xf32>
    %54 = vector.broadcast %53 : vector<5x1xf32> to vector<5x5xf32>
    %55 = arith.mulf %50, %54 : vector<5x5xf32>
    %56 = arith.truncf %55 : vector<5x5xf32> to vector<5x5xbf16>
    %57 = arith.truncf %42 : vector<5x32xf32> to vector<5x32xbf16>
    %cst_25 = arith.constant dense<0.000000e+00> : vector<5x32xf32>
    %58 = tpu.matmul %56, %57, %cst_25 {dimension_numbers = #tpu.dot_dimension_numbers<[1], [0], [0], [1], [0, 0, 1, 1], [], []>} : vector<5x5xbf16>, vector<5x32xbf16>, vector<5x32xf32> -> vector<5x32xf32>
    %59 = arith.truncf %58 : vector<5x32xf32> to vector<5x32xbf16>
    %c0_26 = arith.constant 0 : index
    %c0_27 = arith.constant 0 : index
    %c0_28 = arith.constant 0 : index
    %60 = vector.load %arg13[%c0_26, %c0_27, %c0_28] : memref<1x128x128xbf16, #tpu.memory_space<vmem>>, vector<1x32x128xbf16>
    %61 = vector.shape_cast %60 : vector<1x32x128xbf16> to vector<32x128xbf16>
    %cst_29 = arith.constant dense<0.000000e+00> : vector<5x128xf32>
    %62 = tpu.matmul %59, %61, %cst_29 {dimension_numbers = #tpu.dot_dimension_numbers<[1], [0], [0], [1], [0, 0, 1, 1], [], []>} : vector<5x32xbf16>, vector<32x128xbf16>, vector<5x128xf32> -> vector<5x128xf32>
    %63 = vector.broadcast %39 : vector<1x128xf32> to vector<5x128xf32>
    %64 = arith.addf %63, %62 : vector<5x128xf32>
    %65 = vector.extract_strided_slice %37 {offsets = [0, 32], sizes = [5, 32], strides = [1, 1]} : vector<5x384xf32> to vector<5x32xf32>
    %66 = vector.extract_strided_slice %37 {offsets = [0, 160], sizes = [5, 32], strides = [1, 1]} : vector<5x384xf32> to vector<5x32xf32>
    %67 = vector.extract_strided_slice %37 {offsets = [0, 288], sizes = [5, 32], strides = [1, 1]} : vector<5x384xf32> to vector<5x32xf32>
    %68 = arith.truncf %65 : vector<5x32xf32> to vector<5x32xbf16>
    %69 = arith.truncf %66 : vector<5x32xf32> to vector<5x32xbf16>
    %cst_30 = arith.constant dense<0.000000e+00> : vector<5x5xf32>
    %70 = tpu.matmul %68, %69, %cst_30 {dimension_numbers = #tpu.dot_dimension_numbers<[1], [1], [0], [0], [0, 0, 1, 0], [], []>} : vector<5x32xbf16>, vector<5x32xbf16>, vector<5x5xf32> -> vector<5x5xf32>
    %cst_31 = arith.constant dense<0xFF800000> : vector<5xf32>
    %71 = vector.multi_reduction <maximumf>, %70, %cst_31 [1] : vector<5x5xf32> to vector<5xf32>
    %72 = vector.shape_cast %71 : vector<5xf32> to vector<5x1xf32>
    %73 = vector.broadcast %72 : vector<5x1xf32> to vector<5x5xf32>
    %74 = arith.subf %70, %73 : vector<5x5xf32>
    %75 = math.exp %74 : vector<5x5xf32>
    %cst_32 = arith.constant dense<0.000000e+00> : vector<5xf32>
    %76 = vector.multi_reduction <add>, %75, %cst_32 [1] : vector<5x5xf32> to vector<5xf32>
    %77 = vector.shape_cast %76 : vector<5xf32> to vector<5x1xf32>
    %78 = tpu.reciprocal %77 {approx = true} : vector<5x1xf32> -> vector<5x1xf32>
    %79 = vector.broadcast %78 : vector<5x1xf32> to vector<5x5xf32>
    %80 = arith.mulf %75, %79 : vector<5x5xf32>
    %81 = arith.truncf %80 : vector<5x5xf32> to vector<5x5xbf16>
    %82 = arith.truncf %67 : vector<5x32xf32> to vector<5x32xbf16>
    %cst_33 = arith.constant dense<0.000000e+00> : vector<5x32xf32>
    %83 = tpu.matmul %81, %82, %cst_33 {dimension_numbers = #tpu.dot_dimension_numbers<[1], [0], [0], [1], [0, 0, 1, 1], [], []>} : vector<5x5xbf16>, vector<5x32xbf16>, vector<5x32xf32> -> vector<5x32xf32>
    %84 = arith.truncf %83 : vector<5x32xf32> to vector<5x32xbf16>
    %c0_34 = arith.constant 0 : index
    %c32 = arith.constant 32 : index
    %c0_35 = arith.constant 0 : index
    %85 = vector.load %arg13[%c0_34, %c32, %c0_35] : memref<1x128x128xbf16, #tpu.memory_space<vmem>>, vector<1x32x128xbf16>
    %86 = vector.shape_cast %85 : vector<1x32x128xbf16> to vector<32x128xbf16>
    %cst_36 = arith.constant dense<0.000000e+00> : vector<5x128xf32>
    %87 = tpu.matmul %84, %86, %cst_36 {dimension_numbers = #tpu.dot_dimension_numbers<[1], [0], [0], [1], [0, 0, 1, 1], [], []>} : vector<5x32xbf16>, vector<32x128xbf16>, vector<5x128xf32> -> vector<5x128xf32>
    %88 = arith.addf %64, %87 : vector<5x128xf32>
    %89 = vector.extract_strided_slice %37 {offsets = [0, 64], sizes = [5, 32], strides = [1, 1]} : vector<5x384xf32> to vector<5x32xf32>
    %90 = vector.extract_strided_slice %37 {offsets = [0, 192], sizes = [5, 32], strides = [1, 1]} : vector<5x384xf32> to vector<5x32xf32>
    %91 = vector.extract_strided_slice %37 {offsets = [0, 320], sizes = [5, 32], strides = [1, 1]} : vector<5x384xf32> to vector<5x32xf32>
    %92 = arith.truncf %89 : vector<5x32xf32> to vector<5x32xbf16>
    %93 = arith.truncf %90 : vector<5x32xf32> to vector<5x32xbf16>
    %cst_37 = arith.constant dense<0.000000e+00> : vector<5x5xf32>
    %94 = tpu.matmul %92, %93, %cst_37 {dimension_numbers = #tpu.dot_dimension_numbers<[1], [1], [0], [0], [0, 0, 1, 0], [], []>} : vector<5x32xbf16>, vector<5x32xbf16>, vector<5x5xf32> -> vector<5x5xf32>
    %cst_38 = arith.constant dense<0xFF800000> : vector<5xf32>
    %95 = vector.multi_reduction <maximumf>, %94, %cst_38 [1] : vector<5x5xf32> to vector<5xf32>
    %96 = vector.shape_cast %95 : vector<5xf32> to vector<5x1xf32>
    %97 = vector.broadcast %96 : vector<5x1xf32> to vector<5x5xf32>
    %98 = arith.subf %94, %97 : vector<5x5xf32>
    %99 = math.exp %98 : vector<5x5xf32>
    %cst_39 = arith.constant dense<0.000000e+00> : vector<5xf32>
    %100 = vector.multi_reduction <add>, %99, %cst_39 [1] : vector<5x5xf32> to vector<5xf32>
    %101 = vector.shape_cast %100 : vector<5xf32> to vector<5x1xf32>
    %102 = tpu.reciprocal %101 {approx = true} : vector<5x1xf32> -> vector<5x1xf32>
    %103 = vector.broadcast %102 : vector<5x1xf32> to vector<5x5xf32>
    %104 = arith.mulf %99, %103 : vector<5x5xf32>
    %105 = arith.truncf %104 : vector<5x5xf32> to vector<5x5xbf16>
    %106 = arith.truncf %91 : vector<5x32xf32> to vector<5x32xbf16>
    %cst_40 = arith.constant dense<0.000000e+00> : vector<5x32xf32>
    %107 = tpu.matmul %105, %106, %cst_40 {dimension_numbers = #tpu.dot_dimension_numbers<[1], [0], [0], [1], [0, 0, 1, 1], [], []>} : vector<5x5xbf16>, vector<5x32xbf16>, vector<5x32xf32> -> vector<5x32xf32>
    %108 = arith.truncf %107 : vector<5x32xf32> to vector<5x32xbf16>
    %c0_41 = arith.constant 0 : index
    %c64 = arith.constant 64 : index
    %c0_42 = arith.constant 0 : index
    %109 = vector.load %arg13[%c0_41, %c64, %c0_42] : memref<1x128x128xbf16, #tpu.memory_space<vmem>>, vector<1x32x128xbf16>
    %110 = vector.shape_cast %109 : vector<1x32x128xbf16> to vector<32x128xbf16>
    %cst_43 = arith.constant dense<0.000000e+00> : vector<5x128xf32>
    %111 = tpu.matmul %108, %110, %cst_43 {dimension_numbers = #tpu.dot_dimension_numbers<[1], [0], [0], [1], [0, 0, 1, 1], [], []>} : vector<5x32xbf16>, vector<32x128xbf16>, vector<5x128xf32> -> vector<5x128xf32>
    %112 = arith.addf %88, %111 : vector<5x128xf32>
    %113 = vector.extract_strided_slice %37 {offsets = [0, 96], sizes = [5, 32], strides = [1, 1]} : vector<5x384xf32> to vector<5x32xf32>
    %114 = vector.extract_strided_slice %37 {offsets = [0, 224], sizes = [5, 32], strides = [1, 1]} : vector<5x384xf32> to vector<5x32xf32>
    %115 = vector.extract_strided_slice %37 {offsets = [0, 352], sizes = [5, 32], strides = [1, 1]} : vector<5x384xf32> to vector<5x32xf32>
    %116 = arith.truncf %113 : vector<5x32xf32> to vector<5x32xbf16>
    %117 = arith.truncf %114 : vector<5x32xf32> to vector<5x32xbf16>
    %cst_44 = arith.constant dense<0.000000e+00> : vector<5x5xf32>
    %118 = tpu.matmul %116, %117, %cst_44 {dimension_numbers = #tpu.dot_dimension_numbers<[1], [1], [0], [0], [0, 0, 1, 0], [], []>} : vector<5x32xbf16>, vector<5x32xbf16>, vector<5x5xf32> -> vector<5x5xf32>
    %cst_45 = arith.constant dense<0xFF800000> : vector<5xf32>
    %119 = vector.multi_reduction <maximumf>, %118, %cst_45 [1] : vector<5x5xf32> to vector<5xf32>
    %120 = vector.shape_cast %119 : vector<5xf32> to vector<5x1xf32>
    %121 = vector.broadcast %120 : vector<5x1xf32> to vector<5x5xf32>
    %122 = arith.subf %118, %121 : vector<5x5xf32>
    %123 = math.exp %122 : vector<5x5xf32>
    %cst_46 = arith.constant dense<0.000000e+00> : vector<5xf32>
    %124 = vector.multi_reduction <add>, %123, %cst_46 [1] : vector<5x5xf32> to vector<5xf32>
    %125 = vector.shape_cast %124 : vector<5xf32> to vector<5x1xf32>
    %126 = tpu.reciprocal %125 {approx = true} : vector<5x1xf32> -> vector<5x1xf32>
    %127 = vector.broadcast %126 : vector<5x1xf32> to vector<5x5xf32>
    %128 = arith.mulf %123, %127 : vector<5x5xf32>
    %129 = arith.truncf %128 : vector<5x5xf32> to vector<5x5xbf16>
    %130 = arith.truncf %115 : vector<5x32xf32> to vector<5x32xbf16>
    %cst_47 = arith.constant dense<0.000000e+00> : vector<5x32xf32>
    %131 = tpu.matmul %129, %130, %cst_47 {dimension_numbers = #tpu.dot_dimension_numbers<[1], [0], [0], [1], [0, 0, 1, 1], [], []>} : vector<5x5xbf16>, vector<5x32xbf16>, vector<5x32xf32> -> vector<5x32xf32>
    %132 = arith.truncf %131 : vector<5x32xf32> to vector<5x32xbf16>
    %c0_48 = arith.constant 0 : index
    %c96 = arith.constant 96 : index
    %c0_49 = arith.constant 0 : index
    %133 = vector.load %arg13[%c0_48, %c96, %c0_49] : memref<1x128x128xbf16, #tpu.memory_space<vmem>>, vector<1x32x128xbf16>
    %134 = vector.shape_cast %133 : vector<1x32x128xbf16> to vector<32x128xbf16>
    %cst_50 = arith.constant dense<0.000000e+00> : vector<5x128xf32>
    %135 = tpu.matmul %132, %134, %cst_50 {dimension_numbers = #tpu.dot_dimension_numbers<[1], [0], [0], [1], [0, 0, 1, 1], [], []>} : vector<5x32xbf16>, vector<32x128xbf16>, vector<5x128xf32> -> vector<5x128xf32>
    %136 = arith.addf %112, %135 : vector<5x128xf32>
    %137 = arith.addf %3, %136 : vector<5x128xf32>
    %c0_51 = arith.constant 0 : index
    %c0_52 = arith.constant 0 : index
    %c0_53 = arith.constant 0 : index
    %138 = vector.load %arg15[%c0_51, %c0_52, %c0_53] : memref<1x1x128xf32, #tpu.memory_space<vmem>>, vector<1x1x128xf32>
    %139 = vector.shape_cast %138 : vector<1x1x128xf32> to vector<1x128xf32>
    %c0_54 = arith.constant 0 : index
    %c0_55 = arith.constant 0 : index
    %c0_56 = arith.constant 0 : index
    %140 = vector.load %arg16[%c0_54, %c0_55, %c0_56] : memref<1x1x128xf32, #tpu.memory_space<vmem>>, vector<1x1x128xf32>
    %141 = vector.shape_cast %140 : vector<1x1x128xf32> to vector<1x128xf32>
    %cst_57 = arith.constant dense<0.000000e+00> : vector<5xf32>
    %142 = vector.multi_reduction <add>, %137, %cst_57 [1] : vector<5x128xf32> to vector<5xf32>
    %143 = vector.shape_cast %142 : vector<5xf32> to vector<5x1xf32>
    %cst_58 = arith.constant 1.280000e+02 : f32
    %144 = vector.broadcast %cst_58 : f32 to vector<5x1xf32>
    %145 = arith.divf %143, %144 : vector<5x1xf32>
    %146 = vector.broadcast %145 : vector<5x1xf32> to vector<5x128xf32>
    %147 = arith.subf %137, %146 : vector<5x128xf32>
    %148 = arith.mulf %147, %147 : vector<5x128xf32>
    %cst_59 = arith.constant dense<0.000000e+00> : vector<5xf32>
    %149 = vector.multi_reduction <add>, %148, %cst_59 [1] : vector<5x128xf32> to vector<5xf32>
    %150 = vector.shape_cast %149 : vector<5xf32> to vector<5x1xf32>
    %cst_60 = arith.constant 1.280000e+02 : f32
    %151 = vector.broadcast %cst_60 : f32 to vector<5x1xf32>
    %152 = arith.divf %150, %151 : vector<5x1xf32>
    %153 = vector.broadcast %145 : vector<5x1xf32> to vector<5x128xf32>
    %154 = arith.subf %137, %153 : vector<5x128xf32>
    %cst_61 = arith.constant 9.99999974E-6 : f32
    %155 = vector.broadcast %cst_61 : f32 to vector<5x1xf32>
    %156 = arith.addf %152, %155 : vector<5x1xf32>
    %157 = math.rsqrt %156 : vector<5x1xf32>
    %158 = vector.broadcast %157 : vector<5x1xf32> to vector<5x128xf32>
    %159 = arith.mulf %154, %158 : vector<5x128xf32>
    %160 = vector.broadcast %139 : vector<1x128xf32> to vector<5x128xf32>
    %161 = arith.mulf %159, %160 : vector<5x128xf32>
    %162 = vector.broadcast %141 : vector<1x128xf32> to vector<5x128xf32>
    %163 = arith.addf %161, %162 : vector<5x128xf32>
    %164 = arith.truncf %163 : vector<5x128xf32> to vector<5x128xbf16>
    %c0_62 = arith.constant 0 : index
    %c0_63 = arith.constant 0 : index
    %c0_64 = arith.constant 0 : index
    %165 = vector.load %arg17[%c0_62, %c0_63, %c0_64] : memref<1x128x256xbf16, #tpu.memory_space<vmem>>, vector<1x128x256xbf16>
    %166 = vector.shape_cast %165 : vector<1x128x256xbf16> to vector<128x256xbf16>
    %cst_65 = arith.constant dense<0.000000e+00> : vector<5x256xf32>
    %167 = tpu.matmul %164, %166, %cst_65 {dimension_numbers = #tpu.dot_dimension_numbers<[1], [0], [0], [1], [0, 0, 1, 1], [], []>} : vector<5x128xbf16>, vector<128x256xbf16>, vector<5x256xf32> -> vector<5x256xf32>
    %c0_66 = arith.constant 0 : index
    %c0_67 = arith.constant 0 : index
    %c0_68 = arith.constant 0 : index
    %168 = vector.load %arg18[%c0_66, %c0_67, %c0_68] : memref<1x1x256xf32, #tpu.memory_space<vmem>>, vector<1x1x256xf32>
    %169 = vector.shape_cast %168 : vector<1x1x256xf32> to vector<1x256xf32>
    %170 = vector.broadcast %169 : vector<1x256xf32> to vector<5x256xf32>
    %171 = arith.addf %167, %170 : vector<5x256xf32>
    %cst_69 = arith.constant 1.702000e+00 : f32
    %172 = vector.broadcast %cst_69 : f32 to vector<5x256xf32>
    %173 = arith.mulf %172, %171 : vector<5x256xf32>
    %174 = arith.negf %173 : vector<5x256xf32>
    %175 = math.exp %174 : vector<5x256xf32>
    %cst_70 = arith.constant 1.000000e+00 : f32
    %176 = vector.broadcast %cst_70 : f32 to vector<5x256xf32>
    %177 = arith.addf %176, %175 : vector<5x256xf32>
    %178 = arith.divf %176, %177 : vector<5x256xf32>
    %179 = arith.mulf %171, %178 : vector<5x256xf32>
    %180 = arith.truncf %179 : vector<5x256xf32> to vector<5x256xbf16>
    %c0_71 = arith.constant 0 : index
    %c0_72 = arith.constant 0 : index
    %c0_73 = arith.constant 0 : index
    %181 = vector.load %arg19[%c0_71, %c0_72, %c0_73] : memref<1x256x128xbf16, #tpu.memory_space<vmem>>, vector<1x256x128xbf16>
    %182 = vector.shape_cast %181 : vector<1x256x128xbf16> to vector<256x128xbf16>
    %cst_74 = arith.constant dense<0.000000e+00> : vector<5x128xf32>
    %183 = tpu.matmul %180, %182, %cst_74 {dimension_numbers = #tpu.dot_dimension_numbers<[1], [0], [0], [1], [0, 0, 1, 1], [], []>} : vector<5x256xbf16>, vector<256x128xbf16>, vector<5x128xf32> -> vector<5x128xf32>
    %c0_75 = arith.constant 0 : index
    %c0_76 = arith.constant 0 : index
    %c0_77 = arith.constant 0 : index
    %184 = vector.load %arg20[%c0_75, %c0_76, %c0_77] : memref<1x1x128xf32, #tpu.memory_space<vmem>>, vector<1x1x128xf32>
    %185 = vector.shape_cast %184 : vector<1x1x128xf32> to vector<1x128xf32>
    %186 = vector.broadcast %185 : vector<1x128xf32> to vector<5x128xf32>
    %187 = arith.addf %183, %186 : vector<5x128xf32>
    %188 = arith.addf %137, %187 : vector<5x128xf32>
    %c0_78 = arith.constant 0 : index
    %c0_79 = arith.constant 0 : index
    %189 = vector.load %arg23[%c0_78, %c0_79] : memref<5x128xf32, #tpu.memory_space<vmem>>, vector<5x128xf32>
    tpu.vector_store %arg23[%c0_78, %c0_79], %188 {strides = array<i32>} : memref<5x128xf32, #tpu.memory_space<vmem>>, vector<5x128xf32>,
    %c1_i32 = arith.constant 1 : i32
    %190 = arith.cmpi eq, %arg1, %c1_i32 : i32
    %191 = arith.extui %190 : i1 to i32
    %c0_i32_80 = arith.constant 0 : i32
    %192 = arith.cmpi ne, %191, %c0_i32_80 : i32
    scf.if %192 {
      %c0_81 = arith.constant 0 : index
      %c0_82 = arith.constant 0 : index
      %c0_83 = arith.constant 0 : index
      %193 = vector.load %arg21[%c0_81, %c0_82, %c0_83] : memref<1x5x128xf32, #tpu.memory_space<vmem>>, vector<1x5x128xf32>
      %194 = vector.shape_cast %193 : vector<1x5x128xf32> to vector<5x128xf32>
      %195 = vector.shape_cast %188 : vector<5x128xf32> to vector<1x5x128xf32>
      tpu.vector_store %arg21[%c0_81, %c0_82, %c0_83], %195 {strides = array<i32>} : memref<1x5x128xf32, #tpu.memory_space<vmem>>, vector<1x5x128xf32>,
      %196 = vector.extract_strided_slice %188 {offsets = [0, 0], sizes = [1, 128], strides = [1, 1]} : vector<5x128xf32> to vector<1x128xf32>
      %c0_84 = arith.constant 0 : index
      %c0_85 = arith.constant 0 : index
      %197 = vector.load %arg7[%c0_84, %c0_85] : memref<1x128xf32, #tpu.memory_space<vmem>>, vector<1x128xf32>
      %c0_86 = arith.constant 0 : index
      %c0_87 = arith.constant 0 : index
      %198 = vector.load %arg8[%c0_86, %c0_87] : memref<1x128xf32, #tpu.memory_space<vmem>>, vector<1x128xf32>
      %cst_88 = arith.constant dense<0.000000e+00> : vector<1xf32>
      %199 = vector.multi_reduction <add>, %196, %cst_88 [1] : vector<1x128xf32> to vector<1xf32>
      %200 = vector.shape_cast %199 : vector<1xf32> to vector<1x1xf32>
      %cst_89 = arith.constant 1.280000e+02 : f32
      %201 = vector.broadcast %cst_89 : f32 to vector<1x1xf32>
      %202 = arith.divf %200, %201 : vector<1x1xf32>
      %203 = vector.broadcast %202 : vector<1x1xf32> to vector<1x128xf32>
      %204 = arith.subf %196, %203 : vector<1x128xf32>
      %205 = arith.mulf %204, %204 : vector<1x128xf32>
      %cst_90 = arith.constant dense<0.000000e+00> : vector<1xf32>
      %206 = vector.multi_reduction <add>, %205, %cst_90 [1] : vector<1x128xf32> to vector<1xf32>
      %207 = vector.shape_cast %206 : vector<1xf32> to vector<1x1xf32>
      %cst_91 = arith.constant 1.280000e+02 : f32
      %208 = vector.broadcast %cst_91 : f32 to vector<1x1xf32>
      %209 = arith.divf %207, %208 : vector<1x1xf32>
      %210 = vector.broadcast %202 : vector<1x1xf32> to vector<1x128xf32>
      %211 = arith.subf %196, %210 : vector<1x128xf32>
      %cst_92 = arith.constant 9.99999974E-6 : f32
      %212 = vector.broadcast %cst_92 : f32 to vector<1x1xf32>
      %213 = arith.addf %209, %212 : vector<1x1xf32>
      %214 = math.rsqrt %213 : vector<1x1xf32>
      %215 = vector.broadcast %214 : vector<1x1xf32> to vector<1x128xf32>
      %216 = arith.mulf %211, %215 : vector<1x128xf32>
      %217 = arith.mulf %216, %197 : vector<1x128xf32>
      %218 = arith.addf %217, %198 : vector<1x128xf32>
      %c0_93 = arith.constant 0 : index
      %c0_94 = arith.constant 0 : index
      %c0_95 = arith.constant 0 : index
      %219 = vector.load %arg22[%c0_93, %c0_94, %c0_95] : memref<1x1x128xf32, #tpu.memory_space<vmem>>, vector<1x1x128xf32>
      %220 = vector.shape_cast %219 : vector<1x1x128xf32> to vector<1x128xf32>
      %221 = vector.shape_cast %218 : vector<1x128xf32> to vector<1x1x128xf32>
      tpu.vector_store %arg22[%c0_93, %c0_94, %c0_95], %221 {strides = array<i32>} : memref<1x1x128xf32, #tpu.memory_space<vmem>>, vector<1x1x128xf32>,
    } else {
    }
    return
  }
  func.func @transform_0(%arg0: i32, %arg1: i32) -> (i32, i32, i32) {
    %c0_i32 = arith.constant 0 : i32
    %c0_i32_0 = arith.constant 0 : i32
    %c0_i32_1 = arith.constant 0 : i32
    return %arg0, %c0_i32, %c0_i32_0 : i32, i32, i32
  }
  func.func @transform_1(%arg0: i32, %arg1: i32) -> (i32, i32) {
    %c0_i32 = arith.constant 0 : i32
    %c0_i32_0 = arith.constant 0 : i32
    %c0_i32_1 = arith.constant 0 : i32
    return %c0_i32, %c0_i32_0 : i32, i32
  }
  func.func @transform_2(%arg0: i32, %arg1: i32) -> (i32, i32) {
    %c0_i32 = arith.constant 0 : i32
    %c0_i32_0 = arith.constant 0 : i32
    %c0_i32_1 = arith.constant 0 : i32
    return %c0_i32, %c0_i32_0 : i32, i32
  }
  func.func @transform_3(%arg0: i32, %arg1: i32) -> (i32, i32) {
    %c0_i32 = arith.constant 0 : i32
    %c0_i32_0 = arith.constant 0 : i32
    %c0_i32_1 = arith.constant 0 : i32
    return %c0_i32, %c0_i32_0 : i32, i32
  }
  func.func @transform_4(%arg0: i32, %arg1: i32) -> (i32, i32) {
    %c0_i32 = arith.constant 0 : i32
    %c0_i32_0 = arith.constant 0 : i32
    %c0_i32_1 = arith.constant 0 : i32
    return %c0_i32, %c0_i32_0 : i32, i32
  }
  func.func @transform_5(%arg0: i32, %arg1: i32) -> (i32, i32) {
    %c0_i32 = arith.constant 0 : i32
    %c0_i32_0 = arith.constant 0 : i32
    %c0_i32_1 = arith.constant 0 : i32
    return %c0_i32, %c0_i32_0 : i32, i32
  }
  func.func @transform_6(%arg0: i32, %arg1: i32) -> (i32, i32) {
    %c0_i32 = arith.constant 0 : i32
    %c0_i32_0 = arith.constant 0 : i32
    %c0_i32_1 = arith.constant 0 : i32
    return %c0_i32, %c0_i32_0 : i32, i32
  }
  func.func @transform_7(%arg0: i32, %arg1: i32) -> (i32, i32, i32) {
    %c0_i32 = arith.constant 0 : i32
    %c0_i32_0 = arith.constant 0 : i32
    %c0_i32_1 = arith.constant 0 : i32
    return %arg1, %c0_i32, %c0_i32_0 : i32, i32, i32
  }
  func.func @transform_8(%arg0: i32, %arg1: i32) -> (i32, i32, i32) {
    %c0_i32 = arith.constant 0 : i32
    %c0_i32_0 = arith.constant 0 : i32
    %c0_i32_1 = arith.constant 0 : i32
    return %arg1, %c0_i32, %c0_i32_0 : i32, i32, i32
  }
  func.func @transform_9(%arg0: i32, %arg1: i32) -> (i32, i32, i32) {
    %c0_i32 = arith.constant 0 : i32
    %c0_i32_0 = arith.constant 0 : i32
    %c0_i32_1 = arith.constant 0 : i32
    return %arg1, %c0_i32, %c0_i32_0 : i32, i32, i32
  }
  func.func @transform_10(%arg0: i32, %arg1: i32) -> (i32, i32, i32) {
    %c0_i32 = arith.constant 0 : i32
    %c0_i32_0 = arith.constant 0 : i32
    %c0_i32_1 = arith.constant 0 : i32
    return %arg1, %c0_i32, %c0_i32_0 : i32, i32, i32
  }
  func.func @transform_11(%arg0: i32, %arg1: i32) -> (i32, i32, i32) {
    %c0_i32 = arith.constant 0 : i32
    %c0_i32_0 = arith.constant 0 : i32
    %c0_i32_1 = arith.constant 0 : i32
    return %arg1, %c0_i32, %c0_i32_0 : i32, i32, i32
  }
  func.func @transform_12(%arg0: i32, %arg1: i32) -> (i32, i32, i32) {
    %c0_i32 = arith.constant 0 : i32
    %c0_i32_0 = arith.constant 0 : i32
    %c0_i32_1 = arith.constant 0 : i32
    return %arg1, %c0_i32, %c0_i32_0 : i32, i32, i32
  }
  func.func @transform_13(%arg0: i32, %arg1: i32) -> (i32, i32, i32) {
    %c0_i32 = arith.constant 0 : i32
    %c0_i32_0 = arith.constant 0 : i32
    %c0_i32_1 = arith.constant 0 : i32
    return %arg1, %c0_i32, %c0_i32_0 : i32, i32, i32
  }
  func.func @transform_14(%arg0: i32, %arg1: i32) -> (i32, i32, i32) {
    %c0_i32 = arith.constant 0 : i32
    %c0_i32_0 = arith.constant 0 : i32
    %c0_i32_1 = arith.constant 0 : i32
    return %arg1, %c0_i32, %c0_i32_0 : i32, i32, i32
  }
  func.func @transform_15(%arg0: i32, %arg1: i32) -> (i32, i32, i32) {
    %c0_i32 = arith.constant 0 : i32
    %c0_i32_0 = arith.constant 0 : i32
    %c0_i32_1 = arith.constant 0 : i32
    return %arg1, %c0_i32, %c0_i32_0 : i32, i32, i32
  }
  func.func @transform_16(%arg0: i32, %arg1: i32) -> (i32, i32, i32) {
    %c0_i32 = arith.constant 0 : i32
    %c0_i32_0 = arith.constant 0 : i32
    %c0_i32_1 = arith.constant 0 : i32
    return %arg1, %c0_i32, %c0_i32_0 : i32, i32, i32
  }
  func.func @transform_17(%arg0: i32, %arg1: i32) -> (i32, i32, i32) {
    %c0_i32 = arith.constant 0 : i32
    %c0_i32_0 = arith.constant 0 : i32
    %c0_i32_1 = arith.constant 0 : i32
    return %arg1, %c0_i32, %c0_i32_0 : i32, i32, i32
  }
  func.func @transform_18(%arg0: i32, %arg1: i32) -> (i32, i32, i32) {
    %c0_i32 = arith.constant 0 : i32
    %c0_i32_0 = arith.constant 0 : i32
    %c0_i32_1 = arith.constant 0 : i32
    return %arg1, %c0_i32, %c0_i32_0 : i32, i32, i32
  }
  func.func @transform_19(%arg0: i32, %arg1: i32) -> (i32, i32, i32) {
    %c0_i32 = arith.constant 0 : i32
    %c0_i32_0 = arith.constant 0 : i32
    %c0_i32_1 = arith.constant 0 : i32
    return %arg0, %c0_i32, %c0_i32_0 : i32, i32, i32
  }
  func.func @transform_20(%arg0: i32, %arg1: i32) -> (i32, i32, i32) {
    %c0_i32 = arith.constant 0 : i32
    %c0_i32_0 = arith.constant 0 : i32
    %c0_i32_1 = arith.constant 0 : i32
    return %arg0, %c0_i32, %c0_i32_0 : i32, i32, i32
  }
}

</mosaic_0001>

<llo_original>
// kernel: clip_vision_forward.1
$region0: #{clip_vision_forward.1}
  #allocation0 [shape = 'u32[]', space=smem, size = 0x4, offset = 0x4, fixed_abs, tag = 'smem constant byte address 0x4 - core index']
  #allocation1 [shape = 'u32[144,128]{1,0:T(1,128)}', space=vmem, size = 0x12000, scoped, tag = 'internal scratch']
  #allocation2 [shape = 'f32[5,128]{1,0:T(8,128)}', space=vmem, size = 0x1000, scoped, tag = 'scratch operand']
  %s0 = inlined_call_operand.vmem [shape: f32[2,5,768], index: 0, kind: input, shape index: {}]
  %s1 = inlined_call_operand.vmem [shape: f32[768,128], index: 1, kind: input, shape index: {}]
  %s2 = inlined_call_operand.vmem [shape: f32[5,128], index: 2, kind: input, shape index: {}]
  %s3 = inlined_call_operand.vmem [shape: f32[1,128], index: 3, kind: input, shape index: {}]
  %s4 = inlined_call_operand.vmem [shape: f32[1,128], index: 4, kind: input, shape index: {}]
  %s5 = inlined_call_operand.vmem [shape: f32[1,128], index: 5, kind: input, shape index: {}]
  %s6 = inlined_call_operand.vmem [shape: f32[1,128], index: 6, kind: input, shape index: {}]
  %s7 = inlined_call_operand.vmem [shape: f32[2,1,128], index: 7, kind: input, shape index: {}]
  %s8 = inlined_call_operand.vmem [shape: f32[2,1,128], index: 8, kind: input, shape index: {}]
  %s9 = inlined_call_operand.vmem [shape: bf16[2,128,384], index: 9, kind: input, shape index: {}]
  %s10 = inlined_call_operand.vmem [shape: f32[2,1,384], index: 10, kind: input, shape index: {}]
  %s11 = inlined_call_operand.vmem [shape: bf16[2,128,128], index: 11, kind: input, shape index: {}]
  %s12 = inlined_call_operand.vmem [shape: f32[2,1,128], index: 12, kind: input, shape index: {}]
  %s13 = inlined_call_operand.vmem [shape: f32[2,1,128], index: 13, kind: input, shape index: {}]
  %s14 = inlined_call_operand.vmem [shape: f32[2,1,128], index: 14, kind: input, shape index: {}]
  %s15 = inlined_call_operand.vmem [shape: bf16[2,128,256], index: 15, kind: input, shape index: {}]
  %s16 = inlined_call_operand.vmem [shape: f32[2,1,256], index: 16, kind: input, shape index: {}]
  %s17 = inlined_call_operand.vmem [shape: bf16[2,256,128], index: 17, kind: input, shape index: {}]
  %s18 = inlined_call_operand.vmem [shape: f32[2,1,128], index: 18, kind: input, shape index: {}]
  %s19 = inlined_call_operand.vmem [shape: f32[2,5,128], index: 19, kind: output, shape index: {0}]
  %s20 = inlined_call_operand.hbm [shape: f32[2,1,128], index: 20, kind: output, shape index: {1}]
  %21 = xla_tuple %s19, %s20
  %s22 = sld [smem:[#allocation0]]
  $region125: #{clip_vision_forward.1} parent=0
    _
  %s24 = ssub.s32 1, %s22
  %s25 = scalar_select 0, %s24, %s22
  $region1: #{clip_vision_forward.1} parent=0
    #allocation3 [shape = 'u8[1024]{0}', space=vmem, size = 0x400, scoped, tag = 'output window, operand 1']
    #allocation4 [shape = 's32[2]{0}', space=sflag, size = 0x8, scoped, tag = 'scoped memory for clip_vision_forward.1']
    %26 = vsyncpa [#allocation4], 0
    %s27 = scalar_lea.sflag [#allocation4], 1
    %28 = vsyncpa %s27, 0
    loop: start=0, step=1, limit=6
    $region2: #{clip_vision_forward.1} parent=1 // loop_pre_header
      _
    $region3: #{clip_vision_forward.1} parent=1 // loop_header
      %s30 = sphi 0, %s34
      %p31 = scmp.ge.s32.totalorder %s30, 6
      %s37 = sphi 0, %s49
      %s38 = sphi 0, %s45
      %s39 = sphi 0, %s37
      %s40 = sphi 0, %s38
      %s41 = sphi 0, %s39
      %s42 = sphi 0, %s40
      %s52 = sphi 0, %s54
      %s55 = sphi 0, %s52
      %s56 = sphi 0, %s55
      %s72 = sphi 0, %s56
      %s76 = sphi 0, %s76
      %s78 = sphi 0, %s76
      %s79 = sphi 0, %s78
      %s93 = sphi 0, %s79
      %s97 = sphi 0, %s97
      %s99 = sphi 0, %s97
      %s100 = sphi 0, %s99
      %s114 = sphi 0, %s100
      %s118 = sphi 0, %s118
      %s120 = sphi 0, %s118
      %s121 = sphi 0, %s120
      %s135 = sphi 0, %s121
      %s139 = sphi 0, %s139
      %s141 = sphi 0, %s139
      %s142 = sphi 0, %s141
      %s156 = sphi 0, %s142
      %s160 = sphi 0, %s160
      %s162 = sphi 0, %s160
      %s163 = sphi 0, %s162
      %s177 = sphi 0, %s163
      %s181 = sphi 0, %s181
      %s183 = sphi 0, %s181
      %s184 = sphi 0, %s183
      %s198 = sphi 0, %s184
      %s204 = sphi 0, %s206
      %s207 = sphi 0, %s204
      %s208 = sphi 0, %s207
      %s224 = sphi 0, %s208
      %s230 = sphi 0, %s232
      %s233 = sphi 0, %s230
      %s234 = sphi 0, %s233
      %s250 = sphi 0, %s234
      %s256 = sphi 0, %s258
      %s259 = sphi 0, %s256
      %s260 = sphi 0, %s259
      %s276 = sphi 0, %s260
      %s282 = sphi 0, %s284
      %s285 = sphi 0, %s282
      %s286 = sphi 0, %s285
      %s302 = sphi 0, %s286
      %s308 = sphi 0, %s310
      %s311 = sphi 0, %s308
      %s312 = sphi 0, %s311
      %s328 = sphi 0, %s312
      %s334 = sphi 0, %s336
      %s337 = sphi 0, %s334
      %s338 = sphi 0, %s337
      %s354 = sphi 0, %s338
      %s360 = sphi 0, %s362
      %s363 = sphi 0, %s360
      %s364 = sphi 0, %s363
      %s380 = sphi 0, %s364
      %s386 = sphi 0, %s388
      %s389 = sphi 0, %s386
      %s390 = sphi 0, %s389
      %s406 = sphi 0, %s390
      %s412 = sphi 0, %s414
      %s415 = sphi 0, %s412
      %s416 = sphi 0, %s415
      %s432 = sphi 0, %s416
      %s438 = sphi 0, %s440
      %s441 = sphi 0, %s438
      %s442 = sphi 0, %s441
      %s458 = sphi 0, %s442
      %s464 = sphi 0, %s466
      %s467 = sphi 0, %s464
      %s468 = sphi 0, %s467
      %s484 = sphi 0, %s468
      %s490 = sphi 0, %s492
      %s493 = sphi 0, %s490
      %s494 = sphi 0, %s493
      %s510 = sphi 0, %s494
      %s516 = sphi 0, %s518
      %s519 = sphi 0, %s516
      %s520 = sphi 0, %s519
      %s536 = sphi 0, %s520
      %s542 = sphi 0, %s544
      %s545 = sphi 0, %s542
      %s546 = sphi 0, %s545
      %s562 = sphi 0, %s546
    $region4: #{clip_vision_forward.1} parent=1 // loop_header_branch
      %33 = sbr.rel (%p31) target = $region8
    $region5: #{clip_vision_forward.1} parent=1 // loop_body
      %s35 = ssub.s32 %s30, 1
      %s36 = ssub.s32 %s30, 2
      %s43 = sadd.s32 1, %s38
      %p44 = scmp.ge.s32.totalorder %s43, 2
      %s45 = scalar_select %p44, 0, %s43
      %s46 = sadd.s32 1, %s37
      %s47 = scalar_select %p44, %s46, %s37
      %p48 = scmp.ge.s32.totalorder %s47, 2
      %s49 = scalar_select %p48, 0, %s47
      %s50 = ssub.s32 %s37, %s49
      %p51 = scmp.eq.s32.totalorder %s50, 0
      %s53 = sadd.s32 %s52, 1
      %s54 = scalar_select %p51, %s52, %s53
      %p57 = pneg %p51
      %p58 = scmp.eq.s32.totalorder %s30, 3
      %p59 = por %p57, %p58
      %p60 = scmp.ne.s32.totalorder %s52, %s55
      %p61 = scmp.eq.s32.totalorder %s30, 0
      %p62 = por %p60, %p61
      %p63 = scmp.ne.s32.totalorder %s52, %s55
      %p64 = scmp.eq.s32.totalorder %s35, 3
      %p65 = por %p63, %p64
      %p66 = scmp.ne.s32.totalorder %s55, %s56
      %p67 = scmp.eq.s32.totalorder %s35, 0
      %p68 = por %p66, %p67
      %p69 = scmp.ne.s32.totalorder %s55, %s56
      %p70 = scmp.eq.s32.totalorder %s36, 3
      %p71 = por %p69, %p70
      %p73 = scmp.ne.s32.totalorder %s56, %s72
      %p74 = scmp.eq.s32.totalorder %s36, 0
      %p75 = por %p73, %p74
      %s77 = sadd.s32 %s76, 1
      %p80 = scmp.eq.s32.totalorder %s30, 3
      %p81 = scmp.ne.s32.totalorder %s76, %s78
      %p82 = scmp.eq.s32.totalorder %s30, 0
      %p83 = por %p81, %p82
      %p84 = scmp.ne.s32.totalorder %s76, %s78
      %p85 = scmp.eq.s32.totalorder %s35, 3
      %p86 = por %p84, %p85
      %p87 = scmp.ne.s32.totalorder %s78, %s79
      %p88 = scmp.eq.s32.totalorder %s35, 0
      %p89 = por %p87, %p88
      %p90 = scmp.ne.s32.totalorder %s78, %s79
      %p91 = scmp.eq.s32.totalorder %s36, 3
      %p92 = por %p90, %p91
      %p94 = scmp.ne.s32.totalorder %s79, %s93
      %p95 = scmp.eq.s32.totalorder %s36, 0
      %p96 = por %p94, %p95
      %s98 = sadd.s32 %s97, 1
      %p101 = scmp.eq.s32.totalorder %s30, 3
      %p102 = scmp.ne.s32.totalorder %s97, %s99
      %p103 = scmp.eq.s32.totalorder %s30, 0
      %p104 = por %p102, %p103
      %p105 = scmp.ne.s32.totalorder %s97, %s99
      %p106 = scmp.eq.s32.totalorder %s35, 3
      %p107 = por %p105, %p106
      %p108 = scmp.ne.s32.totalorder %s99, %s100
      %p109 = scmp.eq.s32.totalorder %s35, 0
      %p110 = por %p108, %p109
      %p111 = scmp.ne.s32.totalorder %s99, %s100
      %p112 = scmp.eq.s32.totalorder %s36, 3
      %p113 = por %p111, %p112
      %p115 = scmp.ne.s32.totalorder %s100, %s114
      %p116 = scmp.eq.s32.totalorder %s36, 0
      %p117 = por %p115, %p116
      %s119 = sadd.s32 %s118, 1
      %p122 = scmp.eq.s32.totalorder %s30, 3
      %p123 = scmp.ne.s32.totalorder %s118, %s120
      %p124 = scmp.eq.s32.totalorder %s30, 0
      %p125 = por %p123, %p124
      %p126 = scmp.ne.s32.totalorder %s118, %s120
      %p127 = scmp.eq.s32.totalorder %s35, 3
      %p128 = por %p126, %p127
      %p129 = scmp.ne.s32.totalorder %s120, %s121
      %p130 = scmp.eq.s32.totalorder %s35, 0
      %p131 = por %p129, %p130
      %p132 = scmp.ne.s32.totalorder %s120, %s121
      %p133 = scmp.eq.s32.totalorder %s36, 3
      %p134 = por %p132, %p133
      %p136 = scmp.ne.s32.totalorder %s121, %s135
      %p137 = scmp.eq.s32.totalorder %s36, 0
      %p138 = por %p136, %p137
      %s140 = sadd.s32 %s139, 1
      %p143 = scmp.eq.s32.totalorder %s30, 3
      %p144 = scmp.ne.s32.totalorder %s139, %s141
      %p145 = scmp.eq.s32.totalorder %s30, 0
      %p146 = por %p144, %p145
      %p147 = scmp.ne.s32.totalorder %s139, %s141
      %p148 = scmp.eq.s32.totalorder %s35, 3
      %p149 = por %p147, %p148
      %p150 = scmp.ne.s32.totalorder %s141, %s142
      %p151 = scmp.eq.s32.totalorder %s35, 0
      %p152 = por %p150, %p151
      %p153 = scmp.ne.s32.totalorder %s141, %s142
      %p154 = scmp.eq.s32.totalorder %s36, 3
      %p155 = por %p153, %p154
      %p157 = scmp.ne.s32.totalorder %s142, %s156
      %p158 = scmp.eq.s32.totalorder %s36, 0
      %p159 = por %p157, %p158
      %s161 = sadd.s32 %s160, 1
      %p164 = scmp.eq.s32.totalorder %s30, 3
      %p165 = scmp.ne.s32.totalorder %s160, %s162
      %p166 = scmp.eq.s32.totalorder %s30, 0
      %p167 = por %p165, %p166
      %p168 = scmp.ne.s32.totalorder %s160, %s162
      %p169 = scmp.eq.s32.totalorder %s35, 3
      %p170 = por %p168, %p169
      %p171 = scmp.ne.s32.totalorder %s162, %s163
      %p172 = scmp.eq.s32.totalorder %s35, 0
      %p173 = por %p171, %p172
      %p174 = scmp.ne.s32.totalorder %s162, %s163
      %p175 = scmp.eq.s32.totalorder %s36, 3
      %p176 = por %p174, %p175
      %p178 = scmp.ne.s32.totalorder %s163, %s177
      %p179 = scmp.eq.s32.totalorder %s36, 0
      %p180 = por %p178, %p179
      %s182 = sadd.s32 %s181, 1
      %p185 = scmp.eq.s32.totalorder %s30, 3
      %p186 = scmp.ne.s32.totalorder %s181, %s183
      %p187 = scmp.eq.s32.totalorder %s30, 0
      %p188 = por %p186, %p187
      %p189 = scmp.ne.s32.totalorder %s181, %s183
      %p190 = scmp.eq.s32.totalorder %s35, 3
      %p191 = por %p189, %p190
      %p192 = scmp.ne.s32.totalorder %s183, %s184
      %p193 = scmp.eq.s32.totalorder %s35, 0
      %p194 = por %p192, %p193
      %p195 = scmp.ne.s32.totalorder %s183, %s184
      %p196 = scmp.eq.s32.totalorder %s36, 3
      %p197 = por %p195, %p196
      %p199 = scmp.ne.s32.totalorder %s184, %s198
      %p200 = scmp.eq.s32.totalorder %s36, 0
      %p201 = por %p199, %p200
      %s202 = ssub.s32 %s38, %s45
      %p203 = scmp.eq.s32.totalorder %s202, 0
      %s205 = sadd.s32 %s204, 1
      %s206 = scalar_select %p203, %s204, %s205
      %p209 = pneg %p203
      %p210 = scmp.eq.s32.totalorder %s30, 3
      %p211 = por %p209, %p210
      %p212 = scmp.ne.s32.totalorder %s204, %s207
      %p213 = scmp.eq.s32.totalorder %s30, 0
      %p214 = por %p212, %p213
      %p215 = scmp.ne.s32.totalorder %s204, %s207
      %p216 = scmp.eq.s32.totalorder %s35, 3
      %p217 = por %p215, %p216
      %p218 = scmp.ne.s32.totalorder %s207, %s208
      %p219 = scmp.eq.s32.totalorder %s35, 0
      %p220 = por %p218, %p219
      %p221 = scmp.ne.s32.totalorder %s207, %s208
      %p222 = scmp.eq.s32.totalorder %s36, 3
      %p223 = por %p221, %p222
      %p225 = scmp.ne.s32.totalorder %s208, %s224
      %p226 = scmp.eq.s32.totalorder %s36, 0
      %p227 = por %p225, %p226
      %s228 = ssub.s32 %s38, %s45
      %p229 = scmp.eq.s32.totalorder %s228, 0
      %s231 = sadd.s32 %s230, 1
      %s232 = scalar_select %p229, %s230, %s231
      %p235 = pneg %p229
      %p236 = scmp.eq.s32.totalorder %s30, 3
      %p237 = por %p235, %p236
      %p238 = scmp.ne.s32.totalorder %s230, %s233
      %p239 = scmp.eq.s32.totalorder %s30, 0
      %p240 = por %p238, %p239
      %p241 = scmp.ne.s32.totalorder %s230, %s233
      %p242 = scmp.eq.s32.totalorder %s35, 3
      %p243 = por %p241, %p242
      %p244 = scmp.ne.s32.totalorder %s233, %s234
      %p245 = scmp.eq.s32.totalorder %s35, 0
      %p246 = por %p244, %p245
      %p247 = scmp.ne.s32.totalorder %s233, %s234
      %p248 = scmp.eq.s32.totalorder %s36, 3
      %p249 = por %p247, %p248
      %p251 = scmp.ne.s32.totalorder %s234, %s250
      %p252 = scmp.eq.s32.totalorder %s36, 0
      %p253 = por %p251, %p252
      %s254 = ssub.s32 %s38, %s45
      %p255 = scmp.eq.s32.totalorder %s254, 0
      %s257 = sadd.s32 %s256, 1
      %s258 = scalar_select %p255, %s256, %s257
      %p261 = pneg %p255
      %p262 = scmp.eq.s32.totalorder %s30, 3
      %p263 = por %p261, %p262
      %p264 = scmp.ne.s32.totalorder %s256, %s259
      %p265 = scmp.eq.s32.totalorder %s30, 0
      %p266 = por %p264, %p265
      %p267 = scmp.ne.s32.totalorder %s256, %s259
      %p268 = scmp.eq.s32.totalorder %s35, 3
      %p269 = por %p267, %p268
      %p270 = scmp.ne.s32.totalorder %s259, %s260
      %p271 = scmp.eq.s32.totalorder %s35, 0
      %p272 = por %p270, %p271
      %p273 = scmp.ne.s32.totalorder %s259, %s260
      %p274 = scmp.eq.s32.totalorder %s36, 3
      %p275 = por %p273, %p274
      %p277 = scmp.ne.s32.totalorder %s260, %s276
      %p278 = scmp.eq.s32.totalorder %s36, 0
      %p279 = por %p277, %p278
      %s280 = ssub.s32 %s38, %s45
      %p281 = scmp.eq.s32.totalorder %s280, 0
      %s283 = sadd.s32 %s282, 1
      %s284 = scalar_select %p281, %s282, %s283
      %p287 = pneg %p281
      %p288 = scmp.eq.s32.totalorder %s30, 3
      %p289 = por %p287, %p288
      %p290 = scmp.ne.s32.totalorder %s282, %s285
      %p291 = scmp.eq.s32.totalorder %s30, 0
      %p292 = por %p290, %p291
      %p293 = scmp.ne.s32.totalorder %s282, %s285
      %p294 = scmp.eq.s32.totalorder %s35, 3
      %p295 = por %p293, %p294
      %p296 = scmp.ne.s32.totalorder %s285, %s286
      %p297 = scmp.eq.s32.totalorder %s35, 0
      %p298 = por %p296, %p297
      %p299 = scmp.ne.s32.totalorder %s285, %s286
      %p300 = scmp.eq.s32.totalorder %s36, 3
      %p301 = por %p299, %p300
      %p303 = scmp.ne.s32.totalorder %s286, %s302
      %p304 = scmp.eq.s32.totalorder %s36, 0
      %p305 = por %p303, %p304
      %s306 = ssub.s32 %s38, %s45
      %p307 = scmp.eq.s32.totalorder %s306, 0
      %s309 = sadd.s32 %s308, 1
      %s310 = scalar_select %p307, %s308, %s309
      %p313 = pneg %p307
      %p314 = scmp.eq.s32.totalorder %s30, 3
      %p315 = por %p313, %p314
      %p316 = scmp.ne.s32.totalorder %s308, %s311
      %p317 = scmp.eq.s32.totalorder %s30, 0
      %p318 = por %p316, %p317
      %p319 = scmp.ne.s32.totalorder %s308, %s311
      %p320 = scmp.eq.s32.totalorder %s35, 3
      %p321 = por %p319, %p320
      %p322 = scmp.ne.s32.totalorder %s311, %s312
      %p323 = scmp.eq.s32.totalorder %s35, 0
      %p324 = por %p322, %p323
      %p325 = scmp.ne.s32.totalorder %s311, %s312
      %p326 = scmp.eq.s32.totalorder %s36, 3
      %p327 = por %p325, %p326
      %p329 = scmp.ne.s32.totalorder %s312, %s328
      %p330 = scmp.eq.s32.totalorder %s36, 0
      %p331 = por %p329, %p330
      %s332 = ssub.s32 %s38, %s45
      %p333 = scmp.eq.s32.totalorder %s332, 0
      %s335 = sadd.s32 %s334, 1
      %s336 = scalar_select %p333, %s334, %s335
      %p339 = pneg %p333
      %p340 = scmp.eq.s32.totalorder %s30, 3
      %p341 = por %p339, %p340
      %p342 = scmp.ne.s32.totalorder %s334, %s337
      %p343 = scmp.eq.s32.totalorder %s30, 0
      %p344 = por %p342, %p343
      %p345 = scmp.ne.s32.totalorder %s334, %s337
      %p346 = scmp.eq.s32.totalorder %s35, 3
      %p347 = por %p345, %p346
      %p348 = scmp.ne.s32.totalorder %s337, %s338
      %p349 = scmp.eq.s32.totalorder %s35, 0
      %p350 = por %p348, %p349
      %p351 = scmp.ne.s32.totalorder %s337, %s338
      %p352 = scmp.eq.s32.totalorder %s36, 3
      %p353 = por %p351, %p352
      %p355 = scmp.ne.s32.totalorder %s338, %s354
      %p356 = scmp.eq.s32.totalorder %s36, 0
      %p357 = por %p355, %p356
      %s358 = ssub.s32 %s38, %s45
      %p359 = scmp.eq.s32.totalorder %s358, 0
      %s361 = sadd.s32 %s360, 1
      %s362 = scalar_select %p359, %s360, %s361
      %p365 = pneg %p359
      %p366 = scmp.eq.s32.totalorder %s30, 3
      %p367 = por %p365, %p366
      %p368 = scmp.ne.s32.totalorder %s360, %s363
      %p369 = scmp.eq.s32.totalorder %s30, 0
      %p370 = por %p368, %p369
      %p371 = scmp.ne.s32.totalorder %s360, %s363
      %p372 = scmp.eq.s32.totalorder %s35, 3
      %p373 = por %p371, %p372
      %p374 = scmp.ne.s32.totalorder %s363, %s364
      %p375 = scmp.eq.s32.totalorder %s35, 0
      %p376 = por %p374, %p375
      %p377 = scmp.ne.s32.totalorder %s363, %s364
      %p378 = scmp.eq.s32.totalorder %s36, 3
      %p379 = por %p377, %p378
      %p381 = scmp.ne.s32.totalorder %s364, %s380
      %p382 = scmp.eq.s32.totalorder %s36, 0
      %p383 = por %p381, %p382
      %s384 = ssub.s32 %s38, %s45
      %p385 = scmp.eq.s32.totalorder %s384, 0
      %s387 = sadd.s32 %s386, 1
      %s388 = scalar_select %p385, %s386, %s387
      %p391 = pneg %p385
      %p392 = scmp.eq.s32.totalorder %s30, 3
      %p393 = por %p391, %p392
      %p394 = scmp.ne.s32.totalorder %s386, %s389
      %p395 = scmp.eq.s32.totalorder %s30, 0
      %p396 = por %p394, %p395
      %p397 = scmp.ne.s32.totalorder %s386, %s389
      %p398 = scmp.eq.s32.totalorder %s35, 3
      %p399 = por %p397, %p398
      %p400 = scmp.ne.s32.totalorder %s389, %s390
      %p401 = scmp.eq.s32.totalorder %s35, 0
      %p402 = por %p400, %p401
      %p403 = scmp.ne.s32.totalorder %s389, %s390
      %p404 = scmp.eq.s32.totalorder %s36, 3
      %p405 = por %p403, %p404
      %p407 = scmp.ne.s32.totalorder %s390, %s406
      %p408 = scmp.eq.s32.totalorder %s36, 0
      %p409 = por %p407, %p408
      %s410 = ssub.s32 %s38, %s45
      %p411 = scmp.eq.s32.totalorder %s410, 0
      %s413 = sadd.s32 %s412, 1
      %s414 = scalar_select %p411, %s412, %s413
      %p417 = pneg %p411
      %p418 = scmp.eq.s32.totalorder %s30, 3
      %p419 = por %p417, %p418
      %p420 = scmp.ne.s32.totalorder %s412, %s415
      %p421 = scmp.eq.s32.totalorder %s30, 0
      %p422 = por %p420, %p421
      %p423 = scmp.ne.s32.totalorder %s412, %s415
      %p424 = scmp.eq.s32.totalorder %s35, 3
      %p425 = por %p423, %p424
      %p426 = scmp.ne.s32.totalorder %s415, %s416
      %p427 = scmp.eq.s32.totalorder %s35, 0
      %p428 = por %p426, %p427
      %p429 = scmp.ne.s32.totalorder %s415, %s416
      %p430 = scmp.eq.s32.totalorder %s36, 3
      %p431 = por %p429, %p430
      %p433 = scmp.ne.s32.totalorder %s416, %s432
      %p434 = scmp.eq.s32.totalorder %s36, 0
      %p435 = por %p433, %p434
      %s436 = ssub.s32 %s38, %s45
      %p437 = scmp.eq.s32.totalorder %s436, 0
      %s439 = sadd.s32 %s438, 1
      %s440 = scalar_select %p437, %s438, %s439
      %p443 = pneg %p437
      %p444 = scmp.eq.s32.totalorder %s30, 3
      %p445 = por %p443, %p444
      %p446 = scmp.ne.s32.totalorder %s438, %s441
      %p447 = scmp.eq.s32.totalorder %s30, 0
      %p448 = por %p446, %p447
      %p449 = scmp.ne.s32.totalorder %s438, %s441
      %p450 = scmp.eq.s32.totalorder %s35, 3
      %p451 = por %p449, %p450
      %p452 = scmp.ne.s32.totalorder %s441, %s442
      %p453 = scmp.eq.s32.totalorder %s35, 0
      %p454 = por %p452, %p453
      %p455 = scmp.ne.s32.totalorder %s441, %s442
      %p456 = scmp.eq.s32.totalorder %s36, 3
      %p457 = por %p455, %p456
      %p459 = scmp.ne.s32.totalorder %s442, %s458
      %p460 = scmp.eq.s32.totalorder %s36, 0
      %p461 = por %p459, %p460
      %s462 = ssub.s32 %s38, %s45
      %p463 = scmp.eq.s32.totalorder %s462, 0
      %s465 = sadd.s32 %s464, 1
      %s466 = scalar_select %p463, %s464, %s465
      %p469 = pneg %p463
      %p470 = scmp.eq.s32.totalorder %s30, 3
      %p471 = por %p469, %p470
      %p472 = scmp.ne.s32.totalorder %s464, %s467
      %p473 = scmp.eq.s32.totalorder %s30, 0
      %p474 = por %p472, %p473
      %p475 = scmp.ne.s32.totalorder %s464, %s467
      %p476 = scmp.eq.s32.totalorder %s35, 3
      %p477 = por %p475, %p476
      %p478 = scmp.ne.s32.totalorder %s467, %s468
      %p479 = scmp.eq.s32.totalorder %s35, 0
      %p480 = por %p478, %p479
      %p481 = scmp.ne.s32.totalorder %s467, %s468
      %p482 = scmp.eq.s32.totalorder %s36, 3
      %p483 = por %p481, %p482
      %p485 = scmp.ne.s32.totalorder %s468, %s484
      %p486 = scmp.eq.s32.totalorder %s36, 0
      %p487 = por %p485, %p486
      %s488 = ssub.s32 %s38, %s45
      %p489 = scmp.eq.s32.totalorder %s488, 0
      %s491 = sadd.s32 %s490, 1
      %s492 = scalar_select %p489, %s490, %s491
      %p495 = pneg %p489
      %p496 = scmp.eq.s32.totalorder %s30, 3
      %p497 = por %p495, %p496
      %p498 = scmp.ne.s32.totalorder %s490, %s493
      %p499 = scmp.eq.s32.totalorder %s30, 0
      %p500 = por %p498, %p499
      %p501 = scmp.ne.s32.totalorder %s490, %s493
      %p502 = scmp.eq.s32.totalorder %s35, 3
      %p503 = por %p501, %p502
      %p504 = scmp.ne.s32.totalorder %s493, %s494
      %p505 = scmp.eq.s32.totalorder %s35, 0
      %p506 = por %p504, %p505
      %p507 = scmp.ne.s32.totalorder %s493, %s494
      %p508 = scmp.eq.s32.totalorder %s36, 3
      %p509 = por %p507, %p508
      %p511 = scmp.ne.s32.totalorder %s494, %s510
      %p512 = scmp.eq.s32.totalorder %s36, 0
      %p513 = por %p511, %p512
      %s514 = ssub.s32 %s37, %s49
      %p515 = scmp.eq.s32.totalorder %s514, 0
      %s517 = sadd.s32 %s516, 1
      %s518 = scalar_select %p515, %s516, %s517
      %p521 = pneg %p515
      %p522 = scmp.eq.s32.totalorder %s30, 3
      %p523 = por %p521, %p522
      %p524 = scmp.ne.s32.totalorder %s516, %s519
      %p525 = scmp.eq.s32.totalorder %s30, 0
      %p526 = por %p524, %p525
      %p527 = scmp.ne.s32.totalorder %s516, %s519
      %p528 = scmp.eq.s32.totalorder %s35, 3
      %p529 = por %p527, %p528
      %p530 = scmp.ne.s32.totalorder %s519, %s520
      %p531 = scmp.eq.s32.totalorder %s35, 0
      %p532 = por %p530, %p531
      %p533 = scmp.ne.s32.totalorder %s519, %s520
      %p534 = scmp.eq.s32.totalorder %s36, 3
      %p535 = por %p533, %p534
      %p537 = scmp.ne.s32.totalorder %s520, %s536
      %p538 = scmp.eq.s32.totalorder %s36, 0
      %p539 = por %p537, %p538
      %s540 = ssub.s32 %s37, %s49
      %p541 = scmp.eq.s32.totalorder %s540, 0
      %s543 = sadd.s32 %s542, 1
      %s544 = scalar_select %p541, %s542, %s543
      %p547 = pneg %p541
      %p548 = scmp.eq.s32.totalorder %s30, 3
      %p549 = por %p547, %p548
      %p550 = scmp.ne.s32.totalorder %s542, %s545
      %p551 = scmp.eq.s32.totalorder %s30, 0
      %p552 = por %p550, %p551
      %p553 = scmp.ne.s32.totalorder %s542, %s545
      %p554 = scmp.eq.s32.totalorder %s35, 3
      %p555 = por %p553, %p554
      %p556 = scmp.ne.s32.totalorder %s545, %s546
      %p557 = scmp.eq.s32.totalorder %s35, 0
      %p558 = por %p556, %p557
      %p559 = scmp.ne.s32.totalorder %s545, %s546
      %p560 = scmp.eq.s32.totalorder %s36, 3
      %p561 = por %p559, %p560
      %p563 = scmp.ne.s32.totalorder %s546, %s562
      %p564 = scmp.eq.s32.totalorder %s36, 0
      %p565 = por %p563, %p564
      %p566 = scmp.le.s32.totalorder 1, %s30
      %p567 = scmp.lt.s32.totalorder %s30, 5
      %p568 = pnand %p566, %p567
      %p569 = pneg %p568
      // Predicated region
      $region9: #{clip_vision_forward.1} parent=5 // pred_check
        _
      $region10: #{clip_vision_forward.1} parent=5 // pred_check_branch
        %571 = sbr.rel (%p568) target = $region12
      $region11: #{clip_vision_forward.1} parent=5 // pred_region
        %s572 = ssub.s32 %s30, 1
        // Predicated region
        $region13: #{clip_vision_forward.1} parent=11 // pred_check
          %p573 = pneg %p89
        $region14: #{clip_vision_forward.1} parent=11 // pred_check_branch
          %575 = sbr.rel (%p573) target = $region16
        $region15: #{clip_vision_forward.1} parent=11 // pred_region
          _
        $region16: #{clip_vision_forward.1} parent=11 // pred_fallthru
          _
        // Predicated region
        $region17: #{clip_vision_forward.1} parent=11 // pred_check
          %p576 = pneg %p110
        $region18: #{clip_vision_forward.1} parent=11 // pred_check_branch
          %578 = sbr.rel (%p576) target = $region20
        $region19: #{clip_vision_forward.1} parent=11 // pred_region
          _
        $region20: #{clip_vision_forward.1} parent=11 // pred_fallthru
          _
        // Predicated region
        $region21: #{clip_vision_forward.1} parent=11 // pred_check
          %p579 = pneg %p131
        $region22: #{clip_vision_forward.1} parent=11 // pred_check_branch
          %581 = sbr.rel (%p579) target = $region24
        $region23: #{clip_vision_forward.1} parent=11 // pred_region
          _
        $region24: #{clip_vision_forward.1} parent=11 // pred_fallthru
          _
        // Predicated region
        $region25: #{clip_vision_forward.1} parent=11 // pred_check
          %p582 = pneg %p152
        $region26: #{clip_vision_forward.1} parent=11 // pred_check_branch
          %584 = sbr.rel (%p582) target = $region28
        $region27: #{clip_vision_forward.1} parent=11 // pred_region
          _
        $region28: #{clip_vision_forward.1} parent=11 // pred_fallthru
          _
        // Predicated region
        $region29: #{clip_vision_forward.1} parent=11 // pred_check
          %p585 = pneg %p173
        $region30: #{clip_vision_forward.1} parent=11 // pred_check_branch
          %587 = sbr.rel (%p585) target = $region32
        $region31: #{clip_vision_forward.1} parent=11 // pred_region
          _
        $region32: #{clip_vision_forward.1} parent=11 // pred_fallthru
          _
        // Predicated region
        $region33: #{clip_vision_forward.1} parent=11 // pred_check
          %p588 = pneg %p194
        $region34: #{clip_vision_forward.1} parent=11 // pred_check_branch
          %590 = sbr.rel (%p588) target = $region36
        $region35: #{clip_vision_forward.1} parent=11 // pred_region
          _
        $region36: #{clip_vision_forward.1} parent=11 // pred_fallthru
          _
      $region12: #{clip_vision_forward.1} parent=5 // pred_fallthru
        _
      %p591 = scmp.lt.s32.totalorder %s30, 4
      // Predicated region
      $region37: #{clip_vision_forward.1} parent=5 // pred_check
        %p592 = pneg %p591
      $region38: #{clip_vision_forward.1} parent=5 // pred_check_branch
        %594 = sbr.rel (%p592) target = $region40
      $region39: #{clip_vision_forward.1} parent=5 // pred_region
        // Predicated region
        $region41: #{clip_vision_forward.1} parent=39 // pred_check
          %p595 = pneg %p62
        $region42: #{clip_vision_forward.1} parent=39 // pred_check_branch
          %597 = sbr.rel (%p595) target = $region44
        $region43: #{clip_vision_forward.1} parent=39 // pred_region
          %p598 = scmp.lt.s32.totalorder %s37, 1
          %s599 = scalar_select %p598, %s37, 1
          %s600 = smul.addr %s599, 6
          %s601 = smul.addr %s600, 8
          %s602 = scalar_lea.vmem %s0, %s601
        $region44: #{clip_vision_forward.1} parent=39 // pred_fallthru
          _
        // Predicated region
        $region45: #{clip_vision_forward.1} parent=39 // pred_check
          %p603 = pneg %p214
        $region46: #{clip_vision_forward.1} parent=39 // pred_check_branch
          %605 = sbr.rel (%p603) target = $region48
        $region47: #{clip_vision_forward.1} parent=39 // pred_region
          %p606 = scmp.lt.s32.totalorder %s38, 1
          %s607 = scalar_select %p606, %s38, 1
          %s608 = scalar_lea.vmem %s7, %s607
        $region48: #{clip_vision_forward.1} parent=39 // pred_fallthru
          _
        // Predicated region
        $region49: #{clip_vision_forward.1} parent=39 // pred_check
          %p609 = pneg %p240
        $region50: #{clip_vision_forward.1} parent=39 // pred_check_branch
          %611 = sbr.rel (%p609) target = $region52
        $region51: #{clip_vision_forward.1} parent=39 // pred_region
          %p612 = scmp.lt.s32.totalorder %s38, 1
          %s613 = scalar_select %p612, %s38, 1
          %s614 = scalar_lea.vmem %s8, %s613
        $region52: #{clip_vision_forward.1} parent=39 // pred_fallthru
          _
        // Predicated region
        $region53: #{clip_vision_forward.1} parent=39 // pred_check
          %p615 = pneg %p266
        $region54: #{clip_vision_forward.1} parent=39 // pred_check_branch
          %617 = sbr.rel (%p615) target = $region56
        $region55: #{clip_vision_forward.1} parent=39 // pred_region
          %p618 = scmp.lt.s32.totalorder %s38, 1
          %s619 = scalar_select %p618, %s38, 1
          %s620 = smul.addr %s619, 48
          %s621 = smul.addr %s620, 4
          %s622 = scalar_lea.vmem %s9, %s621
        $region56: #{clip_vision_forward.1} parent=39 // pred_fallthru
          _
        // Predicated region
        $region57: #{clip_vision_forward.1} parent=39 // pred_check
          %p623 = pneg %p292
        $region58: #{clip_vision_forward.1} parent=39 // pred_check_branch
          %625 = sbr.rel (%p623) target = $region60
        $region59: #{clip_vision_forward.1} parent=39 // pred_region
          %p626 = scmp.lt.s32.totalorder %s38, 1
          %s627 = scalar_select %p626, %s38, 1
          %s628 = smul.addr %s627, 3
          %s629 = scalar_lea.vmem %s10, %s628
        $region60: #{clip_vision_forward.1} parent=39 // pred_fallthru
          _
        // Predicated region
        $region61: #{clip_vision_forward.1} parent=39 // pred_check
          %p630 = pneg %p318
        $region62: #{clip_vision_forward.1} parent=39 // pred_check_branch
          %632 = sbr.rel (%p630) target = $region64
        $region63: #{clip_vision_forward.1} parent=39 // pred_region
          %p633 = scmp.lt.s32.totalorder %s38, 1
          %s634 = scalar_select %p633, %s38, 1
          %s635 = smul.addr %s634, 16
          %s636 = smul.addr %s635, 4
          %s637 = scalar_lea.vmem %s11, %s636
        $region64: #{clip_vision_forward.1} parent=39 // pred_fallthru
          _
        // Predicated region
        $region65: #{clip_vision_forward.1} parent=39 // pred_check
          %p638 = pneg %p344
        $region66: #{clip_vision_forward.1} parent=39 // pred_check_branch
          %640 = sbr.rel (%p638) target = $region68
        $region67: #{clip_vision_forward.1} parent=39 // pred_region
          %p641 = scmp.lt.s32.totalorder %s38, 1
          %s642 = scalar_select %p641, %s38, 1
          %s643 = scalar_lea.vmem %s12, %s642
        $region68: #{clip_vision_forward.1} parent=39 // pred_fallthru
          _
        // Predicated region
        $region69: #{clip_vision_forward.1} parent=39 // pred_check
          %p644 = pneg %p370
        $region70: #{clip_vision_forward.1} parent=39 // pred_check_branch
          %646 = sbr.rel (%p644) target = $region72
        $region71: #{clip_vision_forward.1} parent=39 // pred_region
          %p647 = scmp.lt.s32.totalorder %s38, 1
          %s648 = scalar_select %p647, %s38, 1
          %s649 = scalar_lea.vmem %s13, %s648
        $region72: #{clip_vision_forward.1} parent=39 // pred_fallthru
          _
        // Predicated region
        $region73: #{clip_vision_forward.1} parent=39 // pred_check
          %p650 = pneg %p396
        $region74: #{clip_vision_forward.1} parent=39 // pred_check_branch
          %652 = sbr.rel (%p650) target = $region76
        $region75: #{clip_vision_forward.1} parent=39 // pred_region
          %p653 = scmp.lt.s32.totalorder %s38, 1
          %s654 = scalar_select %p653, %s38, 1
          %s655 = scalar_lea.vmem %s14, %s654
        $region76: #{clip_vision_forward.1} parent=39 // pred_fallthru
          _
        // Predicated region
        $region77: #{clip_vision_forward.1} parent=39 // pred_check
          %p656 = pneg %p422
        $region78: #{clip_vision_forward.1} parent=39 // pred_check_branch
          %658 = sbr.rel (%p656) target = $region80
        $region79: #{clip_vision_forward.1} parent=39 // pred_region
          %p659 = scmp.lt.s32.totalorder %s38, 1
          %s660 = scalar_select %p659, %s38, 1
          %s661 = smul.addr %s660, 32
          %s662 = smul.addr %s661, 4
          %s663 = scalar_lea.vmem %s15, %s662
        $region80: #{clip_vision_forward.1} parent=39 // pred_fallthru
          _
        // Predicated region
        $region81: #{clip_vision_forward.1} parent=39 // pred_check
          %p664 = pneg %p448
        $region82: #{clip_vision_forward.1} parent=39 // pred_check_branch
          %666 = sbr.rel (%p664) target = $region84
        $region83: #{clip_vision_forward.1} parent=39 // pred_region
          %p667 = scmp.lt.s32.totalorder %s38, 1
          %s668 = scalar_select %p667, %s38, 1
          %s669 = smul.addr %s668, 2
          %s670 = scalar_lea.vmem %s16, %s669
        $region84: #{clip_vision_forward.1} parent=39 // pred_fallthru
          _
        // Predicated region
        $region85: #{clip_vision_forward.1} parent=39 // pred_check
          %p671 = pneg %p474
        $region86: #{clip_vision_forward.1} parent=39 // pred_check_branch
          %673 = sbr.rel (%p671) target = $region88
        $region87: #{clip_vision_forward.1} parent=39 // pred_region
          %p674 = scmp.lt.s32.totalorder %s38, 1
          %s675 = scalar_select %p674, %s38, 1
          %s676 = smul.addr %s675, 32
          %s677 = smul.addr %s676, 4
          %s678 = scalar_lea.vmem %s17, %s677
        $region88: #{clip_vision_forward.1} parent=39 // pred_fallthru
          _
        // Predicated region
        $region89: #{clip_vision_forward.1} parent=39 // pred_check
          %p679 = pneg %p500
        $region90: #{clip_vision_forward.1} parent=39 // pred_check_branch
          %681 = sbr.rel (%p679) target = $region92
        $region91: #{clip_vision_forward.1} parent=39 // pred_region
          %p682 = scmp.lt.s32.totalorder %s38, 1
          %s683 = scalar_select %p682, %s38, 1
          %s684 = scalar_lea.vmem %s18, %s683
        $region92: #{clip_vision_forward.1} parent=39 // pred_fallthru
          _
      $region40: #{clip_vision_forward.1} parent=5 // pred_fallthru
        _
      %p685 = scmp.le.s32.totalorder 1, %s30
      %p686 = scmp.lt.s32.totalorder %s30, 5
      %p687 = pnand %p685, %p686
      %p688 = pneg %p687
      // Predicated region
      $region93: #{clip_vision_forward.1} parent=5 // pred_check
        _
      $region94: #{clip_vision_forward.1} parent=5 // pred_check_branch
        %690 = sbr.rel (%p687) target = $region96
      $region95: #{clip_vision_forward.1} parent=5 // pred_region
        %s691 = ssub.s32 %s30, 1
        %p692 = scmp.lt.s32.totalorder %s39, 1
        %s693 = scalar_select %p692, %s39, 1
        %s694 = smul.addr %s693, 6
        %s695 = smul.addr %s694, 8
        %s696 = scalar_lea.vmem %s0, %s695
        %p697 = pneg %p68
        %p698 = pneg %p65
        %p699 = pneg %p89
        %p700 = pneg %p86
        %p701 = pneg %p110
        %p702 = pneg %p107
        %p703 = pneg %p131
        %p704 = pneg %p128
        %p705 = pneg %p152
        %p706 = pneg %p149
        %p707 = pneg %p173
        %p708 = pneg %p170
        %p709 = pneg %p194
        %p710 = pneg %p191
        %p711 = scmp.lt.s32.totalorder %s40, 1
        %s712 = scalar_select %p711, %s40, 1
        %s713 = scalar_lea.vmem %s7, %s712
        %p714 = pneg %p220
        %p715 = pneg %p217
        %p716 = scmp.lt.s32.totalorder %s40, 1
        %s717 = scalar_select %p716, %s40, 1
        %s718 = scalar_lea.vmem %s8, %s717
        %p719 = pneg %p246
        %p720 = pneg %p243
        %p721 = scmp.lt.s32.totalorder %s40, 1
        %s722 = scalar_select %p721, %s40, 1
        %s723 = smul.addr %s722, 48
        %s724 = smul.addr %s723, 4
        %s725 = scalar_lea.vmem %s9, %s724
        %p726 = pneg %p272
        %p727 = pneg %p269
        %p728 = scmp.lt.s32.totalorder %s40, 1
        %s729 = scalar_select %p728, %s40, 1
        %s730 = smul.addr %s729, 3
        %s731 = scalar_lea.vmem %s10, %s730
        %p732 = pneg %p298
        %p733 = pneg %p295
        %p734 = scmp.lt.s32.totalorder %s40, 1
        %s735 = scalar_select %p734, %s40, 1
        %s736 = smul.addr %s735, 16
        %s737 = smul.addr %s736, 4
        %s738 = scalar_lea.vmem %s11, %s737
        %p739 = pneg %p324
        %p740 = pneg %p321
        %p741 = scmp.lt.s32.totalorder %s40, 1
        %s742 = scalar_select %p741, %s40, 1
        %s743 = scalar_lea.vmem %s12, %s742
        %p744 = pneg %p350
        %p745 = pneg %p347
        %p746 = scmp.lt.s32.totalorder %s40, 1
        %s747 = scalar_select %p746, %s40, 1
        %s748 = scalar_lea.vmem %s13, %s747
        %p749 = pneg %p376
        %p750 = pneg %p373
        %p751 = scmp.lt.s32.totalorder %s40, 1
        %s752 = scalar_select %p751, %s40, 1
        %s753 = scalar_lea.vmem %s14, %s752
        %p754 = pneg %p402
        %p755 = pneg %p399
        %p756 = scmp.lt.s32.totalorder %s40, 1
        %s757 = scalar_select %p756, %s40, 1
        %s758 = smul.addr %s757, 32
        %s759 = smul.addr %s758, 4
        %s760 = scalar_lea.vmem %s15, %s759
        %p761 = pneg %p428
        %p762 = pneg %p425
        %p763 = scmp.lt.s32.totalorder %s40, 1
        %s764 = scalar_select %p763, %s40, 1
        %s765 = smul.addr %s764, 2
        %s766 = scalar_lea.vmem %s16, %s765
        %p767 = pneg %p454
        %p768 = pneg %p451
        %p769 = scmp.lt.s32.totalorder %s40, 1
        %s770 = scalar_select %p769, %s40, 1
        %s771 = smul.addr %s770, 32
        %s772 = smul.addr %s771, 4
        %s773 = scalar_lea.vmem %s17, %s772
        %p774 = pneg %p480
        %p775 = pneg %p477
        %p776 = scmp.lt.s32.totalorder %s40, 1
        %s777 = scalar_select %p776, %s40, 1
        %s778 = scalar_lea.vmem %s18, %s777
        %p779 = pneg %p506
        %p780 = pneg %p503
        %p781 = pneg %p532
        %p782 = pneg %p529
        %p783 = scmp.lt.s32.totalorder %s39, 1
        %s784 = scalar_select %p783, %s39, 1
        %s785 = smul.addr %s784, 8
        %s786 = scalar_lea.vmem %s19, %s785
        %p787 = pneg %p558
        %p788 = pneg %p555
        %s789 = sand.u32 %s545, 1
        %s790 = scalar_lea.sflag [#allocation4], %s789
        %s791 = sand.u32 %s545, 1
        %s792 = scalar_lea.vmem [#allocation3], %s791
        %p793 = scmp.lt.s32.totalorder %s39, 1
        %s794 = scalar_select %p793, %s39, 1
        %s795 = smul.addr %s794, 6
        %s796 = smul.addr %s795, 8
        %s797 = scalar_lea.vmem %s0, %s796
        %p798 = scmp.lt.s32.totalorder %s40, 1
        %s799 = scalar_select %p798, %s40, 1
        %s800 = scalar_lea.vmem %s7, %s799
        %p801 = scmp.lt.s32.totalorder %s40, 1
        %s802 = scalar_select %p801, %s40, 1
        %s803 = scalar_lea.vmem %s8, %s802
        %p804 = scmp.lt.s32.totalorder %s40, 1
        %s805 = scalar_select %p804, %s40, 1
        %s806 = smul.addr %s805, 48
        %s807 = smul.addr %s806, 4
        %s808 = scalar_lea.vmem %s9, %s807
        %p809 = scmp.lt.s32.totalorder %s40, 1
        %s810 = scalar_select %p809, %s40, 1
        %s811 = smul.addr %s810, 3
        %s812 = scalar_lea.vmem %s10, %s811
        %p813 = scmp.lt.s32.totalorder %s40, 1
        %s814 = scalar_select %p813, %s40, 1
        %s815 = smul.addr %s814, 16
        %s816 = smul.addr %s815, 4
        %s817 = scalar_lea.vmem %s11, %s816
        %p818 = scmp.lt.s32.totalorder %s40, 1
        %s819 = scalar_select %p818, %s40, 1
        %s820 = scalar_lea.vmem %s12, %s819
        %p821 = scmp.lt.s32.totalorder %s40, 1
        %s822 = scalar_select %p821, %s40, 1
        %s823 = scalar_lea.vmem %s13, %s822
        %p824 = scmp.lt.s32.totalorder %s40, 1
        %s825 = scalar_select %p824, %s40, 1
        %s826 = scalar_lea.vmem %s14, %s825
        %p827 = scmp.lt.s32.totalorder %s40, 1
        %s828 = scalar_select %p827, %s40, 1
        %s829 = smul.addr %s828, 32
        %s830 = smul.addr %s829, 4
        %s831 = scalar_lea.vmem %s15, %s830
        %p832 = scmp.lt.s32.totalorder %s40, 1
        %s833 = scalar_select %p832, %s40, 1
        %s834 = smul.addr %s833, 2
        %s835 = scalar_lea.vmem %s16, %s834
        %p836 = scmp.lt.s32.totalorder %s40, 1
        %s837 = scalar_select %p836, %s40, 1
        %s838 = smul.addr %s837, 32
        %s839 = smul.addr %s838, 4
        %s840 = scalar_lea.vmem %s17, %s839
        %p841 = scmp.lt.s32.totalorder %s40, 1
        %s842 = scalar_select %p841, %s40, 1
        %s843 = scalar_lea.vmem %s18, %s842
        %p844 = scmp.lt.s32.totalorder %s39, 1
        %s845 = scalar_select %p844, %s39, 1
        %s846 = smul.addr %s845, 8
        %s847 = scalar_lea.vmem %s19, %s846
        %p849 = scmp.eq.s32.totalorder %s40, 0
        // Predicated region
        $region97: #{clip_vision_forward.1} parent=95 // pred_check
          %p850 = pneg %p849
        $region98: #{clip_vision_forward.1} parent=95 // pred_check_branch
          %852 = sbr.rel (%p850) target = $region100
        $region99: #{clip_vision_forward.1} parent=95 // pred_region
          %v853 = vld [vmem:[%s797] sm:$0x1f]
          %v854 = vld [vmem:[%s797 + $0x8] sm:$0x1f]
          %v855 = vld [vmem:[%s797 + $0x10] sm:$0x1f]
          %v856 = vld [vmem:[%s797 + $0x18] sm:$0x1f]
          %v857 = vld [vmem:[%s797 + $0x20] sm:$0x1f]
          %v858 = vld [vmem:[%s797 + $0x28] sm:$0x1f]
          %v859 = vld [vmem:[%s1] sm:$0xff]
          %v860 = vld [vmem:[%s1 + $0x8] sm:$0xff]
          %v861 = vld [vmem:[%s1 + $0x10] sm:$0xff]
          %v862 = vld [vmem:[%s1 + $0x18] sm:$0xff]
          %v863 = vld [vmem:[%s1 + $0x20] sm:$0xff]
          %v864 = vld [vmem:[%s1 + $0x28] sm:$0xff]
          %v865 = vld [vmem:[%s1 + $0x30] sm:$0xff]
          %v866 = vld [vmem:[%s1 + $0x38] sm:$0xff]
          %v867 = vld [vmem:[%s1 + $0x40] sm:$0xff]
          %v868 = vld [vmem:[%s1 + $0x48] sm:$0xff]
          %v869 = vld [vmem:[%s1 + $0x50] sm:$0xff]
          %v870 = vld [vmem:[%s1 + $0x58] sm:$0xff]
          %v871 = vld [vmem:[%s1 + $0x60] sm:$0xff]
          %v872 = vld [vmem:[%s1 + $0x68] sm:$0xff]
          %v873 = vld [vmem:[%s1 + $0x70] sm:$0xff]
          %v874 = vld [vmem:[%s1 + $0x78] sm:$0xff]
          %v875 = vld [vmem:[%s1 + $0x80] sm:$0xff]
          %v876 = vld [vmem:[%s1 + $0x88] sm:$0xff]
          %v877 = vld [vmem:[%s1 + $0x90] sm:$0xff]
          %v878 = vld [vmem:[%s1 + $0x98] sm:$0xff]
          %v879 = vld [vmem:[%s1 + $0xa0] sm:$0xff]
          %v880 = vld [vmem:[%s1 + $0xa8] sm:$0xff]
          %v881 = vld [vmem:[%s1 + $0xb0] sm:$0xff]
          %v882 = vld [vmem:[%s1 + $0xb8] sm:$0xff]
          %v883 = vld [vmem:[%s1 + $0xc0] sm:$0xff]
          %v884 = vld [vmem:[%s1 + $0xc8] sm:$0xff]
          %v885 = vld [vmem:[%s1 + $0xd0] sm:$0xff]
          %v886 = vld [vmem:[%s1 + $0xd8] sm:$0xff]
          %v887 = vld [vmem:[%s1 + $0xe0] sm:$0xff]
          %v888 = vld [vmem:[%s1 + $0xe8] sm:$0xff]
          %v889 = vld [vmem:[%s1 + $0xf0] sm:$0xff]
          %v890 = vld [vmem:[%s1 + $0xf8] sm:$0xff]
          %v891 = vld [vmem:[%s1 + $0x100] sm:$0xff]
          %v892 = vld [vmem:[%s1 + $0x108] sm:$0xff]
          %v893 = vld [vmem:[%s1 + $0x110] sm:$0xff]
          %v894 = vld [vmem:[%s1 + $0x118] sm:$0xff]
          %v895 = vld [vmem:[%s1 + $0x120] sm:$0xff]
          %v896 = vld [vmem:[%s1 + $0x128] sm:$0xff]
          %v897 = vld [vmem:[%s1 + $0x130] sm:$0xff]
          %v898 = vld [vmem:[%s1 + $0x138] sm:$0xff]
          %v899 = vld [vmem:[%s1 + $0x140] sm:$0xff]
          %v900 = vld [vmem:[%s1 + $0x148] sm:$0xff]
          %v901 = vld [vmem:[%s1 + $0x150] sm:$0xff]
          %v902 = vld [vmem:[%s1 + $0x158] sm:$0xff]
          %v903 = vld [vmem:[%s1 + $0x160] sm:$0xff]
          %v904 = vld [vmem:[%s1 + $0x168] sm:$0xff]
          %v905 = vld [vmem:[%s1 + $0x170] sm:$0xff]
          %v906 = vld [vmem:[%s1 + $0x178] sm:$0xff]
          %v907 = vld [vmem:[%s1 + $0x180] sm:$0xff]
          %v908 = vld [vmem:[%s1 + $0x188] sm:$0xff]
          %v909 = vld [vmem:[%s1 + $0x190] sm:$0xff]
          %v910 = vld [vmem:[%s1 + $0x198] sm:$0xff]
          %v911 = vld [vmem:[%s1 + $0x1a0] sm:$0xff]
          %v912 = vld [vmem:[%s1 + $0x1a8] sm:$0xff]
          %v913 = vld [vmem:[%s1 + $0x1b0] sm:$0xff]
          %v914 = vld [vmem:[%s1 + $0x1b8] sm:$0xff]
          %v915 = vld [vmem:[%s1 + $0x1c0] sm:$0xff]
          %v916 = vld [vmem:[%s1 + $0x1c8] sm:$0xff]
          %v917 = vld [vmem:[%s1 + $0x1d0] sm:$0xff]
          %v918 = vld [vmem:[%s1 + $0x1d8] sm:$0xff]
          %v919 = vld [vmem:[%s1 + $0x1e0] sm:$0xff]
          %v920 = vld [vmem:[%s1 + $0x1e8] sm:$0xff]
          %v921 = vld [vmem:[%s1 + $0x1f0] sm:$0xff]
          %v922 = vld [vmem:[%s1 + $0x1f8] sm:$0xff]
          %v923 = vld [vmem:[%s1 + $0x200] sm:$0xff]
          %v924 = vld [vmem:[%s1 + $0x208] sm:$0xff]
          %v925 = vld [vmem:[%s1 + $0x210] sm:$0xff]
          %v926 = vld [vmem:[%s1 + $0x218] sm:$0xff]
          %v927 = vld [vmem:[%s1 + $0x220] sm:$0xff]
          %v928 = vld [vmem:[%s1 + $0x228] sm:$0xff]
          %v929 = vld [vmem:[%s1 + $0x230] sm:$0xff]
          %v930 = vld [vmem:[%s1 + $0x238] sm:$0xff]
          %v931 = vld [vmem:[%s1 + $0x240] sm:$0xff]
          %v932 = vld [vmem:[%s1 + $0x248] sm:$0xff]
          %v933 = vld [vmem:[%s1 + $0x250] sm:$0xff]
          %v934 = vld [vmem:[%s1 + $0x258] sm:$0xff]
          %v935 = vld [vmem:[%s1 + $0x260] sm:$0xff]
          %v936 = vld [vmem:[%s1 + $0x268] sm:$0xff]
          %v937 = vld [vmem:[%s1 + $0x270] sm:$0xff]
          %v938 = vld [vmem:[%s1 + $0x278] sm:$0xff]
          %v939 = vld [vmem:[%s1 + $0x280] sm:$0xff]
          %v940 = vld [vmem:[%s1 + $0x288] sm:$0xff]
          %v941 = vld [vmem:[%s1 + $0x290] sm:$0xff]
          %v942 = vld [vmem:[%s1 + $0x298] sm:$0xff]
          %v943 = vld [vmem:[%s1 + $0x2a0] sm:$0xff]
          %v944 = vld [vmem:[%s1 + $0x2a8] sm:$0xff]
          %v945 = vld [vmem:[%s1 + $0x2b0] sm:$0xff]
          %v946 = vld [vmem:[%s1 + $0x2b8] sm:$0xff]
          %v947 = vld [vmem:[%s1 + $0x2c0] sm:$0xff]
          %v948 = vld [vmem:[%s1 + $0x2c8] sm:$0xff]
          %v949 = vld [vmem:[%s1 + $0x2d0] sm:$0xff]
          %v950 = vld [vmem:[%s1 + $0x2d8] sm:$0xff]
          %v951 = vld [vmem:[%s1 + $0x2e0] sm:$0xff]
          %v952 = vld [vmem:[%s1 + $0x2e8] sm:$0xff]
          %v953 = vld [vmem:[%s1 + $0x2f0] sm:$0xff]
          %v954 = vld [vmem:[%s1 + $0x2f8] sm:$0xff]
          %v955 = vld [vmem:[%s2] sm:$0x1f]
          %956 = vmatprep.subr.mxu0 0.0
          %957 = vmatpush1.msra.mxu0 %v859
          %958 = vmatprep.subr.mxu0 0.0
          %959 = vmatpush1.msra.mxu0 %v860
          %960 = vmatprep.subr.mxu0 0.0
          %961 = vmatpush1.msra.mxu0 %v861
          %962 = vmatprep.subr.mxu0 0.0
          %963 = vmatpush1.msra.mxu0 %v862
          %964 = vmatprep.subr.mxu0 0.0
          %965 = vmatpush1.msra.mxu0 %v863
          %966 = vmatprep.subr.mxu0 0.0
          %967 = vmatpush1.msra.mxu0 %v864
          %968 = vmatprep.subr.mxu0 0.0
          %969 = vmatpush1.msra.mxu0 %v865
          %970 = vmatprep.subr.mxu0 0.0
          %971 = vmatpush1.msra.mxu0 %v866
          %972 = vmatprep.subr.mxu0 0.0
          %973 = vmatpush1.msra.mxu0 %v867
          %974 = vmatprep.subr.mxu0 0.0
          %975 = vmatpush1.msra.mxu0 %v868
          %976 = vmatprep.subr.mxu0 0.0
          %977 = vmatpush1.msra.mxu0 %v869
          %978 = vmatprep.subr.mxu0 0.0
          %979 = vmatpush1.msra.mxu0 %v870
          %980 = vmatprep.subr.mxu0 0.0
          %981 = vmatpush1.msra.mxu0 %v871
          %982 = vmatprep.subr.mxu0 0.0
          %983 = vmatpush1.msra.mxu0 %v872
          %984 = vmatprep.subr.mxu0 0.0
          %985 = vmatpush1.msra.mxu0 %v873
          %986 = vmatprep.subr.mxu0 0.0
          %987 = vmatpush1.msra.mxu0 %v874
          %988 = vmatprep.subr.mxu0 0.0
          %989 = vmatpush1.msra.mxu0 %v875
          %990 = vmatprep.subr.mxu0 0.0
          %991 = vmatpush1.msra.mxu0 %v876
          %992 = vmatprep.subr.mxu0 0.0
          %993 = vmatpush1.msra.mxu0 %v877
          %994 = vmatprep.subr.mxu0 0.0
          %995 = vmatpush1.msra.mxu0 %v878
          %996 = vmatprep.subr.mxu0 0.0
          %997 = vmatpush1.msra.mxu0 %v879
          %998 = vmatprep.subr.mxu0 0.0
          %999 = vmatpush1.msra.mxu0 %v880
          %1000 = vmatprep.subr.mxu0 0.0
          %1001 = vmatpush1.msra.mxu0 %v881
          %1002 = vmatprep.subr.mxu0 0.0
          %1003 = vmatpush1.msra.mxu0 %v882
          %1004 = vmatprep.subr.mxu0 0.0
          %1005 = vmatpush1.msra.mxu0 %v883
          %1006 = vmatprep.subr.mxu0 0.0
          %1007 = vmatpush1.msra.mxu0 %v884
          %1008 = vmatprep.subr.mxu0 0.0
          %1009 = vmatpush1.msra.mxu0 %v885
          %1010 = vmatprep.subr.mxu0 0.0
          %1011 = vmatpush1.msra.mxu0 %v886
          %1012 = vmatprep.subr.mxu0 0.0
          %1013 = vmatpush1.msra.mxu0 %v887
          %1014 = vmatprep.subr.mxu0 0.0
          %1015 = vmatpush1.msra.mxu0 %v888
          %1016 = vmatprep.subr.mxu0 0.0
          %1017 = vmatpush1.msra.mxu0 %v889
          %1018 = vmatprep.subr.mxu0 0.0
          %1019 = vmatpush1.msra.mxu0 %v890
          %1020 = vmatprep.mubr.f32.mxu0 %v854
          %1021 = vmatmul.mubr.f32.gmra.mrb[0].mxu0 %v853
          %v1022 = vpop.f32.mrb[0].mxu0
          %v1023 = vadd.f32 %v955, %v1022
          %v1024 = vpop.f32.mrb[0].mxu0
          %1025 = vdwg.mxu0
          %1026 = vmatprep.subr.mxu0 0.0
          %1027 = vmatpush1.msra.mxu0 %v891
          %1028 = vmatprep.subr.mxu0 0.0
          %1029 = vmatpush1.msra.mxu0 %v892
          %1030 = vmatprep.subr.mxu0 0.0
          %1031 = vmatpush1.msra.mxu0 %v893
          %1032 = vmatprep.subr.mxu0 0.0
          %1033 = vmatpush1.msra.mxu0 %v894
          %1034 = vmatprep.subr.mxu0 0.0
          %1035 = vmatpush1.msra.mxu0 %v895
          %1036 = vmatprep.subr.mxu0 0.0
          %1037 = vmatpush1.msra.mxu0 %v896
          %1038 = vmatprep.subr.mxu0 0.0
          %1039 = vmatpush1.msra.mxu0 %v897
          %1040 = vmatprep.subr.mxu0 0.0
          %1041 = vmatpush1.msra.mxu0 %v898
          %1042 = vmatprep.subr.mxu0 0.0
          %1043 = vmatpush1.msra.mxu0 %v899
          %1044 = vmatprep.subr.mxu0 0.0
          %1045 = vmatpush1.msra.mxu0 %v900
          %1046 = vmatprep.subr.mxu0 0.0
          %1047 = vmatpush1.msra.mxu0 %v901
          %1048 = vmatprep.subr.mxu0 0.0
          %1049 = vmatpush1.msra.mxu0 %v902
          %1050 = vmatprep.subr.mxu0 0.0
          %1051 = vmatpush1.msra.mxu0 %v903
          %1052 = vmatprep.subr.mxu0 0.0
          %1053 = vmatpush1.msra.mxu0 %v904
          %1054 = vmatprep.subr.mxu0 0.0
          %1055 = vmatpush1.msra.mxu0 %v905
          %1056 = vmatprep.subr.mxu0 0.0
          %1057 = vmatpush1.msra.mxu0 %v906
          %1058 = vmatprep.subr.mxu0 0.0
          %1059 = vmatpush1.msra.mxu0 %v907
          %1060 = vmatprep.subr.mxu0 0.0
          %1061 = vmatpush1.msra.mxu0 %v908
          %1062 = vmatprep.subr.mxu0 0.0
          %1063 = vmatpush1.msra.mxu0 %v909
          %1064 = vmatprep.subr.mxu0 0.0
          %1065 = vmatpush1.msra.mxu0 %v910
          %1066 = vmatprep.subr.mxu0 0.0
          %1067 = vmatpush1.msra.mxu0 %v911
          %1068 = vmatprep.subr.mxu0 0.0
          %1069 = vmatpush1.msra.mxu0 %v912
          %1070 = vmatprep.subr.mxu0 0.0
          %1071 = vmatpush1.msra.mxu0 %v913
          %1072 = vmatprep.subr.mxu0 0.0
          %1073 = vmatpush1.msra.mxu0 %v914
          %1074 = vmatprep.subr.mxu0 0.0
          %1075 = vmatpush1.msra.mxu0 %v915
          %1076 = vmatprep.subr.mxu0 0.0
          %1077 = vmatpush1.msra.mxu0 %v916
          %1078 = vmatprep.subr.mxu0 0.0
          %1079 = vmatpush1.msra.mxu0 %v917
          %1080 = vmatprep.subr.mxu0 0.0
          %1081 = vmatpush1.msra.mxu0 %v918
          %1082 = vmatprep.subr.mxu0 0.0
          %1083 = vmatpush1.msra.mxu0 %v919
          %1084 = vmatprep.subr.mxu0 0.0
          %1085 = vmatpush1.msra.mxu0 %v920
          %1086 = vmatprep.subr.mxu0 0.0
          %1087 = vmatpush1.msra.mxu0 %v921
          %1088 = vmatprep.subr.mxu0 0.0
          %1089 = vmatpush1.msra.mxu0 %v922
          %1090 = vmatprep.mubr.f32.mxu0 %v856
          %1091 = vmatmul.mubr.f32.gmra.mrb[0].mxu0 %v855
          %v1092 = vpop.f32.mrb[0].mxu0
          %v1093 = vadd.f32 %v1023, %v1092
          %v1094 = vpop.f32.mrb[0].mxu0
          %1095 = vdwg.mxu0
          %1096 = vmatprep.subr.mxu0 0.0
          %1097 = vmatpush1.msra.mxu0 %v923
          %1098 = vmatprep.subr.mxu0 0.0
          %1099 = vmatpush1.msra.mxu0 %v924
          %1100 = vmatprep.subr.mxu0 0.0
          %1101 = vmatpush1.msra.mxu0 %v925
          %1102 = vmatprep.subr.mxu0 0.0
          %1103 = vmatpush1.msra.mxu0 %v926
          %1104 = vmatprep.subr.mxu0 0.0
          %1105 = vmatpush1.msra.mxu0 %v927
          %1106 = vmatprep.subr.mxu0 0.0
          %1107 = vmatpush1.msra.mxu0 %v928
          %1108 = vmatprep.subr.mxu0 0.0
          %1109 = vmatpush1.msra.mxu0 %v929
          %1110 = vmatprep.subr.mxu0 0.0
          %1111 = vmatpush1.msra.mxu0 %v930
          %1112 = vmatprep.subr.mxu0 0.0
          %1113 = vmatpush1.msra.mxu0 %v931
          %1114 = vmatprep.subr.mxu0 0.0
          %1115 = vmatpush1.msra.mxu0 %v932
          %1116 = vmatprep.subr.mxu0 0.0
          %1117 = vmatpush1.msra.mxu0 %v933
          %1118 = vmatprep.subr.mxu0 0.0
          %1119 = vmatpush1.msra.mxu0 %v934
          %1120 = vmatprep.subr.mxu0 0.0
          %1121 = vmatpush1.msra.mxu0 %v935
          %1122 = vmatprep.subr.mxu0 0.0
          %1123 = vmatpush1.msra.mxu0 %v936
          %1124 = vmatprep.subr.mxu0 0.0
          %1125 = vmatpush1.msra.mxu0 %v937
          %1126 = vmatprep.subr.mxu0 0.0
          %1127 = vmatpush1.msra.mxu0 %v938
          %1128 = vmatprep.subr.mxu0 0.0
          %1129 = vmatpush1.msra.mxu0 %v939
          %1130 = vmatprep.subr.mxu0 0.0
          %1131 = vmatpush1.msra.mxu0 %v940
          %1132 = vmatprep.subr.mxu0 0.0
          %1133 = vmatpush1.msra.mxu0 %v941
          %1134 = vmatprep.subr.mxu0 0.0
          %1135 = vmatpush1.msra.mxu0 %v942
          %1136 = vmatprep.subr.mxu0 0.0
          %1137 = vmatpush1.msra.mxu0 %v943
          %1138 = vmatprep.subr.mxu0 0.0
          %1139 = vmatpush1.msra.mxu0 %v944
          %1140 = vmatprep.subr.mxu0 0.0
          %1141 = vmatpush1.msra.mxu0 %v945
          %1142 = vmatprep.subr.mxu0 0.0
          %1143 = vmatpush1.msra.mxu0 %v946
          %1144 = vmatprep.subr.mxu0 0.0
          %1145 = vmatpush1.msra.mxu0 %v947
          %1146 = vmatprep.subr.mxu0 0.0
          %1147 = vmatpush1.msra.mxu0 %v948
          %1148 = vmatprep.subr.mxu0 0.0
          %1149 = vmatpush1.msra.mxu0 %v949
          %1150 = vmatprep.subr.mxu0 0.0
          %1151 = vmatpush1.msra.mxu0 %v950
          %1152 = vmatprep.subr.mxu0 0.0
          %1153 = vmatpush1.msra.mxu0 %v951
          %1154 = vmatprep.subr.mxu0 0.0
          %1155 = vmatpush1.msra.mxu0 %v952
          %1156 = vmatprep.subr.mxu0 0.0
          %1157 = vmatpush1.msra.mxu0 %v953
          %1158 = vmatprep.subr.mxu0 0.0
          %1159 = vmatpush1.msra.mxu0 %v954
          %1160 = vmatprep.mubr.f32.mxu0 %v858
          %1161 = vmatmul.mubr.f32.gmra.mrb[0].mxu0 %v857
          %v1162 = vpop.f32.mrb[0].mxu0
          %v1163 = vadd.f32 %v1093, %v1162
          %v1164 = vpop.f32.mrb[0].mxu0
          %1165 = vdwg.mxu0
          %v1166 = vld [vmem:[%s3] sm:$0x1]
          %v1167 = vld [vmem:[%s4] sm:$0x1]
          %vm1168 = vcmask 1044480
          %v1169 = vsel %vm1168, %v1163, 0.0
          %1170 = vadd.xlane.f32.xlu0 %v1169
          %v1171 = vpop.xlane.xlu0 %1170
          %v1172 = vrcp.pop 128.0
          %v1173 = vmul.f32 %v1171, %v1172
          %v1174 = vsub.f32 %v1163, %v1173
          %v1175 = vmul.f32 %v1174, %v1174
          %v1176 = vsel %vm1168, %v1175, 0.0
          %1177 = vadd.xlane.f32.xlu0 %v1176
          %v1178 = vpop.xlane.xlu0 %1177
          %v1179 = vmul.f32 %v1178, %v1172
          %v1180 = vadd.f32 %v1179, 1e-05
          %v1181 = vrsqrt.pop %v1180
          %v1182 = vmul.f32 %v1174, %v1181
          %v1184 = vlaneseq
          %v1185 = vshrl.u32 %v1184, 7
          %v1186 = vsub.s32 0, %v1185
          %v1187 = vrot.slane %v1166, %v1186
          %v1189 = vmul.f32 %v1182, %v1187
          %v1191 = vlaneseq
          %v1192 = vshrl.u32 %v1191, 7
          %v1193 = vsub.s32 0, %v1192
          %v1194 = vrot.slane %v1167, %v1193
          %v1196 = vadd.f32 %v1189, %v1194
          %1197 = vst [vmem:[#allocation2] sm:$0x1f] %v1196
        $region100: #{clip_vision_forward.1} parent=95 // pred_fallthru
          _
        %v1198 = vld [vmem:[#allocation2] sm:$0x1f]
        %v1199 = vld [vmem:[%s800] sm:$0x1]
        %v1200 = vld [vmem:[%s803] sm:$0x1]
        %vm1201 = vcmask 1044480
        %v1202 = vsel %vm1201, %v1198, 0.0
        %1203 = vadd.xlane.f32.xlu0 %v1202
        %v1204 = vpop.xlane.xlu0 %1203
        %v1205 = vrcp.pop 128.0
        %v1206 = vmul.f32 %v1204, %v1205
        %v1207 = vsub.f32 %v1198, %v1206
        %v1208 = vmul.f32 %v1207, %v1207
        %v1209 = vsel %vm1201, %v1208, 0.0
        %1210 = vadd.xlane.f32.xlu0 %v1209
        %v1211 = vpop.xlane.xlu0 %1210
        %v1212 = vmul.f32 %v1211, %v1205
        %v1213 = vadd.f32 %v1212, 1e-05
        %v1214 = vrsqrt.pop %v1213
        %v1215 = vmul.f32 %v1207, %v1214
        %v1217 = vlaneseq
        %v1218 = vshrl.u32 %v1217, 7
        %v1219 = vsub.s32 0, %v1218
        %v1220 = vrot.slane %v1199, %v1219
        %v1222 = vmul.f32 %v1215, %v1220
        %v1224 = vlaneseq
        %v1225 = vshrl.u32 %v1224, 7
        %v1226 = vsub.s32 0, %v1225
        %v1227 = vrot.slane %v1200, %v1226
        %v1229 = vadd.f32 %v1222, %v1227
        %v1230 = vpack.c.bf16 %v1229, %v1229
        %v1231 = vld [vmem:[%s808] sm:$0xff]
        %v1232 = vld [vmem:[%s808 + $0x8] sm:$0xf]
        %v1233 = vld [vmem:[%s808 + $0xc] sm:$0xff]
        %v1234 = vld [vmem:[%s808 + $0x14] sm:$0xf]
        %v1235 = vld [vmem:[%s808 + $0x18] sm:$0xff]
        %v1236 = vld [vmem:[%s808 + $0x20] sm:$0xf]
        %v1237 = vld [vmem:[%s808 + $0x24] sm:$0xff]
        %v1238 = vld [vmem:[%s808 + $0x2c] sm:$0xf]
        %v1239 = vld [vmem:[%s808 + $0x30] sm:$0xff]
        %v1240 = vld [vmem:[%s808 + $0x38] sm:$0xf]
        %v1241 = vld [vmem:[%s808 + $0x3c] sm:$0xff]
        %v1242 = vld [vmem:[%s808 + $0x44] sm:$0xf]
        %v1243 = vld [vmem:[%s808 + $0x48] sm:$0xff]
        %v1244 = vld [vmem:[%s808 + $0x50] sm:$0xf]
        %v1245 = vld [vmem:[%s808 + $0x54] sm:$0xff]
        %v1246 = vld [vmem:[%s808 + $0x5c] sm:$0xf]
        %v1247 = vld [vmem:[%s808 + $0x60] sm:$0xff]
        %v1248 = vld [vmem:[%s808 + $0x68] sm:$0xf]
        %v1249 = vld [vmem:[%s808 + $0x6c] sm:$0xff]
        %v1250 = vld [vmem:[%s808 + $0x74] sm:$0xf]
        %v1251 = vld [vmem:[%s808 + $0x78] sm:$0xff]
        %v1252 = vld [vmem:[%s808 + $0x80] sm:$0xf]
        %v1253 = vld [vmem:[%s808 + $0x84] sm:$0xff]
        %v1254 = vld [vmem:[%s808 + $0x8c] sm:$0xf]
        %v1255 = vld [vmem:[%s808 + $0x90] sm:$0xff]
        %v1256 = vld [vmem:[%s808 + $0x98] sm:$0xf]
        %v1257 = vld [vmem:[%s808 + $0x9c] sm:$0xff]
        %v1258 = vld [vmem:[%s808 + $0xa4] sm:$0xf]
        %v1259 = vld [vmem:[%s808 + $0xa8] sm:$0xff]
        %v1260 = vld [vmem:[%s808 + $0xb0] sm:$0xf]
        %v1261 = vld [vmem:[%s808 + $0xb4] sm:$0xff]
        %v1262 = vld [vmem:[%s808 + $0xbc] sm:$0xf]
        %v1263 = vld [vmem:[%s812] sm:$0x7]
        %v1265 = vlaneseq
        %v1266 = vshrl.u32 %v1265, 7
        %v1267 = vsub.s32 0, %v1266
        %v1268 = vrot.slane %v1263, %v1267
        %v1269 = vlaneseq
        %v1270 = vshrl.u32 %v1269, 7
        %v1271 = vsub.s32 1, %v1270
        %v1272 = vrot.slane %v1263, %v1271
        %v1273 = vlaneseq
        %v1274 = vshrl.u32 %v1273, 7
        %v1275 = vsub.s32 2, %v1274
        %v1276 = vrot.slane %v1263, %v1275
        %v1312 = vunpack.c.l.b16 %v1231
        %v1313 = vunpack.c.h.b16 %v1231
        %v1314 = vunpack.c.l.b16 %v1232
        %v1315 = vunpack.c.l.b16 %v1233
        %v1316 = vunpack.c.h.b16 %v1233
        %v1317 = vunpack.c.l.b16 %v1234
        %v1318 = vunpack.c.l.b16 %v1235
        %v1319 = vunpack.c.h.b16 %v1235
        %v1320 = vunpack.c.l.b16 %v1236
        %v1321 = vunpack.c.l.b16 %v1237
        %v1322 = vunpack.c.h.b16 %v1237
        %v1323 = vunpack.c.l.b16 %v1238
        %v1324 = vunpack.c.l.b16 %v1239
        %v1325 = vunpack.c.h.b16 %v1239
        %v1326 = vunpack.c.l.b16 %v1240
        %v1327 = vunpack.c.l.b16 %v1241
        %v1328 = vunpack.c.h.b16 %v1241
        %v1329 = vunpack.c.l.b16 %v1242
        %v1330 = vunpack.c.l.b16 %v1243
        %v1331 = vunpack.c.h.b16 %v1243
        %v1332 = vunpack.c.l.b16 %v1244
        %v1333 = vunpack.c.l.b16 %v1245
        %v1334 = vunpack.c.h.b16 %v1245
        %v1335 = vunpack.c.l.b16 %v1246
        %v1336 = vunpack.c.l.b16 %v1247
        %v1337 = vunpack.c.h.b16 %v1247
        %v1338 = vunpack.c.l.b16 %v1248
        %v1339 = vunpack.c.l.b16 %v1249
        %v1340 = vunpack.c.h.b16 %v1249
        %v1341 = vunpack.c.l.b16 %v1250
        %v1342 = vunpack.c.l.b16 %v1251
        %v1343 = vunpack.c.h.b16 %v1251
        %v1344 = vunpack.c.l.b16 %v1252
        %v1345 = vunpack.c.l.b16 %v1253
        %v1346 = vunpack.c.h.b16 %v1253
        %v1347 = vunpack.c.l.b16 %v1254
        %v1348 = vunpack.c.l.b16 %v1255
        %v1349 = vunpack.c.h.b16 %v1255
        %v1350 = vunpack.c.l.b16 %v1256
        %v1351 = vunpack.c.l.b16 %v1257
        %v1352 = vunpack.c.h.b16 %v1257
        %v1353 = vunpack.c.l.b16 %v1258
        %v1354 = vunpack.c.l.b16 %v1259
        %v1355 = vunpack.c.h.b16 %v1259
        %v1356 = vunpack.c.l.b16 %v1260
        %v1357 = vunpack.c.l.b16 %v1261
        %v1358 = vunpack.c.h.b16 %v1261
        %v1359 = vunpack.c.l.b16 %v1262
        %v1360 = vpack.c.b16 %v1315, %v1312
        %v1361 = vpack.c.b16 %v1316, %v1313
        %v1362 = vpack.c.b16 %v1317, %v1314
        %v1363 = vpack.c.b16 %v1321, %v1318
        %v1364 = vpack.c.b16 %v1322, %v1319
        %v1365 = vpack.c.b16 %v1323, %v1320
        %v1366 = vpack.c.b16 %v1327, %v1324
        %v1367 = vpack.c.b16 %v1328, %v1325
        %v1368 = vpack.c.b16 %v1329, %v1326
        %v1369 = vpack.c.b16 %v1333, %v1330
        %v1370 = vpack.c.b16 %v1334, %v1331
        %v1371 = vpack.c.b16 %v1335, %v1332
        %v1372 = vpack.c.b16 %v1339, %v1336
        %v1373 = vpack.c.b16 %v1340, %v1337
        %v1374 = vpack.c.b16 %v1341, %v1338
        %v1375 = vpack.c.b16 %v1345, %v1342
        %v1376 = vpack.c.b16 %v1346, %v1343
        %v1377 = vpack.c.b16 %v1347, %v1344
        %v1378 = vpack.c.b16 %v1351, %v1348
        %v1379 = vpack.c.b16 %v1352, %v1349
        %v1380 = vpack.c.b16 %v1353, %v1350
        %v1381 = vpack.c.b16 %v1357, %v1354
        %v1382 = vpack.c.b16 %v1358, %v1355
        %v1383 = vpack.c.b16 %v1359, %v1356
        %1408 = vmatprep.subr.bf16.mxu0 %v1361
        %1409 = vmatpush1.bf16.msra.mxu0 %v1360
        %1410 = vmatprep.subr.bf16.mxu0 %v1364
        %1411 = vmatpush1.bf16.msra.mxu0 %v1363
        %1412 = vmatprep.subr.bf16.mxu0 %v1367
        %1413 = vmatpush1.bf16.msra.mxu0 %v1366
        %1414 = vmatprep.subr.bf16.mxu0 %v1370
        %1415 = vmatpush1.bf16.msra.mxu0 %v1369
        %1416 = vmatprep.subr.bf16.mxu0 %v1373
        %1417 = vmatpush1.bf16.msra.mxu0 %v1372
        %1418 = vmatprep.subr.bf16.mxu0 %v1376
        %1419 = vmatpush1.bf16.msra.mxu0 %v1375
        %1420 = vmatprep.subr.bf16.mxu0 %v1379
        %1421 = vmatpush1.bf16.msra.mxu0 %v1378
        %1422 = vmatprep.subr.bf16.mxu0 %v1382
        %1423 = vmatpush1.bf16.msra.mxu0 %v1381
        %1424 = vmatprep.subr.bf16.mxu0 0
        %1425 = vmatpush1.bf16.msra.mxu0 0
        %1426 = vmatprep.subr.bf16.mxu0 0
        %1427 = vmatpush1.bf16.msra.mxu0 0
        %1428 = vmatprep.subr.bf16.mxu0 0
        %1429 = vmatpush1.bf16.msra.mxu0 0
        %1430 = vmatprep.subr.bf16.mxu0 0
        %1431 = vmatpush1.bf16.msra.mxu0 0
        %1432 = vmatprep.subr.bf16.mxu0 0
        %1433 = vmatpush1.bf16.msra.mxu0 0
        %1434 = vmatprep.subr.bf16.mxu0 0
        %1435 = vmatpush1.bf16.msra.mxu0 0
        %1436 = vmatprep.subr.bf16.mxu0 0
        %1437 = vmatpush1.bf16.msra.mxu0 0
        %1438 = vmatprep.subr.bf16.mxu0 0
        %1439 = vmatpush1.bf16.msra.mxu0 0
        %1440 = vmatprep.mubr.bf16.mxu0 0
        %1441 = vmatmul.mubr.bf16.gmra.mrb[0].mxu0 %v1230
        %v1442 = vpop.f32.mrb[0].mxu0
        %v1443 = vadd.f32 %v1268, %v1442
        %v1444 = vpop.f32.mrb[0].mxu0
        %v1445 = vadd.f32 %v1272, %v1444
        %v1446 = vpop.f32.mrb[0].mxu0
        %v1447 = vpop.f32.mrb[0].mxu0
        %1448 = vdwg.mxu0
        %1449 = vmatprep.subr.bf16.mxu0 0
        %1450 = vmatpush1.bf16.msra.mxu0 %v1362
        %1451 = vmatprep.subr.bf16.mxu0 0
        %1452 = vmatpush1.bf16.msra.mxu0 %v1365
        %1453 = vmatprep.subr.bf16.mxu0 0
        %1454 = vmatpush1.bf16.msra.mxu0 %v1368
        %1455 = vmatprep.subr.bf16.mxu0 0
        %1456 = vmatpush1.bf16.msra.mxu0 %v1371
        %1457 = vmatprep.subr.bf16.mxu0 0
        %1458 = vmatpush1.bf16.msra.mxu0 %v1374
        %1459 = vmatprep.subr.bf16.mxu0 0
        %1460 = vmatpush1.bf16.msra.mxu0 %v1377
        %1461 = vmatprep.subr.bf16.mxu0 0
        %1462 = vmatpush1.bf16.msra.mxu0 %v1380
        %1463 = vmatprep.subr.bf16.mxu0 0
        %1464 = vmatpush1.bf16.msra.mxu0 %v1383
        %1465 = vmatprep.subr.bf16.mxu0 0
        %1466 = vmatpush1.bf16.msra.mxu0 0
        %1467 = vmatprep.subr.bf16.mxu0 0
        %1468 = vmatpush1.bf16.msra.mxu0 0
        %1469 = vmatprep.subr.bf16.mxu0 0
        %1470 = vmatpush1.bf16.msra.mxu0 0
        %1471 = vmatprep.subr.bf16.mxu0 0
        %1472 = vmatpush1.bf16.msra.mxu0 0
        %1473 = vmatprep.subr.bf16.mxu0 0
        %1474 = vmatpush1.bf16.msra.mxu0 0
        %1475 = vmatprep.subr.bf16.mxu0 0
        %1476 = vmatpush1.bf16.msra.mxu0 0
        %1477 = vmatprep.subr.bf16.mxu0 0
        %1478 = vmatpush1.bf16.msra.mxu0 0
        %1479 = vmatprep.subr.bf16.mxu0 0
        %1480 = vmatpush1.bf16.msra.mxu0 0
        %1481 = vmatprep.mubr.bf16.mxu0 0
        %1482 = vmatmul.mubr.bf16.gmra.mrb[0].mxu0 %v1230
        %v1483 = vpop.f32.mrb[0].mxu0
        %v1484 = vadd.f32 %v1276, %v1483
        %v1485 = vpop.f32.mrb[0].mxu0
        %v1486 = vpop.f32.mrb[0].mxu0
        %v1487 = vpop.f32.mrb[0].mxu0
        %1488 = vdwg.mxu0
        %v1489 = vld [vmem:[%s820] sm:$0x1]
        %v1490 = vpack.c.bf16 %v1443, %v1443
        %v1491 = vpack.c.bf16 %v1445, %v1445
        %vm1492 = vcmask 261120
        %v1494 = vsel %vm1492, %v1490, 0
        %v1497 = vsel %vm1492, %v1491, 0
        %1499 = vmatprep.subr.bf16.mxu0 0
        %1500 = vmatpush1.bf16.xpose.msra.mxu0 %v1497
        %1501 = vmatprep.subr.bf16.mxu0 0
        %1502 = vmatpush1.bf16.xpose.msra.mxu0 0
        %1503 = vmatprep.subr.bf16.mxu0 0
        %1504 = vmatpush1.bf16.xpose.msra.mxu0 0
        %1505 = vmatprep.subr.bf16.mxu0 0
        %1506 = vmatpush1.bf16.xpose.msra.mxu0 0
        %1507 = vmatprep.subr.bf16.mxu0 0
        %1508 = vmatpush1.bf16.xpose.msra.mxu0 0
        %1509 = vmatprep.subr.bf16.mxu0 0
        %1510 = vmatpush1.bf16.xpose.msra.mxu0 0
        %1511 = vmatprep.subr.bf16.mxu0 0
        %1512 = vmatpush1.bf16.xpose.msra.mxu0 0
        %1513 = vmatprep.subr.bf16.mxu0 0
        %1514 = vmatpush1.bf16.xpose.msra.mxu0 0
        %1515 = vmatprep.subr.bf16.mxu0 0
        %1516 = vmatpush1.bf16.xpose.msra.mxu0 0
        %1517 = vmatprep.subr.bf16.mxu0 0
        %1518 = vmatpush1.bf16.xpose.msra.mxu0 0
        %1519 = vmatprep.subr.bf16.mxu0 0
        %1520 = vmatpush1.bf16.xpose.msra.mxu0 0
        %1521 = vmatprep.subr.bf16.mxu0 0
        %1522 = vmatpush1.bf16.xpose.msra.mxu0 0
        %1523 = vmatprep.subr.bf16.mxu0 0
        %1524 = vmatpush1.bf16.xpose.msra.mxu0 0
        %1525 = vmatprep.subr.bf16.mxu0 0
        %1526 = vmatpush1.bf16.xpose.msra.mxu0 0
        %1527 = vmatprep.subr.bf16.mxu0 0
        %1528 = vmatpush1.bf16.xpose.msra.mxu0 0
        %1529 = vmatprep.subr.bf16.mxu0 0
        %1530 = vmatpush1.bf16.xpose.msra.mxu0 0
        %1531 = vmatprep.mubr.bf16.mxu0 0
        %1532 = vmatmul.mubr.bf16.gmra.mrb[0].mxu0 %v1494
        %v1533 = vpop.f32.mrb[0].mxu0
        %v1534 = vadd.f32 0.0, %v1533
        %v1535 = vpop.f32.mrb[0].mxu0
        %v1536 = vpop.f32.mrb[0].mxu0
        %v1537 = vpop.f32.mrb[0].mxu0
        %1538 = vdwg.mxu0
        %vm1539 = vcmask 36864
        %v1540 = vsel %vm1539, %v1534, -inf
        %1541 = vmax.xlane.f32.xlu0 %v1540
        %v1542 = vpop.xlane.xlu0 %1541
        %v1543 = vsub.f32 %v1534, %v1542
        %v1544 = vmul.f32 %v1543, 1.442695
        %v1545 = vpow.pop %v1544
        %v1546 = vsel %vm1539, %v1545, 0.0
        %1547 = vadd.xlane.f32.xlu0 %v1546
        %v1548 = vpop.xlane.xlu0 %1547
        %v1549 = vrcp.pop %v1548
        %v1550 = vmul.f32 %v1545, %v1549
        %v1551 = vpack.c.bf16 %v1550, %v1550
        %v1552 = vpack.c.bf16 %v1484, %v1484
        %vm1553 = vcmask 39936
        %v1555 = vsel %vm1553, %v1551, 0
        %vm1557 = vcmask 1041408
        %vm1558 = vcmask 1042432
        %v1559 = vsel %vm1557, 4294967295, 65535
        %v1560 = vsel %vm1558, %v1559, 0
        %v1562 = vand.u32 %v1552, %v1560
        %1564 = vmatprep.subr.bf16.mxu0 0
        %1565 = vmatpush1.bf16.msra.mxu0 %v1562
        %1566 = vmatprep.subr.bf16.mxu0 0
        %1567 = vmatpush1.bf16.msra.mxu0 0
        %1568 = vmatprep.subr.bf16.mxu0 0
        %1569 = vmatpush1.bf16.msra.mxu0 0
        %1570 = vmatprep.subr.bf16.mxu0 0
        %1571 = vmatpush1.bf16.msra.mxu0 0
        %1572 = vmatprep.subr.bf16.mxu0 0
        %1573 = vmatpush1.bf16.msra.mxu0 0
        %1574 = vmatprep.subr.bf16.mxu0 0
        %1575 = vmatpush1.bf16.msra.mxu0 0
        %1576 = vmatprep.subr.bf16.mxu0 0
        %1577 = vmatpush1.bf16.msra.mxu0 0
        %1578 = vmatprep.subr.bf16.mxu0 0
        %1579 = vmatpush1.bf16.msra.mxu0 0
        %1580 = vmatprep.subr.bf16.mxu0 0
        %1581 = vmatpush1.bf16.msra.mxu0 0
        %1582 = vmatprep.subr.bf16.mxu0 0
        %1583 = vmatpush1.bf16.msra.mxu0 0
        %1584 = vmatprep.subr.bf16.mxu0 0
        %1585 = vmatpush1.bf16.msra.mxu0 0
        %1586 = vmatprep.subr.bf16.mxu0 0
        %1587 = vmatpush1.bf16.msra.mxu0 0
        %1588 = vmatprep.subr.bf16.mxu0 0
        %1589 = vmatpush1.bf16.msra.mxu0 0
        %1590 = vmatprep.subr.bf16.mxu0 0
        %1591 = vmatpush1.bf16.msra.mxu0 0
        %1592 = vmatprep.subr.bf16.mxu0 0
        %1593 = vmatpush1.bf16.msra.mxu0 0
        %1594 = vmatprep.subr.bf16.mxu0 0
        %1595 = vmatpush1.bf16.msra.mxu0 0
        %1596 = vmatprep.mubr.bf16.mxu0 0
        %1597 = vmatmul.mubr.bf16.gmra.mrb[0].mxu0 %v1555
        %v1598 = vpop.f32.mrb[0].mxu0
        %v1599 = vadd.f32 0.0, %v1598
        %v1600 = vpop.f32.mrb[0].mxu0
        %v1601 = vpop.f32.mrb[0].mxu0
        %v1602 = vpop.f32.mrb[0].mxu0
        %1603 = vdwg.mxu0
        %v1604 = vpack.c.bf16 %v1599, %v1599
        %v1605 = vld [vmem:[%s817] sm:$0xf]
        %v1606 = vld [vmem:[%s817 + $0x4] sm:$0xf]
        %v1607 = vld [vmem:[%s817 + $0x8] sm:$0xf]
        %v1608 = vld [vmem:[%s817 + $0xc] sm:$0xf]
        %v1613 = vunpack.c.l.b16 %v1605
        %v1614 = vunpack.c.l.b16 %v1606
        %v1615 = vunpack.c.l.b16 %v1607
        %v1616 = vunpack.c.l.b16 %v1608
        %v1617 = vpack.c.b16 %v1614, %v1613
        %v1618 = vpack.c.b16 %v1616, %v1615
        %v1622 = vsel %vm1492, %v1604, 0
        %1624 = vmatprep.subr.bf16.mxu0 0
        %1625 = vmatpush1.bf16.msra.mxu0 %v1617
        %1626 = vmatprep.subr.bf16.mxu0 0
        %1627 = vmatpush1.bf16.msra.mxu0 %v1618
        %1628 = vmatprep.subr.bf16.mxu0 0
        %1629 = vmatpush1.bf16.msra.mxu0 0
        %1630 = vmatprep.subr.bf16.mxu0 0
        %1631 = vmatpush1.bf16.msra.mxu0 0
        %1632 = vmatprep.subr.bf16.mxu0 0
        %1633 = vmatpush1.bf16.msra.mxu0 0
        %1634 = vmatprep.subr.bf16.mxu0 0
        %1635 = vmatpush1.bf16.msra.mxu0 0
        %1636 = vmatprep.subr.bf16.mxu0 0
        %1637 = vmatpush1.bf16.msra.mxu0 0
        %1638 = vmatprep.subr.bf16.mxu0 0
        %1639 = vmatpush1.bf16.msra.mxu0 0
        %1640 = vmatprep.subr.bf16.mxu0 0
        %1641 = vmatpush1.bf16.msra.mxu0 0
        %1642 = vmatprep.subr.bf16.mxu0 0
        %1643 = vmatpush1.bf16.msra.mxu0 0
        %1644 = vmatprep.subr.bf16.mxu0 0
        %1645 = vmatpush1.bf16.msra.mxu0 0
        %1646 = vmatprep.subr.bf16.mxu0 0
        %1647 = vmatpush1.bf16.msra.mxu0 0
        %1648 = vmatprep.subr.bf16.mxu0 0
        %1649 = vmatpush1.bf16.msra.mxu0 0
        %1650 = vmatprep.subr.bf16.mxu0 0
        %1651 = vmatpush1.bf16.msra.mxu0 0
        %1652 = vmatprep.subr.bf16.mxu0 0
        %1653 = vmatpush1.bf16.msra.mxu0 0
        %1654 = vmatprep.subr.bf16.mxu0 0
        %1655 = vmatpush1.bf16.msra.mxu0 0
        %1656 = vmatprep.mubr.bf16.mxu0 0
        %1657 = vmatmul.mubr.bf16.gmra.mrb[0].mxu0 %v1622
        %v1658 = vpop.f32.mrb[0].mxu0
        %v1659 = vadd.f32 0.0, %v1658
        %v1660 = vpop.f32.mrb[0].mxu0
        %v1661 = vpop.f32.mrb[0].mxu0
        %v1662 = vpop.f32.mrb[0].mxu0
        %1663 = vdwg.mxu0
        %v1665 = vlaneseq
        %v1666 = vshrl.u32 %v1665, 7
        %v1667 = vsub.s32 0, %v1666
        %v1668 = vrot.slane %v1489, %v1667
        %v1670 = vadd.f32 %v1668, %v1659
        %1672 = vrot.lane.b32.xlu0 %v1490, 96
        %v1673 = vpop.permute.xlu0 %1672
        %1675 = vrot.lane.b32.xlu0 %v1491, 96
        %v1676 = vpop.permute.xlu0 %1675
        %v1678 = vsel %vm1492, %v1673, 0
        %v1681 = vsel %vm1492, %v1676, 0
        %1683 = vmatprep.subr.bf16.mxu0 0
        %1684 = vmatpush1.bf16.xpose.msra.mxu0 %v1681
        %1685 = vmatprep.subr.bf16.mxu0 0
        %1686 = vmatpush1.bf16.xpose.msra.mxu0 0
        %1687 = vmatprep.subr.bf16.mxu0 0
        %1688 = vmatpush1.bf16.xpose.msra.mxu0 0
        %1689 = vmatprep.subr.bf16.mxu0 0
        %1690 = vmatpush1.bf16.xpose.msra.mxu0 0
        %1691 = vmatprep.subr.bf16.mxu0 0
        %1692 = vmatpush1.bf16.xpose.msra.mxu0 0
        %1693 = vmatprep.subr.bf16.mxu0 0
        %1694 = vmatpush1.bf16.xpose.msra.mxu0 0
        %1695 = vmatprep.subr.bf16.mxu0 0
        %1696 = vmatpush1.bf16.xpose.msra.mxu0 0
        %1697 = vmatprep.subr.bf16.mxu0 0
        %1698 = vmatpush1.bf16.xpose.msra.mxu0 0
        %1699 = vmatprep.subr.bf16.mxu0 0
        %1700 = vmatpush1.bf16.xpose.msra.mxu0 0
        %1701 = vmatprep.subr.bf16.mxu0 0
        %1702 = vmatpush1.bf16.xpose.msra.mxu0 0
        %1703 = vmatprep.subr.bf16.mxu0 0
        %1704 = vmatpush1.bf16.xpose.msra.mxu0 0
        %1705 = vmatprep.subr.bf16.mxu0 0
        %1706 = vmatpush1.bf16.xpose.msra.mxu0 0
        %1707 = vmatprep.subr.bf16.mxu0 0
        %1708 = vmatpush1.bf16.xpose.msra.mxu0 0
        %1709 = vmatprep.subr.bf16.mxu0 0
        %1710 = vmatpush1.bf16.xpose.msra.mxu0 0
        %1711 = vmatprep.subr.bf16.mxu0 0
        %1712 = vmatpush1.bf16.xpose.msra.mxu0 0
        %1713 = vmatprep.subr.bf16.mxu0 0
        %1714 = vmatpush1.bf16.xpose.msra.mxu0 0
        %1715 = vmatprep.mubr.bf16.mxu0 0
        %1716 = vmatmul.mubr.bf16.gmra.mrb[0].mxu0 %v1678
        %v1717 = vpop.f32.mrb[0].mxu0
        %v1718 = vadd.f32 0.0, %v1717
        %v1719 = vpop.f32.mrb[0].mxu0
        %v1720 = vpop.f32.mrb[0].mxu0
        %v1721 = vpop.f32.mrb[0].mxu0
        %1722 = vdwg.mxu0
        %v1723 = vsel %vm1539, %v1718, -inf
        %1724 = vmax.xlane.f32.xlu0 %v1723
        %v1725 = vpop.xlane.xlu0 %1724
        %v1726 = vsub.f32 %v1718, %v1725
        %v1727 = vmul.f32 %v1726, 1.442695
        %v1728 = vpow.pop %v1727
        %v1729 = vsel %vm1539, %v1728, 0.0
        %1730 = vadd.xlane.f32.xlu0 %v1729
        %v1731 = vpop.xlane.xlu0 %1730
        %v1732 = vrcp.pop %v1731
        %v1733 = vmul.f32 %v1728, %v1732
        %v1734 = vpack.c.bf16 %v1733, %v1733
        %1736 = vrot.lane.b32.xlu0 %v1552, 96
        %v1737 = vpop.permute.xlu0 %1736
        %v1739 = vsel %vm1553, %v1734, 0
        %v1742 = vand.u32 %v1737, %v1560
        %1744 = vmatprep.subr.bf16.mxu0 0
        %1745 = vmatpush1.bf16.msra.mxu0 %v1742
        %1746 = vmatprep.subr.bf16.mxu0 0
        %1747 = vmatpush1.bf16.msra.mxu0 0
        %1748 = vmatprep.subr.bf16.mxu0 0
        %1749 = vmatpush1.bf16.msra.mxu0 0
        %1750 = vmatprep.subr.bf16.mxu0 0
        %1751 = vmatpush1.bf16.msra.mxu0 0
        %1752 = vmatprep.subr.bf16.mxu0 0
        %1753 = vmatpush1.bf16.msra.mxu0 0
        %1754 = vmatprep.subr.bf16.mxu0 0
        %1755 = vmatpush1.bf16.msra.mxu0 0
        %1756 = vmatprep.subr.bf16.mxu0 0
        %1757 = vmatpush1.bf16.msra.mxu0 0
        %1758 = vmatprep.subr.bf16.mxu0 0
        %1759 = vmatpush1.bf16.msra.mxu0 0
        %1760 = vmatprep.subr.bf16.mxu0 0
        %1761 = vmatpush1.bf16.msra.mxu0 0
        %1762 = vmatprep.subr.bf16.mxu0 0
        %1763 = vmatpush1.bf16.msra.mxu0 0
        %1764 = vmatprep.subr.bf16.mxu0 0
        %1765 = vmatpush1.bf16.msra.mxu0 0
        %1766 = vmatprep.subr.bf16.mxu0 0
        %1767 = vmatpush1.bf16.msra.mxu0 0
        %1768 = vmatprep.subr.bf16.mxu0 0
        %1769 = vmatpush1.bf16.msra.mxu0 0
        %1770 = vmatprep.subr.bf16.mxu0 0
        %1771 = vmatpush1.bf16.msra.mxu0 0
        %1772 = vmatprep.subr.bf16.mxu0 0
        %1773 = vmatpush1.bf16.msra.mxu0 0
        %1774 = vmatprep.subr.bf16.mxu0 0
        %1775 = vmatpush1.bf16.msra.mxu0 0
        %1776 = vmatprep.mubr.bf16.mxu0 0
        %1777 = vmatmul.mubr.bf16.gmra.mrb[0].mxu0 %v1739
        %v1778 = vpop.f32.mrb[0].mxu0
        %v1779 = vadd.f32 0.0, %v1778
        %v1780 = vpop.f32.mrb[0].mxu0
        %v1781 = vpop.f32.mrb[0].mxu0
        %v1782 = vpop.f32.mrb[0].mxu0
        %1783 = vdwg.mxu0
        %v1784 = vpack.c.bf16 %v1779, %v1779
        %v1785 = vld [vmem:[%s817 + $0x10] sm:$0xf]
        %v1786 = vld [vmem:[%s817 + $0x14] sm:$0xf]
        %v1787 = vld [vmem:[%s817 + $0x18] sm:$0xf]
        %v1788 = vld [vmem:[%s817 + $0x1c] sm:$0xf]
        %v1793 = vunpack.c.l.b16 %v1785
        %v1794 = vunpack.c.l.b16 %v1786
        %v1795 = vunpack.c.l.b16 %v1787
        %v1796 = vunpack.c.l.b16 %v1788
        %v1797 = vpack.c.b16 %v1794, %v1793
        %v1798 = vpack.c.b16 %v1796, %v1795
        %v1802 = vsel %vm1492, %v1784, 0
        %1804 = vmatprep.subr.bf16.mxu0 0
        %1805 = vmatpush1.bf16.msra.mxu0 %v1797
        %1806 = vmatprep.subr.bf16.mxu0 0
        %1807 = vmatpush1.bf16.msra.mxu0 %v1798
        %1808 = vmatprep.subr.bf16.mxu0 0
        %1809 = vmatpush1.bf16.msra.mxu0 0
        %1810 = vmatprep.subr.bf16.mxu0 0
        %1811 = vmatpush1.bf16.msra.mxu0 0
        %1812 = vmatprep.subr.bf16.mxu0 0
        %1813 = vmatpush1.bf16.msra.mxu0 0
        %1814 = vmatprep.subr.bf16.mxu0 0
        %1815 = vmatpush1.bf16.msra.mxu0 0
        %1816 = vmatprep.subr.bf16.mxu0 0
        %1817 = vmatpush1.bf16.msra.mxu0 0
        %1818 = vmatprep.subr.bf16.mxu0 0
        %1819 = vmatpush1.bf16.msra.mxu0 0
        %1820 = vmatprep.subr.bf16.mxu0 0
        %1821 = vmatpush1.bf16.msra.mxu0 0
        %1822 = vmatprep.subr.bf16.mxu0 0
        %1823 = vmatpush1.bf16.msra.mxu0 0
        %1824 = vmatprep.subr.bf16.mxu0 0
        %1825 = vmatpush1.bf16.msra.mxu0 0
        %1826 = vmatprep.subr.bf16.mxu0 0
        %1827 = vmatpush1.bf16.msra.mxu0 0
        %1828 = vmatprep.subr.bf16.mxu0 0
        %1829 = vmatpush1.bf16.msra.mxu0 0
        %1830 = vmatprep.subr.bf16.mxu0 0
        %1831 = vmatpush1.bf16.msra.mxu0 0
        %1832 = vmatprep.subr.bf16.mxu0 0
        %1833 = vmatpush1.bf16.msra.mxu0 0
        %1834 = vmatprep.subr.bf16.mxu0 0
        %1835 = vmatpush1.bf16.msra.mxu0 0
        %1836 = vmatprep.mubr.bf16.mxu0 0
        %1837 = vmatmul.mubr.bf16.gmra.mrb[0].mxu0 %v1802
        %v1838 = vpop.f32.mrb[0].mxu0
        %v1839 = vadd.f32 0.0, %v1838
        %v1840 = vpop.f32.mrb[0].mxu0
        %v1841 = vpop.f32.mrb[0].mxu0
        %v1842 = vpop.f32.mrb[0].mxu0
        %1843 = vdwg.mxu0
        %v1844 = vadd.f32 %v1670, %v1839
        %1845 = vrot.lane.b32.xlu0 %v1490, 64
        %v1846 = vpop.permute.xlu0 %1845
        %1847 = vrot.lane.b32.xlu0 %v1491, 64
        %v1848 = vpop.permute.xlu0 %1847
        %v1850 = vsel %vm1492, %v1846, 0
        %v1853 = vsel %vm1492, %v1848, 0
        %1855 = vmatprep.subr.bf16.mxu0 0
        %1856 = vmatpush1.bf16.xpose.msra.mxu0 %v1853
        %1857 = vmatprep.subr.bf16.mxu0 0
        %1858 = vmatpush1.bf16.xpose.msra.mxu0 0
        %1859 = vmatprep.subr.bf16.mxu0 0
        %1860 = vmatpush1.bf16.xpose.msra.mxu0 0
        %1861 = vmatprep.subr.bf16.mxu0 0
        %1862 = vmatpush1.bf16.xpose.msra.mxu0 0
        %1863 = vmatprep.subr.bf16.mxu0 0
        %1864 = vmatpush1.bf16.xpose.msra.mxu0 0
        %1865 = vmatprep.subr.bf16.mxu0 0
        %1866 = vmatpush1.bf16.xpose.msra.mxu0 0
        %1867 = vmatprep.subr.bf16.mxu0 0
        %1868 = vmatpush1.bf16.xpose.msra.mxu0 0
        %1869 = vmatprep.subr.bf16.mxu0 0
        %1870 = vmatpush1.bf16.xpose.msra.mxu0 0
        %1871 = vmatprep.subr.bf16.mxu0 0
        %1872 = vmatpush1.bf16.xpose.msra.mxu0 0
        %1873 = vmatprep.subr.bf16.mxu0 0
        %1874 = vmatpush1.bf16.xpose.msra.mxu0 0
        %1875 = vmatprep.subr.bf16.mxu0 0
        %1876 = vmatpush1.bf16.xpose.msra.mxu0 0
        %1877 = vmatprep.subr.bf16.mxu0 0
        %1878 = vmatpush1.bf16.xpose.msra.mxu0 0
        %1879 = vmatprep.subr.bf16.mxu0 0
        %1880 = vmatpush1.bf16.xpose.msra.mxu0 0
        %1881 = vmatprep.subr.bf16.mxu0 0
        %1882 = vmatpush1.bf16.xpose.msra.mxu0 0
        %1883 = vmatprep.subr.bf16.mxu0 0
        %1884 = vmatpush1.bf16.xpose.msra.mxu0 0
        %1885 = vmatprep.subr.bf16.mxu0 0
        %1886 = vmatpush1.bf16.xpose.msra.mxu0 0
        %1887 = vmatprep.mubr.bf16.mxu0 0
        %1888 = vmatmul.mubr.bf16.gmra.mrb[0].mxu0 %v1850
        %v1889 = vpop.f32.mrb[0].mxu0
        %v1890 = vadd.f32 0.0, %v1889
        %v1891 = vpop.f32.mrb[0].mxu0
        %v1892 = vpop.f32.mrb[0].mxu0
        %v1893 = vpop.f32.mrb[0].mxu0
        %1894 = vdwg.mxu0
        %v1895 = vsel %vm1539, %v1890, -inf
        %1896 = vmax.xlane.f32.xlu0 %v1895
        %v1897 = vpop.xlane.xlu0 %1896
        %v1898 = vsub.f32 %v1890, %v1897
        %v1899 = vmul.f32 %v1898, 1.442695
        %v1900 = vpow.pop %v1899
        %v1901 = vsel %vm1539, %v1900, 0.0
        %1902 = vadd.xlane.f32.xlu0 %v1901
        %v1903 = vpop.xlane.xlu0 %1902
        %v1904 = vrcp.pop %v1903
        %v1905 = vmul.f32 %v1900, %v1904
        %v1906 = vpack.c.bf16 %v1905, %v1905
        %1907 = vrot.lane.b32.xlu0 %v1552, 64
        %v1908 = vpop.permute.xlu0 %1907
        %v1910 = vsel %vm1553, %v1906, 0
        %v1913 = vand.u32 %v1908, %v1560
        %1915 = vmatprep.subr.bf16.mxu0 0
        %1916 = vmatpush1.bf16.msra.mxu0 %v1913
        %1917 = vmatprep.subr.bf16.mxu0 0
        %1918 = vmatpush1.bf16.msra.mxu0 0
        %1919 = vmatprep.subr.bf16.mxu0 0
        %1920 = vmatpush1.bf16.msra.mxu0 0
        %1921 = vmatprep.subr.bf16.mxu0 0
        %1922 = vmatpush1.bf16.msra.mxu0 0
        %1923 = vmatprep.subr.bf16.mxu0 0
        %1924 = vmatpush1.bf16.msra.mxu0 0
        %1925 = vmatprep.subr.bf16.mxu0 0
        %1926 = vmatpush1.bf16.msra.mxu0 0
        %1927 = vmatprep.subr.bf16.mxu0 0
        %1928 = vmatpush1.bf16.msra.mxu0 0
        %1929 = vmatprep.subr.bf16.mxu0 0
        %1930 = vmatpush1.bf16.msra.mxu0 0
        %1931 = vmatprep.subr.bf16.mxu0 0
        %1932 = vmatpush1.bf16.msra.mxu0 0
        %1933 = vmatprep.subr.bf16.mxu0 0
        %1934 = vmatpush1.bf16.msra.mxu0 0
        %1935 = vmatprep.subr.bf16.mxu0 0
        %1936 = vmatpush1.bf16.msra.mxu0 0
        %1937 = vmatprep.subr.bf16.mxu0 0
        %1938 = vmatpush1.bf16.msra.mxu0 0
        %1939 = vmatprep.subr.bf16.mxu0 0
        %1940 = vmatpush1.bf16.msra.mxu0 0
        %1941 = vmatprep.subr.bf16.mxu0 0
        %1942 = vmatpush1.bf16.msra.mxu0 0
        %1943 = vmatprep.subr.bf16.mxu0 0
        %1944 = vmatpush1.bf16.msra.mxu0 0
        %1945 = vmatprep.subr.bf16.mxu0 0
        %1946 = vmatpush1.bf16.msra.mxu0 0
        %1947 = vmatprep.mubr.bf16.mxu0 0
        %1948 = vmatmul.mubr.bf16.gmra.mrb[0].mxu0 %v1910
        %v1949 = vpop.f32.mrb[0].mxu0
        %v1950 = vadd.f32 0.0, %v1949
        %v1951 = vpop.f32.mrb[0].mxu0
        %v1952 = vpop.f32.mrb[0].mxu0
        %v1953 = vpop.f32.mrb[0].mxu0
        %1954 = vdwg.mxu0
        %v1955 = vpack.c.bf16 %v1950, %v1950
        %v1956 = vld [vmem:[%s817 + $0x20] sm:$0xf]
        %v1957 = vld [vmem:[%s817 + $0x24] sm:$0xf]
        %v1958 = vld [vmem:[%s817 + $0x28] sm:$0xf]
        %v1959 = vld [vmem:[%s817 + $0x2c] sm:$0xf]
        %v1964 = vunpack.c.l.b16 %v1956
        %v1965 = vunpack.c.l.b16 %v1957
        %v1966 = vunpack.c.l.b16 %v1958
        %v1967 = vunpack.c.l.b16 %v1959
        %v1968 = vpack.c.b16 %v1965, %v1964
        %v1969 = vpack.c.b16 %v1967, %v1966
        %v1973 = vsel %vm1492, %v1955, 0
        %1975 = vmatprep.subr.bf16.mxu0 0
        %1976 = vmatpush1.bf16.msra.mxu0 %v1968
        %1977 = vmatprep.subr.bf16.mxu0 0
        %1978 = vmatpush1.bf16.msra.mxu0 %v1969
        %1979 = vmatprep.subr.bf16.mxu0 0
        %1980 = vmatpush1.bf16.msra.mxu0 0
        %1981 = vmatprep.subr.bf16.mxu0 0
        %1982 = vmatpush1.bf16.msra.mxu0 0
        %1983 = vmatprep.subr.bf16.mxu0 0
        %1984 = vmatpush1.bf16.msra.mxu0 0
        %1985 = vmatprep.subr.bf16.mxu0 0
        %1986 = vmatpush1.bf16.msra.mxu0 0
        %1987 = vmatprep.subr.bf16.mxu0 0
        %1988 = vmatpush1.bf16.msra.mxu0 0
        %1989 = vmatprep.subr.bf16.mxu0 0
        %1990 = vmatpush1.bf16.msra.mxu0 0
        %1991 = vmatprep.subr.bf16.mxu0 0
        %1992 = vmatpush1.bf16.msra.mxu0 0
        %1993 = vmatprep.subr.bf16.mxu0 0
        %1994 = vmatpush1.bf16.msra.mxu0 0
        %1995 = vmatprep.subr.bf16.mxu0 0
        %1996 = vmatpush1.bf16.msra.mxu0 0
        %1997 = vmatprep.subr.bf16.mxu0 0
        %1998 = vmatpush1.bf16.msra.mxu0 0
        %1999 = vmatprep.subr.bf16.mxu0 0
        %2000 = vmatpush1.bf16.msra.mxu0 0
        %2001 = vmatprep.subr.bf16.mxu0 0
        %2002 = vmatpush1.bf16.msra.mxu0 0
        %2003 = vmatprep.subr.bf16.mxu0 0
        %2004 = vmatpush1.bf16.msra.mxu0 0
        %2005 = vmatprep.subr.bf16.mxu0 0
        %2006 = vmatpush1.bf16.msra.mxu0 0
        %2007 = vmatprep.mubr.bf16.mxu0 0
        %2008 = vmatmul.mubr.bf16.gmra.mrb[0].mxu0 %v1973
        %v2009 = vpop.f32.mrb[0].mxu0
        %v2010 = vadd.f32 0.0, %v2009
        %v2011 = vpop.f32.mrb[0].mxu0
        %v2012 = vpop.f32.mrb[0].mxu0
        %v2013 = vpop.f32.mrb[0].mxu0
        %2014 = vdwg.mxu0
        %v2015 = vadd.f32 %v1844, %v2010
        %2016 = vrot.lane.b32.xlu0 %v1490, 32
        %v2017 = vpop.permute.xlu0 %2016
        %2018 = vrot.lane.b32.xlu0 %v1491, 32
        %v2019 = vpop.permute.xlu0 %2018
        %v2021 = vsel %vm1492, %v2017, 0
        %v2024 = vsel %vm1492, %v2019, 0
        %2026 = vmatprep.subr.bf16.mxu0 0
        %2027 = vmatpush1.bf16.xpose.msra.mxu0 %v2024
        %2028 = vmatprep.subr.bf16.mxu0 0
        %2029 = vmatpush1.bf16.xpose.msra.mxu0 0
        %2030 = vmatprep.subr.bf16.mxu0 0
        %2031 = vmatpush1.bf16.xpose.msra.mxu0 0
        %2032 = vmatprep.subr.bf16.mxu0 0
        %2033 = vmatpush1.bf16.xpose.msra.mxu0 0
        %2034 = vmatprep.subr.bf16.mxu0 0
        %2035 = vmatpush1.bf16.xpose.msra.mxu0 0
        %2036 = vmatprep.subr.bf16.mxu0 0
        %2037 = vmatpush1.bf16.xpose.msra.mxu0 0
        %2038 = vmatprep.subr.bf16.mxu0 0
        %2039 = vmatpush1.bf16.xpose.msra.mxu0 0
        %2040 = vmatprep.subr.bf16.mxu0 0
        %2041 = vmatpush1.bf16.xpose.msra.mxu0 0
        %2042 = vmatprep.subr.bf16.mxu0 0
        %2043 = vmatpush1.bf16.xpose.msra.mxu0 0
        %2044 = vmatprep.subr.bf16.mxu0 0
        %2045 = vmatpush1.bf16.xpose.msra.mxu0 0
        %2046 = vmatprep.subr.bf16.mxu0 0
        %2047 = vmatpush1.bf16.xpose.msra.mxu0 0
        %2048 = vmatprep.subr.bf16.mxu0 0
        %2049 = vmatpush1.bf16.xpose.msra.mxu0 0
        %2050 = vmatprep.subr.bf16.mxu0 0
        %2051 = vmatpush1.bf16.xpose.msra.mxu0 0
        %2052 = vmatprep.subr.bf16.mxu0 0
        %2053 = vmatpush1.bf16.xpose.msra.mxu0 0
        %2054 = vmatprep.subr.bf16.mxu0 0
        %2055 = vmatpush1.bf16.xpose.msra.mxu0 0
        %2056 = vmatprep.subr.bf16.mxu0 0
        %2057 = vmatpush1.bf16.xpose.msra.mxu0 0
        %2058 = vmatprep.mubr.bf16.mxu0 0
        %2059 = vmatmul.mubr.bf16.gmra.mrb[0].mxu0 %v2021
        %v2060 = vpop.f32.mrb[0].mxu0
        %v2061 = vadd.f32 0.0, %v2060
        %v2062 = vpop.f32.mrb[0].mxu0
        %v2063 = vpop.f32.mrb[0].mxu0
        %v2064 = vpop.f32.mrb[0].mxu0
        %2065 = vdwg.mxu0
        %v2066 = vsel %vm1539, %v2061, -inf
        %2067 = vmax.xlane.f32.xlu0 %v2066
        %v2068 = vpop.xlane.xlu0 %2067
        %v2069 = vsub.f32 %v2061, %v2068
        %v2070 = vmul.f32 %v2069, 1.442695
        %v2071 = vpow.pop %v2070
        %v2072 = vsel %vm1539, %v2071, 0.0
        %2073 = vadd.xlane.f32.xlu0 %v2072
        %v2074 = vpop.xlane.xlu0 %2073
        %v2075 = vrcp.pop %v2074
        %v2076 = vmul.f32 %v2071, %v2075
        %v2077 = vpack.c.bf16 %v2076, %v2076
        %2078 = vrot.lane.b32.xlu0 %v1552, 32
        %v2079 = vpop.permute.xlu0 %2078
        %v2081 = vsel %vm1553, %v2077, 0
        %v2084 = vand.u32 %v2079, %v1560
        %2086 = vmatprep.subr.bf16.mxu0 0
        %2087 = vmatpush1.bf16.msra.mxu0 %v2084
        %2088 = vmatprep.subr.bf16.mxu0 0
        %2089 = vmatpush1.bf16.msra.mxu0 0
        %2090 = vmatprep.subr.bf16.mxu0 0
        %2091 = vmatpush1.bf16.msra.mxu0 0
        %2092 = vmatprep.subr.bf16.mxu0 0
        %2093 = vmatpush1.bf16.msra.mxu0 0
        %2094 = vmatprep.subr.bf16.mxu0 0
        %2095 = vmatpush1.bf16.msra.mxu0 0
        %2096 = vmatprep.subr.bf16.mxu0 0
        %2097 = vmatpush1.bf16.msra.mxu0 0
        %2098 = vmatprep.subr.bf16.mxu0 0
        %2099 = vmatpush1.bf16.msra.mxu0 0
        %2100 = vmatprep.subr.bf16.mxu0 0
        %2101 = vmatpush1.bf16.msra.mxu0 0
        %2102 = vmatprep.subr.bf16.mxu0 0
        %2103 = vmatpush1.bf16.msra.mxu0 0
        %2104 = vmatprep.subr.bf16.mxu0 0
        %2105 = vmatpush1.bf16.msra.mxu0 0
        %2106 = vmatprep.subr.bf16.mxu0 0
        %2107 = vmatpush1.bf16.msra.mxu0 0
        %2108 = vmatprep.subr.bf16.mxu0 0
        %2109 = vmatpush1.bf16.msra.mxu0 0
        %2110 = vmatprep.subr.bf16.mxu0 0
        %2111 = vmatpush1.bf16.msra.mxu0 0
        %2112 = vmatprep.subr.bf16.mxu0 0
        %2113 = vmatpush1.bf16.msra.mxu0 0
        %2114 = vmatprep.subr.bf16.mxu0 0
        %2115 = vmatpush1.bf16.msra.mxu0 0
        %2116 = vmatprep.subr.bf16.mxu0 0
        %2117 = vmatpush1.bf16.msra.mxu0 0
        %2118 = vmatprep.mubr.bf16.mxu0 0
        %2119 = vmatmul.mubr.bf16.gmra.mrb[0].mxu0 %v2081
        %v2120 = vpop.f32.mrb[0].mxu0
        %v2121 = vadd.f32 0.0, %v2120
        %v2122 = vpop.f32.mrb[0].mxu0
        %v2123 = vpop.f32.mrb[0].mxu0
        %v2124 = vpop.f32.mrb[0].mxu0
        %2125 = vdwg.mxu0
        %v2126 = vpack.c.bf16 %v2121, %v2121
        %v2127 = vld [vmem:[%s817 + $0x30] sm:$0xf]
        %v2128 = vld [vmem:[%s817 + $0x34] sm:$0xf]
        %v2129 = vld [vmem:[%s817 + $0x38] sm:$0xf]
        %v2130 = vld [vmem:[%s817 + $0x3c] sm:$0xf]
        %v2135 = vunpack.c.l.b16 %v2127
        %v2136 = vunpack.c.l.b16 %v2128
        %v2137 = vunpack.c.l.b16 %v2129
        %v2138 = vunpack.c.l.b16 %v2130
        %v2139 = vpack.c.b16 %v2136, %v2135
        %v2140 = vpack.c.b16 %v2138, %v2137
        %v2144 = vsel %vm1492, %v2126, 0
        %2146 = vmatprep.subr.bf16.mxu0 0
        %2147 = vmatpush1.bf16.msra.mxu0 %v2139
        %2148 = vmatprep.subr.bf16.mxu0 0
        %2149 = vmatpush1.bf16.msra.mxu0 %v2140
        %2150 = vmatprep.subr.bf16.mxu0 0
        %2151 = vmatpush1.bf16.msra.mxu0 0
        %2152 = vmatprep.subr.bf16.mxu0 0
        %2153 = vmatpush1.bf16.msra.mxu0 0
        %2154 = vmatprep.subr.bf16.mxu0 0
        %2155 = vmatpush1.bf16.msra.mxu0 0
        %2156 = vmatprep.subr.bf16.mxu0 0
        %2157 = vmatpush1.bf16.msra.mxu0 0
        %2158 = vmatprep.subr.bf16.mxu0 0
        %2159 = vmatpush1.bf16.msra.mxu0 0
        %2160 = vmatprep.subr.bf16.mxu0 0
        %2161 = vmatpush1.bf16.msra.mxu0 0
        %2162 = vmatprep.subr.bf16.mxu0 0
        %2163 = vmatpush1.bf16.msra.mxu0 0
        %2164 = vmatprep.subr.bf16.mxu0 0
        %2165 = vmatpush1.bf16.msra.mxu0 0
        %2166 = vmatprep.subr.bf16.mxu0 0
        %2167 = vmatpush1.bf16.msra.mxu0 0
        %2168 = vmatprep.subr.bf16.mxu0 0
        %2169 = vmatpush1.bf16.msra.mxu0 0
        %2170 = vmatprep.subr.bf16.mxu0 0
        %2171 = vmatpush1.bf16.msra.mxu0 0
        %2172 = vmatprep.subr.bf16.mxu0 0
        %2173 = vmatpush1.bf16.msra.mxu0 0
        %2174 = vmatprep.subr.bf16.mxu0 0
        %2175 = vmatpush1.bf16.msra.mxu0 0
        %2176 = vmatprep.subr.bf16.mxu0 0
        %2177 = vmatpush1.bf16.msra.mxu0 0
        %2178 = vmatprep.mubr.bf16.mxu0 0
        %2179 = vmatmul.mubr.bf16.gmra.mrb[0].mxu0 %v2144
        %v2180 = vpop.f32.mrb[0].mxu0
        %v2181 = vadd.f32 0.0, %v2180
        %v2182 = vpop.f32.mrb[0].mxu0
        %v2183 = vpop.f32.mrb[0].mxu0
        %v2184 = vpop.f32.mrb[0].mxu0
        %2185 = vdwg.mxu0
        %v2186 = vadd.f32 %v2015, %v2181
        %v2187 = vadd.f32 %v1198, %v2186
        %v2188 = vld [vmem:[%s823] sm:$0x1]
        %v2189 = vld [vmem:[%s826] sm:$0x1]
        %v2190 = vsel %vm1201, %v2187, 0.0
        %2191 = vadd.xlane.f32.xlu0 %v2190
        %v2192 = vpop.xlane.xlu0 %2191
        %v2193 = vmul.f32 %v2192, %v1205
        %v2194 = vsub.f32 %v2187, %v2193
        %v2195 = vmul.f32 %v2194, %v2194
        %v2196 = vsel %vm1201, %v2195, 0.0
        %2197 = vadd.xlane.f32.xlu0 %v2196
        %v2198 = vpop.xlane.xlu0 %2197
        %v2199 = vmul.f32 %v2198, %v1205
        %v2200 = vadd.f32 %v2199, 1e-05
        %v2201 = vrsqrt.pop %v2200
        %v2202 = vmul.f32 %v2194, %v2201
        %v2204 = vlaneseq
        %v2205 = vshrl.u32 %v2204, 7
        %v2206 = vsub.s32 0, %v2205
        %v2207 = vrot.slane %v2188, %v2206
        %v2209 = vmul.f32 %v2202, %v2207
        %v2211 = vlaneseq
        %v2212 = vshrl.u32 %v2211, 7
        %v2213 = vsub.s32 0, %v2212
        %v2214 = vrot.slane %v2189, %v2213
        %v2216 = vadd.f32 %v2209, %v2214
        %v2217 = vpack.c.bf16 %v2216, %v2216
        %v2218 = vld [vmem:[%s831] sm:$0xff]
        %v2219 = vld [vmem:[%s831 + $0x8] sm:$0xff]
        %v2220 = vld [vmem:[%s831 + $0x10] sm:$0xff]
        %v2221 = vld [vmem:[%s831 + $0x18] sm:$0xff]
        %v2222 = vld [vmem:[%s831 + $0x20] sm:$0xff]
        %v2223 = vld [vmem:[%s831 + $0x28] sm:$0xff]
        %v2224 = vld [vmem:[%s831 + $0x30] sm:$0xff]
        %v2225 = vld [vmem:[%s831 + $0x38] sm:$0xff]
        %v2226 = vld [vmem:[%s831 + $0x40] sm:$0xff]
        %v2227 = vld [vmem:[%s831 + $0x48] sm:$0xff]
        %v2228 = vld [vmem:[%s831 + $0x50] sm:$0xff]
        %v2229 = vld [vmem:[%s831 + $0x58] sm:$0xff]
        %v2230 = vld [vmem:[%s831 + $0x60] sm:$0xff]
        %v2231 = vld [vmem:[%s831 + $0x68] sm:$0xff]
        %v2232 = vld [vmem:[%s831 + $0x70] sm:$0xff]
        %v2233 = vld [vmem:[%s831 + $0x78] sm:$0xff]
        %v2234 = vld [vmem:[%s835] sm:$0x3]
        %v2236 = vlaneseq
        %v2237 = vshrl.u32 %v2236, 7
        %v2238 = vsub.s32 0, %v2237
        %v2239 = vrot.slane %v2234, %v2238
        %v2240 = vlaneseq
        %v2241 = vshrl.u32 %v2240, 7
        %v2242 = vsub.s32 1, %v2241
        %v2243 = vrot.slane %v2234, %v2242
        %v2262 = vunpack.c.l.b16 %v2218
        %v2263 = vunpack.c.h.b16 %v2218
        %v2264 = vunpack.c.l.b16 %v2219
        %v2265 = vunpack.c.h.b16 %v2219
        %v2266 = vunpack.c.l.b16 %v2220
        %v2267 = vunpack.c.h.b16 %v2220
        %v2268 = vunpack.c.l.b16 %v2221
        %v2269 = vunpack.c.h.b16 %v2221
        %v2270 = vunpack.c.l.b16 %v2222
        %v2271 = vunpack.c.h.b16 %v2222
        %v2272 = vunpack.c.l.b16 %v2223
        %v2273 = vunpack.c.h.b16 %v2223
        %v2274 = vunpack.c.l.b16 %v2224
        %v2275 = vunpack.c.h.b16 %v2224
        %v2276 = vunpack.c.l.b16 %v2225
        %v2277 = vunpack.c.h.b16 %v2225
        %v2278 = vunpack.c.l.b16 %v2226
        %v2279 = vunpack.c.h.b16 %v2226
        %v2280 = vunpack.c.l.b16 %v2227
        %v2281 = vunpack.c.h.b16 %v2227
        %v2282 = vunpack.c.l.b16 %v2228
        %v2283 = vunpack.c.h.b16 %v2228
        %v2284 = vunpack.c.l.b16 %v2229
        %v2285 = vunpack.c.h.b16 %v2229
        %v2286 = vunpack.c.l.b16 %v2230
        %v2287 = vunpack.c.h.b16 %v2230
        %v2288 = vunpack.c.l.b16 %v2231
        %v2289 = vunpack.c.h.b16 %v2231
        %v2290 = vunpack.c.l.b16 %v2232
        %v2291 = vunpack.c.h.b16 %v2232
        %v2292 = vunpack.c.l.b16 %v2233
        %v2293 = vunpack.c.h.b16 %v2233
        %v2294 = vpack.c.b16 %v2264, %v2262
        %v2295 = vpack.c.b16 %v2265, %v2263
        %v2296 = vpack.c.b16 %v2268, %v2266
        %v2297 = vpack.c.b16 %v2269, %v2267
        %v2298 = vpack.c.b16 %v2272, %v2270
        %v2299 = vpack.c.b16 %v2273, %v2271
        %v2300 = vpack.c.b16 %v2276, %v2274
        %v2301 = vpack.c.b16 %v2277, %v2275
        %v2302 = vpack.c.b16 %v2280, %v2278
        %v2303 = vpack.c.b16 %v2281, %v2279
        %v2304 = vpack.c.b16 %v2284, %v2282
        %v2305 = vpack.c.b16 %v2285, %v2283
        %v2306 = vpack.c.b16 %v2288, %v2286
        %v2307 = vpack.c.b16 %v2289, %v2287
        %v2308 = vpack.c.b16 %v2292, %v2290
        %v2309 = vpack.c.b16 %v2293, %v2291
        %2326 = vmatprep.subr.bf16.mxu0 %v2295
        %2327 = vmatpush1.bf16.msra.mxu0 %v2294
        %2328 = vmatprep.subr.bf16.mxu0 %v2297
        %2329 = vmatpush1.bf16.msra.mxu0 %v2296
        %2330 = vmatprep.subr.bf16.mxu0 %v2299
        %2331 = vmatpush1.bf16.msra.mxu0 %v2298
        %2332 = vmatprep.subr.bf16.mxu0 %v2301
        %2333 = vmatpush1.bf16.msra.mxu0 %v2300
        %2334 = vmatprep.subr.bf16.mxu0 %v2303
        %2335 = vmatpush1.bf16.msra.mxu0 %v2302
        %2336 = vmatprep.subr.bf16.mxu0 %v2305
        %2337 = vmatpush1.bf16.msra.mxu0 %v2304
        %2338 = vmatprep.subr.bf16.mxu0 %v2307
        %2339 = vmatpush1.bf16.msra.mxu0 %v2306
        %2340 = vmatprep.subr.bf16.mxu0 %v2309
        %2341 = vmatpush1.bf16.msra.mxu0 %v2308
        %2342 = vmatprep.subr.bf16.mxu0 0
        %2343 = vmatpush1.bf16.msra.mxu0 0
        %2344 = vmatprep.subr.bf16.mxu0 0
        %2345 = vmatpush1.bf16.msra.mxu0 0
        %2346 = vmatprep.subr.bf16.mxu0 0
        %2347 = vmatpush1.bf16.msra.mxu0 0
        %2348 = vmatprep.subr.bf16.mxu0 0
        %2349 = vmatpush1.bf16.msra.mxu0 0
        %2350 = vmatprep.subr.bf16.mxu0 0
        %2351 = vmatpush1.bf16.msra.mxu0 0
        %2352 = vmatprep.subr.bf16.mxu0 0
        %2353 = vmatpush1.bf16.msra.mxu0 0
        %2354 = vmatprep.subr.bf16.mxu0 0
        %2355 = vmatpush1.bf16.msra.mxu0 0
        %2356 = vmatprep.subr.bf16.mxu0 0
        %2357 = vmatpush1.bf16.msra.mxu0 0
        %2358 = vmatprep.mubr.bf16.mxu0 0
        %2359 = vmatmul.mubr.bf16.gmra.mrb[0].mxu0 %v2217
        %v2360 = vpop.f32.mrb[0].mxu0
        %v2361 = vadd.f32 %v2239, %v2360
        %v2362 = vpop.f32.mrb[0].mxu0
        %v2363 = vadd.f32 %v2243, %v2362
        %v2364 = vpop.f32.mrb[0].mxu0
        %v2365 = vpop.f32.mrb[0].mxu0
        %2366 = vdwg.mxu0
        %v2367 = vmul.f32 %v2361, 1.702
        %v2368 = vmul.f32 %v2363, 1.702
        %v2369 = vxor.u32 %v2367, 2147483648
        %v2370 = vxor.u32 %v2368, 2147483648
        %v2371 = vmul.f32 %v2369, 1.442695
        %v2372 = vpow.pop %v2371
        %v2373 = vmul.f32 %v2370, 1.442695
        %v2374 = vpow.pop %v2373
        %v2375 = vadd.f32 %v2372, 1.0
        %v2376 = vadd.f32 %v2374, 1.0
        %v2377 = vrcp.pop %v2375
        %v2378 = vmul.f32 1.0, %v2377
        %v2379 = vrcp.pop %v2376
        %v2380 = vmul.f32 1.0, %v2379
        %v2381 = vmul.f32 %v2361, %v2378
        %v2382 = vmul.f32 %v2363, %v2380
        %v2383 = vpack.c.bf16 %v2381, %v2381
        %v2384 = vpack.c.bf16 %v2382, %v2382
        %v2385 = vld [vmem:[%s840] sm:$0xf]
        %v2386 = vld [vmem:[%s840 + $0x4] sm:$0xf]
        %v2387 = vld [vmem:[%s840 + $0x8] sm:$0xf]
        %v2388 = vld [vmem:[%s840 + $0xc] sm:$0xf]
        %v2389 = vld [vmem:[%s840 + $0x10] sm:$0xf]
        %v2390 = vld [vmem:[%s840 + $0x14] sm:$0xf]
        %v2391 = vld [vmem:[%s840 + $0x18] sm:$0xf]
        %v2392 = vld [vmem:[%s840 + $0x1c] sm:$0xf]
        %v2393 = vld [vmem:[%s840 + $0x20] sm:$0xf]
        %v2394 = vld [vmem:[%s840 + $0x24] sm:$0xf]
        %v2395 = vld [vmem:[%s840 + $0x28] sm:$0xf]
        %v2396 = vld [vmem:[%s840 + $0x2c] sm:$0xf]
        %v2397 = vld [vmem:[%s840 + $0x30] sm:$0xf]
        %v2398 = vld [vmem:[%s840 + $0x34] sm:$0xf]
        %v2399 = vld [vmem:[%s840 + $0x38] sm:$0xf]
        %v2400 = vld [vmem:[%s840 + $0x3c] sm:$0xf]
        %v2401 = vld [vmem:[%s840 + $0x40] sm:$0xf]
        %v2402 = vld [vmem:[%s840 + $0x44] sm:$0xf]
        %v2403 = vld [vmem:[%s840 + $0x48] sm:$0xf]
        %v2404 = vld [vmem:[%s840 + $0x4c] sm:$0xf]
        %v2405 = vld [vmem:[%s840 + $0x50] sm:$0xf]
        %v2406 = vld [vmem:[%s840 + $0x54] sm:$0xf]
        %v2407 = vld [vmem:[%s840 + $0x58] sm:$0xf]
        %v2408 = vld [vmem:[%s840 + $0x5c] sm:$0xf]
        %v2409 = vld [vmem:[%s840 + $0x60] sm:$0xf]
        %v2410 = vld [vmem:[%s840 + $0x64] sm:$0xf]
        %v2411 = vld [vmem:[%s840 + $0x68] sm:$0xf]
        %v2412 = vld [vmem:[%s840 + $0x6c] sm:$0xf]
        %v2413 = vld [vmem:[%s840 + $0x70] sm:$0xf]
        %v2414 = vld [vmem:[%s840 + $0x74] sm:$0xf]
        %v2415 = vld [vmem:[%s840 + $0x78] sm:$0xf]
        %v2416 = vld [vmem:[%s840 + $0x7c] sm:$0xf]
        %v2417 = vld [vmem:[%s843] sm:$0x1]
        %v2419 = vlaneseq
        %v2420 = vshrl.u32 %v2419, 7
        %v2421 = vsub.s32 0, %v2420
        %v2422 = vrot.slane %v2417, %v2421
        %v2456 = vunpack.c.l.b16 %v2385
        %v2457 = vunpack.c.l.b16 %v2386
        %v2458 = vunpack.c.l.b16 %v2387
        %v2459 = vunpack.c.l.b16 %v2388
        %v2460 = vunpack.c.l.b16 %v2389
        %v2461 = vunpack.c.l.b16 %v2390
        %v2462 = vunpack.c.l.b16 %v2391
        %v2463 = vunpack.c.l.b16 %v2392
        %v2464 = vunpack.c.l.b16 %v2393
        %v2465 = vunpack.c.l.b16 %v2394
        %v2466 = vunpack.c.l.b16 %v2395
        %v2467 = vunpack.c.l.b16 %v2396
        %v2468 = vunpack.c.l.b16 %v2397
        %v2469 = vunpack.c.l.b16 %v2398
        %v2470 = vunpack.c.l.b16 %v2399
        %v2471 = vunpack.c.l.b16 %v2400
        %v2472 = vunpack.c.l.b16 %v2401
        %v2473 = vunpack.c.l.b16 %v2402
        %v2474 = vunpack.c.l.b16 %v2403
        %v2475 = vunpack.c.l.b16 %v2404
        %v2476 = vunpack.c.l.b16 %v2405
        %v2477 = vunpack.c.l.b16 %v2406
        %v2478 = vunpack.c.l.b16 %v2407
        %v2479 = vunpack.c.l.b16 %v2408
        %v2480 = vunpack.c.l.b16 %v2409
        %v2481 = vunpack.c.l.b16 %v2410
        %v2482 = vunpack.c.l.b16 %v2411
        %v2483 = vunpack.c.l.b16 %v2412
        %v2484 = vunpack.c.l.b16 %v2413
        %v2485 = vunpack.c.l.b16 %v2414
        %v2486 = vunpack.c.l.b16 %v2415
        %v2487 = vunpack.c.l.b16 %v2416
        %v2488 = vpack.c.b16 %v2457, %v2456
        %v2489 = vpack.c.b16 %v2459, %v2458
        %v2490 = vpack.c.b16 %v2461, %v2460
        %v2491 = vpack.c.b16 %v2463, %v2462
        %v2492 = vpack.c.b16 %v2465, %v2464
        %v2493 = vpack.c.b16 %v2467, %v2466
        %v2494 = vpack.c.b16 %v2469, %v2468
        %v2495 = vpack.c.b16 %v2471, %v2470
        %v2496 = vpack.c.b16 %v2473, %v2472
        %v2497 = vpack.c.b16 %v2475, %v2474
        %v2498 = vpack.c.b16 %v2477, %v2476
        %v2499 = vpack.c.b16 %v2479, %v2478
        %v2500 = vpack.c.b16 %v2481, %v2480
        %v2501 = vpack.c.b16 %v2483, %v2482
        %v2502 = vpack.c.b16 %v2485, %v2484
        %v2503 = vpack.c.b16 %v2487, %v2486
        %2520 = vmatprep.subr.bf16.mxu0 0
        %2521 = vmatpush1.bf16.msra.mxu0 %v2488
        %2522 = vmatprep.subr.bf16.mxu0 0
        %2523 = vmatpush1.bf16.msra.mxu0 %v2489
        %2524 = vmatprep.subr.bf16.mxu0 0
        %2525 = vmatpush1.bf16.msra.mxu0 %v2490
        %2526 = vmatprep.subr.bf16.mxu0 0
        %2527 = vmatpush1.bf16.msra.mxu0 %v2491
        %2528 = vmatprep.subr.bf16.mxu0 0
        %2529 = vmatpush1.bf16.msra.mxu0 %v2492
        %2530 = vmatprep.subr.bf16.mxu0 0
        %2531 = vmatpush1.bf16.msra.mxu0 %v2493
        %2532 = vmatprep.subr.bf16.mxu0 0
        %2533 = vmatpush1.bf16.msra.mxu0 %v2494
        %2534 = vmatprep.subr.bf16.mxu0 0
        %2535 = vmatpush1.bf16.msra.mxu0 %v2495
        %2536 = vmatprep.subr.bf16.mxu0 0
        %2537 = vmatpush1.bf16.msra.mxu0 %v2496
        %2538 = vmatprep.subr.bf16.mxu0 0
        %2539 = vmatpush1.bf16.msra.mxu0 %v2497
        %2540 = vmatprep.subr.bf16.mxu0 0
        %2541 = vmatpush1.bf16.msra.mxu0 %v2498
        %2542 = vmatprep.subr.bf16.mxu0 0
        %2543 = vmatpush1.bf16.msra.mxu0 %v2499
        %2544 = vmatprep.subr.bf16.mxu0 0
        %2545 = vmatpush1.bf16.msra.mxu0 %v2500
        %2546 = vmatprep.subr.bf16.mxu0 0
        %2547 = vmatpush1.bf16.msra.mxu0 %v2501
        %2548 = vmatprep.subr.bf16.mxu0 0
        %2549 = vmatpush1.bf16.msra.mxu0 %v2502
        %2550 = vmatprep.subr.bf16.mxu0 0
        %2551 = vmatpush1.bf16.msra.mxu0 %v2503
        %2552 = vmatprep.mubr.bf16.mxu0 %v2384
        %2553 = vmatmul.mubr.bf16.gmra.mrb[0].mxu0 %v2383
        %v2554 = vpop.f32.mrb[0].mxu0
        %v2555 = vadd.f32 %v2422, %v2554
        %v2556 = vpop.f32.mrb[0].mxu0
        %v2557 = vpop.f32.mrb[0].mxu0
        %v2558 = vpop.f32.mrb[0].mxu0
        %2559 = vdwg.mxu0
        %v2560 = vadd.f32 %v2187, %v2555
        %2561 = vst [vmem:[#allocation2] sm:$0x1f] %v2560
        %p2562 = scmp.eq.s32.totalorder %s40, 1
        // Predicated region
        $region101: #{clip_vision_forward.1} parent=95 // pred_check
          %p2563 = pneg %p2562
        $region102: #{clip_vision_forward.1} parent=95 // pred_check_branch
          %2565 = sbr.rel (%p2563) target = $region104
        $region103: #{clip_vision_forward.1} parent=95 // pred_region
          %2566 = vst [vmem:[%s847] sm:$0x1f] %v2560
          %v2567 = vld [vmem:[%s5] sm:$0x1]
          %v2568 = vld [vmem:[%s6] sm:$0x1]
          %vm2569 = vcmask 1040384
          %v2570 = vsel %vm2569, %v2560, 0.0
          %2571 = vadd.xlane.f32.xlu0 %v2570
          %v2572 = vpop.xlane.xlu0 %2571
          %v2573 = vmul.f32 %v2572, %v1205
          %v2574 = vsub.f32 %v2560, %v2573
          %v2575 = vmul.f32 %v2574, %v2574
          %v2576 = vsel %vm2569, %v2575, 0.0
          %2577 = vadd.xlane.f32.xlu0 %v2576
          %v2578 = vpop.xlane.xlu0 %2577
          %v2579 = vmul.f32 %v2578, %v1205
          %v2580 = vadd.f32 %v2579, 1e-05
          %v2581 = vrsqrt.pop %v2580
          %v2582 = vmul.f32 %v2574, %v2581
          %v2583 = vmul.f32 %v2582, %v2567
          %v2584 = vadd.f32 %v2583, %v2568
          %2585 = vst [vmem:[%s792] sm:$0x1] %v2584
        $region104: #{clip_vision_forward.1} parent=95 // pred_fallthru
          _
        %p2586 = scmp.lt.s32.totalorder %s39, 1
        %s2587 = scalar_select %p2586, %s39, 1
        %s2588 = smul.addr %s2587, 8
        %s2589 = scalar_lea.vmem %s19, %s2588
        %s2590 = sand.u32 %s545, 1
        %s2591 = scalar_lea.sflag [#allocation4], %s2590
        %s2592 = sand.u32 %s545, 1
        %s2593 = scalar_lea.vmem [#allocation3], %s2592
        // Predicated region
        $region105: #{clip_vision_forward.1} parent=95 // pred_check
          %p2594 = pneg %p529
        $region106: #{clip_vision_forward.1} parent=95 // pred_check_branch
          %2596 = sbr.rel (%p2594) target = $region108
        $region107: #{clip_vision_forward.1} parent=95 // pred_region
          _
        $region108: #{clip_vision_forward.1} parent=95 // pred_fallthru
          _
        // Predicated region
        $region109: #{clip_vision_forward.1} parent=95 // pred_check
          %p2597 = pneg %p555
        $region110: #{clip_vision_forward.1} parent=95 // pred_check_branch
          %2599 = sbr.rel (%p2597) target = $region112
        $region111: #{clip_vision_forward.1} parent=95 // pred_region
          %s2601 = ssub.s32 16, 16
          %2602 = vsyncadd %s2591, %s2601
          %s2603 = smul.addr %s39, 16
          %s2604 = scalar_lea.hbm %s20, %s2603
          %s2606 = sshll.u32 %s2593, 4
          %s2607 = int_to_ptr.vmem [resolvable:$true] %s2606
          %2609 = dma.vmem_to_hbm [thread:$0]  %s2607, 16, %s2604, %s2591
        $region112: #{clip_vision_forward.1} parent=95 // pred_fallthru
          _
      $region96: #{clip_vision_forward.1} parent=5 // pred_fallthru
        _
      %p2610 = scmp.le.s32.totalorder 2, %s30
      // Predicated region
      $region113: #{clip_vision_forward.1} parent=5 // pred_check
        %p2611 = pneg %p2610
      $region114: #{clip_vision_forward.1} parent=5 // pred_check_branch
        %2613 = sbr.rel (%p2611) target = $region116
      $region115: #{clip_vision_forward.1} parent=5 // pred_region
        %s2614 = ssub.s32 %s30, 2
        // Predicated region
        $region117: #{clip_vision_forward.1} parent=115 // pred_check
          %p2615 = pneg %p535
        $region118: #{clip_vision_forward.1} parent=115 // pred_check_branch
          %2617 = sbr.rel (%p2615) target = $region120
        $region119: #{clip_vision_forward.1} parent=115 // pred_region
          %p2618 = scmp.lt.s32.totalorder %s41, 1
          %s2619 = scalar_select %p2618, %s41, 1
          %s2620 = smul.addr %s2619, 8
          %s2621 = scalar_lea.vmem %s19, %s2620
        $region120: #{clip_vision_forward.1} parent=115 // pred_fallthru
          _
        // Predicated region
        $region121: #{clip_vision_forward.1} parent=115 // pred_check
          %p2622 = pneg %p561
        $region122: #{clip_vision_forward.1} parent=115 // pred_check_branch
          %2624 = sbr.rel (%p2622) target = $region124
        $region123: #{clip_vision_forward.1} parent=115 // pred_region
          %s2625 = sand.u32 %s546, 1
          %s2626 = scalar_lea.sflag [#allocation4], %s2625
          %s2627 = sand.u32 %s546, 1
          %s2628 = scalar_lea.vmem [#allocation3], %s2627
          %2629 = dma.done %s2626, 16
        $region124: #{clip_vision_forward.1} parent=115 // pred_fallthru
          _
      $region116: #{clip_vision_forward.1} parent=5 // pred_fallthru
        _
    $region6: #{clip_vision_forward.1} parent=1 // loop_footer
      %s34 = sadd.s32 1, %s30
    $region7: #{clip_vision_forward.1} parent=1 // loop_footer_branch
      %29 = sbr.rel target = $region3
    $region8: #{clip_vision_forward.1} parent=1 // loop_exit
      _
    %2630 = vsyncpa [#allocation4], 1
    %s2631 = scalar_lea.sflag [#allocation4], 1
    %2632 = vsyncpa %s2631, 1

</llo_original>
